<compile_context>
chip_gen: v7x
topology: tpu7x:2x2x1
jax: 0.10.0
libtpu: 0.0.40
codegen_flags: <defaults>
</compile_context>

<pallas_src>
import functools

import jax
import jax.numpy as jnp
from jax import lax
from jax.experimental import pallas as pl
from jax.experimental.pallas import tpu as pltpu

KSIZE = 3     # kernel width of conv_in / ResBlock convs
DIL = 3       # dilation along W (padding == dilation, so W is preserved)
BN_EPS = 1e-5


def _row_tile(R, W, C, target_bytes=2 << 20):
    """Largest divisor of R (a multiple of 8, or R itself) whose f32 tile fits target_bytes.

    target_bytes is per activation block; with double-buffered in/out blocks plus in-kernel
    temporaries this stays far below v7x's 64 MiB VMEM (128 MiB on v5e/v6e).
    """
    cap = max(8, target_bytes // (W * C * 4))
    for t in range(int(min(R, cap)), 0, -1):
        if R % t == 0 and (t == R or t % 8 == 0):
            return t
    return R


def _shift_w(a2, d, wpos, W):
    """t[i] = a2[i + d] if column (i % W) + d stays inside the same width-W row, else 0.

    a2 is the (R_TILE*W, C') flattened-rows view; the shift is an XLU rotate plus a VPU
    edge mask (no zero-padded copy of the activation is materialized).
    """
    n = a2.shape[0]
    # jnp.roll semantics: out[i] = a2[i - shift]; shift = (-d) mod n  ->  out[i] = a2[i + d].
    rolled = pltpu.roll(a2, shift=(-d) % n, axis=0)
    valid = (wpos < W - d) if d > 0 else (wpos >= -d)
    return jnp.where(valid, rolled, jnp.zeros_like(rolled))


# ----------------------------- kernels -----------------------------
def conv_in_kernel(x_ref, w_in_ref, b_in_ref, h_ref, *, rt, W, C):
    """Conv2d(1, C, kernel=(1,3), dilation=(1,3), padding=(0,3)); Cin == 1 so the conv is a
    3-tap broadcast multiply-add."""
    RW = rt * W
    x2 = x_ref[...].reshape(RW, 1)                                   # (RW, 1)
    wpos = lax.broadcasted_iota(jnp.int32, (RW, 1), 0) % W
    xm = _shift_w(x2, -DIL, wpos, W)                                 # x[w - 3]
    xp = _shift_w(x2, DIL, wpos, W)                                  # x[w + 3]
    h2 = (xm * w_in_ref[0:1, :] + x2 * w_in_ref[1:2, :] + xp * w_in_ref[2:3, :]
          + b_in_ref[...])                                           # (RW, C)
    h_ref[...] = h2.reshape(rt, W, C)


def bn_stats_kernel(h_ref, stats_ref, *, rt, W, C):
    """Pass 1 of BatchNorm: accumulate per-channel sum / sum-of-squares across row tiles
    into a revisited (2, C) accumulator output."""
    @pl.when(pl.program_id(0) == 0)
    def _():
        stats_ref[...] = jnp.zeros_like(stats_ref)

    h2 = h_ref[...].reshape(rt * W, C)
    s = jnp.sum(h2, axis=0, keepdims=True)                           # (1, C)
    ss = jnp.sum(h2 * h2, axis=0, keepdims=True)                     # fused single pass
    stats_ref[...] += jnp.concatenate([s, ss], axis=0)


def resblock_kernel(h_ref, stats_ref, gamma_ref, beta_ref, w1_ref, b1_ref,
                    w2_ref, b2_ref, out_ref, *, rt, W, C, inv_n):
    """Pass 2: BN (precomputed batch stats) -> conv1 -> ReLU -> conv2 -> +identity -> ReLU."""
    RW = rt * W
    wpos = lax.broadcasted_iota(jnp.int32, (RW, 1), 0) % W

    # BatchNorm from globally accumulated statistics (training-mode batch stats).
    mean = stats_ref[0:1, :] * inv_n                                 # (1, C)
    var = jnp.maximum(stats_ref[1:2, :] * inv_n - mean * mean, 0.0)  # one-pass variance
    scale = gamma_ref[...] * lax.rsqrt(var + BN_EPS)                 # (1, C)
    shift = beta_ref[...] - mean * scale

    h2 = h_ref[...].reshape(RW, C)
    xn = h2 * scale + shift                                          # identity branch (f32)

    def dconv(a2, w_flat_ref, bias_row):
        # Dilated 3-tap C->C conv as ONE fused MXU matmul: (RW, 3C) @ (3C, C),
        # bf16 inputs / f32 accumulation.
        taps = jnp.concatenate(
            [_shift_w(a2, -DIL, wpos, W), a2, _shift_w(a2, DIL, wpos, W)],
            axis=-1).astype(jnp.bfloat16)
        t = jnp.dot(taps, w_flat_ref[...], preferred_element_type=jnp.float32)
        return t + bias_row

    o1 = jnp.maximum(dconv(xn, w1_ref, b1_ref[...]), 0.0)
    o2 = dconv(o1, w2_ref, b2_ref[...])
    out_ref[...] = jnp.maximum(o2 + xn, 0.0).reshape(rt, W, C)


def conv_out_kernel(h_ref, wout_ref, s0_ref, s1_ref, bout_ref, out_ref, *, rt, W, C):
    """Conv2d(C, 1, kernel=(1,2), stride=(1,2)): per-tap channel reduce, then even/odd
    column selection via two tiny matmuls (no per-column slicing / concats)."""
    h3 = h_ref[...]                                                  # (rt, W, C)
    a = jnp.sum(h3 * wout_ref[0:1, :].reshape(1, 1, C), axis=-1)     # (rt, W)
    b = jnp.sum(h3 * wout_ref[1:2, :].reshape(1, 1, C), axis=-1)
    out = (jnp.dot(a, s0_ref[...], preferred_element_type=jnp.float32)
           + jnp.dot(b, s1_ref[...], preferred_element_type=jnp.float32))
    # TODO(synk): for production widths present a lane-dense output (W//2 multiple of 128
    # or wrapper-side reshape); at toy W this final store is a masked vst.
    out_ref[...] = out + bout_ref[0]


# ----------------------------- wrapper -----------------------------
def encoder_forward(x_nchw, params, *, n_blocks, C, row_tile=None):
    N, Cin, H, W = x_nchw.shape
    assert Cin == 1 and W % 2 == 0 and W % 8 == 0
    R = N * H
    W2 = W // 2
    rt = row_tile if row_tile is not None else _row_tile(R, W, C)
    assert R % rt == 0 and (rt == R or rt % 8 == 0)
    n_tiles = R // rt
    inv_n = 1.0 / float(R * W)
    f32 = jnp.float32

    x3 = x_nchw.reshape(R, W, 1).astype(f32)

    # Conv weights flattened [blk, k, cin, cout] -> [blk, k*C + cin, cout] so the fused
    # tap matmul contracts over (tap, cin) in one MXU push; bf16 for the MXU.
    w1f = params["w1"].reshape(n_blocks, KSIZE * C, C).astype(jnp.bfloat16)
    w2f = params["w2"].reshape(n_blocks, KSIZE * C, C).astype(jnp.bfloat16)

    # conv_out selection matrices: S0 picks even columns, S1 odd columns.
    wi = jnp.arange(W)[:, None]
    ji = jnp.arange(W2)[None, :]
    s0 = (wi == 2 * ji).astype(f32)
    s1 = (wi == 2 * ji + 1).astype(f32)

    vmem_cap = 48 * 1024 * 1024   # above the 16/32 MiB scoped defaults, below v7x's 64 MiB
    cp_par = pltpu.CompilerParams(dimension_semantics=("parallel",),
                                  vmem_limit_bytes=vmem_cap)
    cp_arb = pltpu.CompilerParams(dimension_semantics=("arbitrary",),
                                  vmem_limit_bytes=vmem_cap)

    row_spec = pl.BlockSpec((rt, W, C), lambda i: (i, 0, 0))

    def const_spec(shape):
        zeros = (0,) * len(shape)
        return pl.BlockSpec(shape, lambda i: zeros)

    # ---------------- conv_in ----------------
    h = pl.pallas_call(
        functools.partial(conv_in_kernel, rt=rt, W=W, C=C),
        grid=(n_tiles,),
        in_specs=[pl.BlockSpec((rt, W, 1), lambda i: (i, 0, 0)),
                  const_spec((KSIZE, C)),
                  const_spec((1, C))],
        out_specs=row_spec,
        out_shape=jax.ShapeDtypeStruct((R, W, C), f32),
        compiler_params=cp_par,
    )(x3, params["w_in"], params["b_in"])

    # ---------------- ResBlocks (weights streamed one block at a time) ----------------
    stats_call = pl.pallas_call(
        functools.partial(bn_stats_kernel, rt=rt, W=W, C=C),
        grid=(n_tiles,),
        in_specs=[row_spec],
        out_specs=const_spec((2, C)),
        out_shape=jax.ShapeDtypeStruct((2, C), f32),
        compiler_params=cp_arb,   # revisited accumulator -> must not be megacore-split
    )
    block_call = pl.pallas_call(
        functools.partial(resblock_kernel, rt=rt, W=W, C=C, inv_n=inv_n),
        grid=(n_tiles,),
        in_specs=[row_spec,
                  const_spec((2, C)),            # stats (sum / sumsq)
                  const_spec((1, C)),            # gamma
                  const_spec((1, C)),            # beta
                  const_spec((KSIZE * C, C)),    # w1 (bf16, fused-tap layout)
                  const_spec((1, C)),            # b1
                  const_spec((KSIZE * C, C)),    # w2
                  const_spec((1, C))],           # b2
        out_specs=row_spec,
        out_shape=jax.ShapeDtypeStruct((R, W, C), f32),
        compiler_params=cp_par,
    )
    for b in range(n_blocks):
        stats = stats_call(h)
        h = block_call(h, stats,
                       params["gamma"][b][None, :], params["beta"][b][None, :],
                       w1f[b], params["b1"][b][None, :],
                       w2f[b], params["b2"][b][None, :])

    # ---------------- conv_out ----------------
    out2 = pl.pallas_call(
        functools.partial(conv_out_kernel, rt=rt, W=W, C=C),
        grid=(n_tiles,),
        in_specs=[row_spec,
                  const_spec((2, C)),
                  const_spec((W, W2)),
                  const_spec((W, W2)),
                  pl.BlockSpec(memory_space=pltpu.MemorySpace.SMEM)],
        out_specs=pl.BlockSpec((rt, W2), lambda i: (i, 0)),
        out_shape=jax.ShapeDtypeStruct((R, W2), f32),
        compiler_params=cp_par,
    )(h, params["w_out"], s0, s1, params["b_out"].reshape(-1))

    return out2.reshape(N, H, W2)[:, None, :, :]          # back to NCHW


# ---------------- deterministic synthetic parameters ----------------
def make_params(key, C, n_blocks):
    ks = jax.random.split(key, 10)
    f32 = jnp.float32
    return {
        "w_in":  0.25 * jax.random.normal(ks[0], (KSIZE, C), f32),               # [k, cout]
        "b_in":  0.10 * jax.random.normal(ks[1], (1, C), f32),
        "w1":    0.15 * jax.random.normal(ks[2], (n_blocks, KSIZE, C, C), f32),  # [blk, k, cin, cout]
        "b1":    0.10 * jax.random.normal(ks[3], (n_blocks, C), f32),
        "w2":    0.15 * jax.random.normal(ks[4], (n_blocks, KSIZE, C, C), f32),
        "b2":    0.10 * jax.random.normal(ks[5], (n_blocks, C), f32),
        "gamma": 1.0 + 0.10 * jax.random.normal(ks[6], (n_blocks, C), f32),
        "beta":  0.10 * jax.random.normal(ks[7], (n_blocks, C), f32),
        "w_out": 0.25 * jax.random.normal(ks[8], (2, C), f32),                   # [k, cin] (cout == 1)
        "b_out": 0.10 * jax.random.normal(ks[9], (1, 1), f32),
    }


# ---------------- pure-JAX reference (lax.conv) for a sanity check ----------------
def encoder_ref(x, params, *, n_blocks, C, matmul_dtype=jnp.bfloat16):
    """Reference forward. The C->C conv inputs/weights are rounded to `matmul_dtype` to
    mirror the kernel's bf16-in / f32-accumulate MXU matmuls (everything else f32)."""
    hp = lax.Precision.HIGHEST

    def conv(x, w_oihw, bias, dilation, pad, stride, cast=False):
        if cast:
            x = x.astype(matmul_dtype).astype(jnp.float32)
            w_oihw = w_oihw.astype(matmul_dtype).astype(jnp.float32)
        out = lax.conv_general_dilated(
            x, w_oihw, window_strides=(1, stride),
            padding=((0, 0), (pad, pad)), rhs_dilation=(1, dilation),
            dimension_numbers=("NCHW", "OIHW", "NCHW"), precision=hp)
        return out + bias.reshape(1, -1, 1, 1)

    def bn(x, g, bta):
        m = jnp.mean(x, axis=(0, 2, 3), keepdims=True)
        v = jnp.mean((x - m) ** 2, axis=(0, 2, 3), keepdims=True)
        return (x - m) * lax.rsqrt(v + BN_EPS) * g.reshape(1, -1, 1, 1) + bta.reshape(1, -1, 1, 1)

    w_in = jnp.transpose(params["w_in"], (1, 0))[:, None, None, :]           # (C,1,1,3)
    h = conv(x, w_in, params["b_in"].reshape(-1), DIL, DIL, 1)
    for b in range(n_blocks):
        hn = bn(h, params["gamma"][b], params["beta"][b])
        w1 = jnp.transpose(params["w1"][b], (2, 1, 0))[:, :, None, :]        # (Cout,Cin,1,3)
        w2 = jnp.transpose(params["w2"][b], (2, 1, 0))[:, :, None, :]
        o = jax.nn.relu(conv(hn, w1, params["b1"][b], DIL, DIL, 1, cast=True))
        o = conv(o, w2, params["b2"][b], DIL, DIL, 1, cast=True)
        h = jax.nn.relu(o + hn)
    w_out = jnp.transpose(params["w_out"], (1, 0))[None, :, None, :]         # (1,C,1,2)
    return conv(h, w_out, params["b_out"].reshape(-1), 1, 0, 2)


if __name__ == "__main__":
    N, H, W, C, NBLOCKS = 2, 8, 16, 16, 2
    key = jax.random.PRNGKey(0)
    kx, kp = jax.random.split(key)
    x = jax.random.normal(kx, (N, 1, H, W), jnp.float32)       # NCHW, Cin = 1
    params = make_params(kp, C, NBLOCKS)

    # row_tile=8 forces a multi-tile grid (R = N*H = 16 -> 2 row tiles) so the tiled,
    # two-pass BatchNorm / accumulator path is exercised even at this toy size.
    fwd = jax.jit(functools.partial(encoder_forward, n_blocks=NBLOCKS, C=C, row_tile=8))
    out = jax.block_until_ready(fwd(x, params))
    assert out.shape == (N, 1, H, W // 2), out.shape

    ref = encoder_ref(x, params, n_blocks=NBLOCKS, C=C)
    max_err = float(jnp.max(jnp.abs(out - ref)))
    assert max_err < 2e-2, f"mismatch vs reference: max |err| = {max_err}"

    print("KERNEL_OK")
</pallas_src>

<mosaic_0001>
module attributes {stable_mosaic.version = 11 : i64} {
  func.func @bn_stats_kernel(%arg0: i32, %arg1: memref<8x16x16xf32, #tpu.memory_space<vmem>>, %arg2: memref<2x16xf32, #tpu.memory_space<vmem>>) attributes {dimension_semantics = [#tpu.dimension_semantics<arbitrary>], iteration_bounds = array<i64: 2>, scalar_prefetch = 0 : i64, scratch_operands = 0 : i64, tpu.core_type = #tpu.core_type<tc>, window_params = [{transform_indices = @transform_0, window_bounds = array<i64: 8, 16, 16>}, {pipeline_mode = #tpu.pipeline_mode<synchronous>, transform_indices = @transform_1, window_bounds = array<i64: 2, 16>}]} {
    %c0_i32 = arith.constant 0 : i32
    %0 = arith.cmpi eq, %arg0, %c0_i32 : i32
    %1 = arith.extui %0 : i1 to i32
    %c0_i32_0 = arith.constant 0 : i32
    %2 = arith.cmpi ne, %1, %c0_i32_0 : i32
    scf.if %2 {
      %cst_8 = arith.constant 0.000000e+00 : f32
      %14 = vector.broadcast %cst_8 : f32 to vector<2x16xf32>
      %c0_9 = arith.constant 0 : index
      %c0_10 = arith.constant 0 : index
      %15 = vector.load %arg2[%c0_9, %c0_10] : memref<2x16xf32, #tpu.memory_space<vmem>>, vector<2x16xf32>
      tpu.vector_store %arg2[%c0_9, %c0_10], %14 {strides = array<i32>} : memref<2x16xf32, #tpu.memory_space<vmem>>, vector<2x16xf32>,
    } else {
    }
    %c0 = arith.constant 0 : index
    %c0_1 = arith.constant 0 : index
    %c0_2 = arith.constant 0 : index
    %3 = vector.load %arg1[%c0, %c0_1, %c0_2] : memref<8x16x16xf32, #tpu.memory_space<vmem>>, vector<8x16x16xf32>
    %4 = vector.shape_cast %3 : vector<8x16x16xf32> to vector<128x16xf32>
    %cst = arith.constant dense<0.000000e+00> : vector<16xf32>
    %5 = vector.multi_reduction <add>, %4, %cst [0] : vector<128x16xf32> to vector<16xf32>
    %6 = vector.shape_cast %5 : vector<16xf32> to vector<1x16xf32>
    %7 = arith.mulf %4, %4 : vector<128x16xf32>
    %cst_3 = arith.constant dense<0.000000e+00> : vector<16xf32>
    %8 = vector.multi_reduction <add>, %7, %cst_3 [0] : vector<128x16xf32> to vector<16xf32>
    %9 = vector.shape_cast %8 : vector<16xf32> to vector<1x16xf32>
    %c0_4 = arith.constant 0 : index
    %c0_5 = arith.constant 0 : index
    %10 = vector.load %arg2[%c0_4, %c0_5] : memref<2x16xf32, #tpu.memory_space<vmem>>, vector<2x16xf32>
    %11 = tpu.concatenate %6, %9 in 0 : vector<1x16xf32>, vector<1x16xf32> -> vector<2x16xf32>
    %12 = arith.addf %10, %11 : vector<2x16xf32>
    %c0_6 = arith.constant 0 : index
    %c0_7 = arith.constant 0 : index
    %13 = vector.load %arg2[%c0_6, %c0_7] : memref<2x16xf32, #tpu.memory_space<vmem>>, vector<2x16xf32>
    tpu.vector_store %arg2[%c0_6, %c0_7], %12 {strides = array<i32>} : memref<2x16xf32, #tpu.memory_space<vmem>>, vector<2x16xf32>,
    return
  }
  func.func @transform_0(%arg0: i32) -> (i32, i32, i32) {
    %c0_i32 = arith.constant 0 : i32
    %c0_i32_0 = arith.constant 0 : i32
    %c0_i32_1 = arith.constant 0 : i32
    return %arg0, %c0_i32, %c0_i32_0 : i32, i32, i32
  }
  func.func @transform_1(%arg0: i32) -> (i32, i32) {
    %c0_i32 = arith.constant 0 : i32
    %c0_i32_0 = arith.constant 0 : i32
    %c0_i32_1 = arith.constant 0 : i32
    return %c0_i32, %c0_i32_0 : i32, i32
  }
}

module attributes {stable_mosaic.version = 11 : i64} {
  func.func @conv_in_kernel(%arg0: i32, %arg1: memref<8x16x1xf32, #tpu.memory_space<vmem>>, %arg2: memref<3x16xf32, #tpu.memory_space<vmem>>, %arg3: memref<1x16xf32, #tpu.memory_space<vmem>>, %arg4: memref<8x16x16xf32, #tpu.memory_space<vmem>>) attributes {dimension_semantics = [#tpu.dimension_semantics<parallel>], iteration_bounds = array<i64: 2>, scalar_prefetch = 0 : i64, scratch_operands = 0 : i64, tpu.core_type = #tpu.core_type<tc>, window_params = [{transform_indices = @transform_0, window_bounds = array<i64: 8, 16, 1>}, {pipeline_mode = #tpu.pipeline_mode<synchronous>, transform_indices = @transform_1, window_bounds = array<i64: 3, 16>}, {pipeline_mode = #tpu.pipeline_mode<synchronous>, transform_indices = @transform_2, window_bounds = array<i64: 1, 16>}, {transform_indices = @transform_3, window_bounds = array<i64: 8, 16, 16>}]} {
    %c0 = arith.constant 0 : index
    %c0_0 = arith.constant 0 : index
    %c0_1 = arith.constant 0 : index
    %0 = vector.load %arg1[%c0, %c0_0, %c0_1] : memref<8x16x1xf32, #tpu.memory_space<vmem>>, vector<8x16x1xf32>
    %1 = vector.shape_cast %0 : vector<8x16x1xf32> to vector<128x1xf32>
    %2 = tpu.iota {dimensions = array<i32: 0>} : vector<128x1xi32>
    %c16_i32 = arith.constant 16 : i32
    %c0_i32 = arith.constant 0 : i32
    %3 = arith.cmpi eq, %c16_i32, %c0_i32 : i32
    %c1_i32 = arith.constant 1 : i32
    %4 = arith.select %3, %c1_i32, %c16_i32 : i32
    %5 = vector.broadcast %4 : i32 to vector<128x1xi32>
    %6 = arith.remsi %2, %5 : vector<128x1xi32>
    %c0_i32_2 = arith.constant 0 : i32
    %7 = vector.broadcast %c0_i32_2 : i32 to vector<128x1xi32>
    %8 = arith.cmpi ne, %6, %7 : vector<128x1xi32>
    %c0_i32_3 = arith.constant 0 : i32
    %9 = vector.broadcast %c0_i32_3 : i32 to vector<128x1xi32>
    %10 = arith.cmpi slt, %6, %9 : vector<128x1xi32>
    %c0_i32_4 = arith.constant 0 : i32
    %11 = arith.cmpi slt, %4, %c0_i32_4 : i32
    %12 = vector.broadcast %11 : i1 to vector<128x1xi1>
    %13 = vector.broadcast %12 : vector<128x1xi1> to vector<128x1xi1>
    %14 = arith.xori %10, %13 : vector<128x1xi1>
    %15 = arith.andi %14, %8 : vector<128x1xi1>
    %16 = vector.broadcast %4 : i32 to vector<128x1xi32>
    %17 = arith.addi %6, %16 : vector<128x1xi32>
    %18 = arith.select %15, %17, %6 : vector<128x1xi1>, vector<128x1xi32>
    %c3_i32 = arith.constant 3 : i32
    %19 = tpu.dynamic_rotate %1 by %c3_i32 dim 0 : vector<128x1xf32>, i32 -> vector<128x1xf32>
    %c3_i32_5 = arith.constant 3 : i32
    %20 = vector.broadcast %c3_i32_5 : i32 to vector<128x1xi32>
    %21 = arith.cmpi sge, %18, %20 : vector<128x1xi32>
    %cst = arith.constant 0.000000e+00 : f32
    %22 = vector.broadcast %cst : f32 to vector<128x1xf32>
    %23 = arith.select %21, %19, %22 : vector<128x1xi1>, vector<128x1xf32>
    %c125_i32 = arith.constant 125 : i32
    %24 = tpu.dynamic_rotate %1 by %c125_i32 dim 0 : vector<128x1xf32>, i32 -> vector<128x1xf32>
    %c13_i32 = arith.constant 13 : i32
    %25 = vector.broadcast %c13_i32 : i32 to vector<128x1xi32>
    %26 = arith.cmpi slt, %18, %25 : vector<128x1xi32>
    %cst_6 = arith.constant 0.000000e+00 : f32
    %27 = vector.broadcast %cst_6 : f32 to vector<128x1xf32>
    %28 = arith.select %26, %24, %27 : vector<128x1xi1>, vector<128x1xf32>
    %c0_7 = arith.constant 0 : index
    %c0_8 = arith.constant 0 : index
    %29 = vector.load %arg2[%c0_7, %c0_8] : memref<3x16xf32, #tpu.memory_space<vmem>>, vector<1x16xf32>
    %30 = vector.broadcast %23 : vector<128x1xf32> to vector<128x16xf32>
    %31 = vector.broadcast %29 : vector<1x16xf32> to vector<128x16xf32>
    %32 = arith.mulf %30, %31 : vector<128x16xf32>
    %c1 = arith.constant 1 : index
    %c0_9 = arith.constant 0 : index
    %33 = vector.load %arg2[%c1, %c0_9] : memref<3x16xf32, #tpu.memory_space<vmem>>, vector<1x16xf32>
    %34 = vector.broadcast %1 : vector<128x1xf32> to vector<128x16xf32>
    %35 = vector.broadcast %33 : vector<1x16xf32> to vector<128x16xf32>
    %36 = arith.mulf %34, %35 : vector<128x16xf32>
    %37 = arith.addf %32, %36 : vector<128x16xf32>
    %c2 = arith.constant 2 : index
    %c0_10 = arith.constant 0 : index
    %38 = vector.load %arg2[%c2, %c0_10] : memref<3x16xf32, #tpu.memory_space<vmem>>, vector<1x16xf32>
    %39 = vector.broadcast %28 : vector<128x1xf32> to vector<128x16xf32>
    %40 = vector.broadcast %38 : vector<1x16xf32> to vector<128x16xf32>
    %41 = arith.mulf %39, %40 : vector<128x16xf32>
    %42 = arith.addf %37, %41 : vector<128x16xf32>
    %c0_11 = arith.constant 0 : index
    %c0_12 = arith.constant 0 : index
    %43 = vector.load %arg3[%c0_11, %c0_12] : memref<1x16xf32, #tpu.memory_space<vmem>>, vector<1x16xf32>
    %44 = vector.broadcast %43 : vector<1x16xf32> to vector<128x16xf32>
    %45 = arith.addf %42, %44 : vector<128x16xf32>
    %46 = vector.shape_cast %45 : vector<128x16xf32> to vector<8x16x16xf32>
    %c0_13 = arith.constant 0 : index
    %c0_14 = arith.constant 0 : index
    %c0_15 = arith.constant 0 : index
    %47 = vector.load %arg4[%c0_13, %c0_14, %c0_15] : memref<8x16x16xf32, #tpu.memory_space<vmem>>, vector<8x16x16xf32>
    tpu.vector_store %arg4[%c0_13, %c0_14, %c0_15], %46 {strides = array<i32>} : memref<8x16x16xf32, #tpu.memory_space<vmem>>, vector<8x16x16xf32>,
    return
  }
  func.func @transform_0(%arg0: i32) -> (i32, i32, i32) {
    %c0_i32 = arith.constant 0 : i32
    %c0_i32_0 = arith.constant 0 : i32
    %c0_i32_1 = arith.constant 0 : i32
    return %arg0, %c0_i32, %c0_i32_0 : i32, i32, i32
  }
  func.func @transform_1(%arg0: i32) -> (i32, i32) {
    %c0_i32 = arith.constant 0 : i32
    %c0_i32_0 = arith.constant 0 : i32
    %c0_i32_1 = arith.constant 0 : i32
    return %c0_i32, %c0_i32_0 : i32, i32
  }
  func.func @transform_2(%arg0: i32) -> (i32, i32) {
    %c0_i32 = arith.constant 0 : i32
    %c0_i32_0 = arith.constant 0 : i32
    %c0_i32_1 = arith.constant 0 : i32
    return %c0_i32, %c0_i32_0 : i32, i32
  }
  func.func @transform_3(%arg0: i32) -> (i32, i32, i32) {
    %c0_i32 = arith.constant 0 : i32
    %c0_i32_0 = arith.constant 0 : i32
    %c0_i32_1 = arith.constant 0 : i32
    return %arg0, %c0_i32, %c0_i32_0 : i32, i32, i32
  }
}

module attributes {stable_mosaic.version = 11 : i64} {
  func.func @resblock_kernel(%arg0: i32, %arg1: memref<8x16x16xf32, #tpu.memory_space<vmem>>, %arg2: memref<2x16xf32, #tpu.memory_space<vmem>>, %arg3: memref<1x16xf32, #tpu.memory_space<vmem>>, %arg4: memref<1x16xf32, #tpu.memory_space<vmem>>, %arg5: memref<48x16xbf16, #tpu.memory_space<vmem>>, %arg6: memref<1x16xf32, #tpu.memory_space<vmem>>, %arg7: memref<48x16xbf16, #tpu.memory_space<vmem>>, %arg8: memref<1x16xf32, #tpu.memory_space<vmem>>, %arg9: memref<8x16x16xf32, #tpu.memory_space<vmem>>) attributes {dimension_semantics = [#tpu.dimension_semantics<parallel>], iteration_bounds = array<i64: 2>, scalar_prefetch = 0 : i64, scratch_operands = 0 : i64, tpu.core_type = #tpu.core_type<tc>, window_params = [{transform_indices = @transform_0, window_bounds = array<i64: 8, 16, 16>}, {pipeline_mode = #tpu.pipeline_mode<synchronous>, transform_indices = @transform_1, window_bounds = array<i64: 2, 16>}, {pipeline_mode = #tpu.pipeline_mode<synchronous>, transform_indices = @transform_2, window_bounds = array<i64: 1, 16>}, {pipeline_mode = #tpu.pipeline_mode<synchronous>, transform_indices = @transform_3, window_bounds = array<i64: 1, 16>}, {pipeline_mode = #tpu.pipeline_mode<synchronous>, transform_indices = @transform_4, window_bounds = array<i64: 48, 16>}, {pipeline_mode = #tpu.pipeline_mode<synchronous>, transform_indices = @transform_5, window_bounds = array<i64: 1, 16>}, {pipeline_mode = #tpu.pipeline_mode<synchronous>, transform_indices = @transform_6, window_bounds = array<i64: 48, 16>}, {pipeline_mode = #tpu.pipeline_mode<synchronous>, transform_indices = @transform_7, window_bounds = array<i64: 1, 16>}, {transform_indices = @transform_8, window_bounds = array<i64: 8, 16, 16>}]} {
    %0 = tpu.iota {dimensions = array<i32: 0>} : vector<128x1xi32>
    %c16_i32 = arith.constant 16 : i32
    %c0_i32 = arith.constant 0 : i32
    %1 = arith.cmpi eq, %c16_i32, %c0_i32 : i32
    %c1_i32 = arith.constant 1 : i32
    %2 = arith.select %1, %c1_i32, %c16_i32 : i32
    %3 = vector.broadcast %2 : i32 to vector<128x1xi32>
    %4 = arith.remsi %0, %3 : vector<128x1xi32>
    %c0_i32_0 = arith.constant 0 : i32
    %5 = vector.broadcast %c0_i32_0 : i32 to vector<128x1xi32>
    %6 = arith.cmpi ne, %4, %5 : vector<128x1xi32>
    %c0_i32_1 = arith.constant 0 : i32
    %7 = vector.broadcast %c0_i32_1 : i32 to vector<128x1xi32>
    %8 = arith.cmpi slt, %4, %7 : vector<128x1xi32>
    %c0_i32_2 = arith.constant 0 : i32
    %9 = arith.cmpi slt, %2, %c0_i32_2 : i32
    %10 = vector.broadcast %9 : i1 to vector<128x1xi1>
    %11 = vector.broadcast %10 : vector<128x1xi1> to vector<128x1xi1>
    %12 = arith.xori %8, %11 : vector<128x1xi1>
    %13 = arith.andi %12, %6 : vector<128x1xi1>
    %14 = vector.broadcast %2 : i32 to vector<128x1xi32>
    %15 = arith.addi %4, %14 : vector<128x1xi32>
    %16 = arith.select %13, %15, %4 : vector<128x1xi1>, vector<128x1xi32>
    %c0 = arith.constant 0 : index
    %c0_3 = arith.constant 0 : index
    %17 = vector.load %arg2[%c0, %c0_3] : memref<2x16xf32, #tpu.memory_space<vmem>>, vector<1x16xf32>
    %cst = arith.constant 3.906250e-03 : f32
    %18 = vector.broadcast %cst : f32 to vector<1x16xf32>
    %19 = arith.mulf %17, %18 : vector<1x16xf32>
    %c1 = arith.constant 1 : index
    %c0_4 = arith.constant 0 : index
    %20 = vector.load %arg2[%c1, %c0_4] : memref<2x16xf32, #tpu.memory_space<vmem>>, vector<1x16xf32>
    %cst_5 = arith.constant 3.906250e-03 : f32
    %21 = vector.broadcast %cst_5 : f32 to vector<1x16xf32>
    %22 = arith.mulf %20, %21 : vector<1x16xf32>
    %23 = arith.mulf %19, %19 : vector<1x16xf32>
    %24 = arith.subf %22, %23 : vector<1x16xf32>
    %cst_6 = arith.constant 0.000000e+00 : f32
    %25 = vector.broadcast %cst_6 : f32 to vector<1x16xf32>
    %26 = arith.maximumf %24, %25 : vector<1x16xf32>
    %c0_7 = arith.constant 0 : index
    %c0_8 = arith.constant 0 : index
    %27 = vector.load %arg3[%c0_7, %c0_8] : memref<1x16xf32, #tpu.memory_space<vmem>>, vector<1x16xf32>
    %cst_9 = arith.constant 9.99999974E-6 : f32
    %28 = vector.broadcast %cst_9 : f32 to vector<1x16xf32>
    %29 = arith.addf %26, %28 : vector<1x16xf32>
    %30 = math.rsqrt %29 : vector<1x16xf32>
    %31 = arith.mulf %27, %30 : vector<1x16xf32>
    %c0_10 = arith.constant 0 : index
    %c0_11 = arith.constant 0 : index
    %32 = vector.load %arg4[%c0_10, %c0_11] : memref<1x16xf32, #tpu.memory_space<vmem>>, vector<1x16xf32>
    %33 = arith.mulf %19, %31 : vector<1x16xf32>
    %34 = arith.subf %32, %33 : vector<1x16xf32>
    %c0_12 = arith.constant 0 : index
    %c0_13 = arith.constant 0 : index
    %c0_14 = arith.constant 0 : index
    %35 = vector.load %arg1[%c0_12, %c0_13, %c0_14] : memref<8x16x16xf32, #tpu.memory_space<vmem>>, vector<8x16x16xf32>
    %36 = vector.shape_cast %35 : vector<8x16x16xf32> to vector<128x16xf32>
    %37 = vector.broadcast %31 : vector<1x16xf32> to vector<128x16xf32>
    %38 = arith.mulf %36, %37 : vector<128x16xf32>
    %39 = vector.broadcast %34 : vector<1x16xf32> to vector<128x16xf32>
    %40 = arith.addf %38, %39 : vector<128x16xf32>
    %c0_15 = arith.constant 0 : index
    %c0_16 = arith.constant 0 : index
    %41 = vector.load %arg6[%c0_15, %c0_16] : memref<1x16xf32, #tpu.memory_space<vmem>>, vector<1x16xf32>
    %c3_i32 = arith.constant 3 : i32
    %42 = tpu.dynamic_rotate %40 by %c3_i32 dim 0 : vector<128x16xf32>, i32 -> vector<128x16xf32>
    %c3_i32_17 = arith.constant 3 : i32
    %43 = vector.broadcast %c3_i32_17 : i32 to vector<128x1xi32>
    %44 = arith.cmpi sge, %16, %43 : vector<128x1xi32>
    %cst_18 = arith.constant 0.000000e+00 : f32
    %45 = vector.broadcast %cst_18 : f32 to vector<128x16xf32>
    %46 = vector.shape_cast %44 : vector<128x1xi1> to vector<128x1xi1>
    %47 = vector.broadcast %46 : vector<128x1xi1> to vector<128x16xi1>
    %48 = arith.select %47, %42, %45 : vector<128x16xi1>, vector<128x16xf32>
    %c125_i32 = arith.constant 125 : i32
    %49 = tpu.dynamic_rotate %40 by %c125_i32 dim 0 : vector<128x16xf32>, i32 -> vector<128x16xf32>
    %c13_i32 = arith.constant 13 : i32
    %50 = vector.broadcast %c13_i32 : i32 to vector<128x1xi32>
    %51 = arith.cmpi slt, %16, %50 : vector<128x1xi32>
    %cst_19 = arith.constant 0.000000e+00 : f32
    %52 = vector.broadcast %cst_19 : f32 to vector<128x16xf32>
    %53 = vector.shape_cast %51 : vector<128x1xi1> to vector<128x1xi1>
    %54 = vector.broadcast %53 : vector<128x1xi1> to vector<128x16xi1>
    %55 = arith.select %54, %49, %52 : vector<128x16xi1>, vector<128x16xf32>
    %56 = tpu.concatenate %48, %40, %55 in 1 : vector<128x16xf32>, vector<128x16xf32>, vector<128x16xf32> -> vector<128x48xf32>
    %57 = arith.truncf %56 : vector<128x48xf32> to vector<128x48xbf16>
    %c0_20 = arith.constant 0 : index
    %c0_21 = arith.constant 0 : index
    %58 = vector.load %arg5[%c0_20, %c0_21] : memref<48x16xbf16, #tpu.memory_space<vmem>>, vector<48x16xbf16>
    %cst_22 = arith.constant dense<0.000000e+00> : vector<128x16xf32>
    %59 = tpu.matmul %57, %58, %cst_22 {dimension_numbers = #tpu.dot_dimension_numbers<[1], [0], [0], [1], [0, 0, 1, 1], [], []>} : vector<128x48xbf16>, vector<48x16xbf16>, vector<128x16xf32> -> vector<128x16xf32>
    %60 = vector.broadcast %41 : vector<1x16xf32> to vector<128x16xf32>
    %61 = arith.addf %59, %60 : vector<128x16xf32>
    %cst_23 = arith.constant 0.000000e+00 : f32
    %62 = vector.broadcast %cst_23 : f32 to vector<128x16xf32>
    %63 = arith.maximumf %61, %62 : vector<128x16xf32>
    %c0_24 = arith.constant 0 : index
    %c0_25 = arith.constant 0 : index
    %64 = vector.load %arg8[%c0_24, %c0_25] : memref<1x16xf32, #tpu.memory_space<vmem>>, vector<1x16xf32>
    %c3_i32_26 = arith.constant 3 : i32
    %65 = tpu.dynamic_rotate %63 by %c3_i32_26 dim 0 : vector<128x16xf32>, i32 -> vector<128x16xf32>
    %c3_i32_27 = arith.constant 3 : i32
    %66 = vector.broadcast %c3_i32_27 : i32 to vector<128x1xi32>
    %67 = arith.cmpi sge, %16, %66 : vector<128x1xi32>
    %cst_28 = arith.constant 0.000000e+00 : f32
    %68 = vector.broadcast %cst_28 : f32 to vector<128x16xf32>
    %69 = vector.shape_cast %67 : vector<128x1xi1> to vector<128x1xi1>
    %70 = vector.broadcast %69 : vector<128x1xi1> to vector<128x16xi1>
    %71 = arith.select %70, %65, %68 : vector<128x16xi1>, vector<128x16xf32>
    %c125_i32_29 = arith.constant 125 : i32
    %72 = tpu.dynamic_rotate %63 by %c125_i32_29 dim 0 : vector<128x16xf32>, i32 -> vector<128x16xf32>
    %c13_i32_30 = arith.constant 13 : i32
    %73 = vector.broadcast %c13_i32_30 : i32 to vector<128x1xi32>
    %74 = arith.cmpi slt, %16, %73 : vector<128x1xi32>
    %cst_31 = arith.constant 0.000000e+00 : f32
    %75 = vector.broadcast %cst_31 : f32 to vector<128x16xf32>
    %76 = vector.shape_cast %74 : vector<128x1xi1> to vector<128x1xi1>
    %77 = vector.broadcast %76 : vector<128x1xi1> to vector<128x16xi1>
    %78 = arith.select %77, %72, %75 : vector<128x16xi1>, vector<128x16xf32>
    %79 = tpu.concatenate %71, %63, %78 in 1 : vector<128x16xf32>, vector<128x16xf32>, vector<128x16xf32> -> vector<128x48xf32>
    %80 = arith.truncf %79 : vector<128x48xf32> to vector<128x48xbf16>
    %c0_32 = arith.constant 0 : index
    %c0_33 = arith.constant 0 : index
    %81 = vector.load %arg7[%c0_32, %c0_33] : memref<48x16xbf16, #tpu.memory_space<vmem>>, vector<48x16xbf16>
    %cst_34 = arith.constant dense<0.000000e+00> : vector<128x16xf32>
    %82 = tpu.matmul %80, %81, %cst_34 {dimension_numbers = #tpu.dot_dimension_numbers<[1], [0], [0], [1], [0, 0, 1, 1], [], []>} : vector<128x48xbf16>, vector<48x16xbf16>, vector<128x16xf32> -> vector<128x16xf32>
    %83 = vector.broadcast %64 : vector<1x16xf32> to vector<128x16xf32>
    %84 = arith.addf %82, %83 : vector<128x16xf32>
    %85 = arith.addf %84, %40 : vector<128x16xf32>
    %cst_35 = arith.constant 0.000000e+00 : f32
    %86 = vector.broadcast %cst_35 : f32 to vector<128x16xf32>
    %87 = arith.maximumf %85, %86 : vector<128x16xf32>
    %88 = vector.shape_cast %87 : vector<128x16xf32> to vector<8x16x16xf32>
    %c0_36 = arith.constant 0 : index
    %c0_37 = arith.constant 0 : index
    %c0_38 = arith.constant 0 : index
    %89 = vector.load %arg9[%c0_36, %c0_37, %c0_38] : memref<8x16x16xf32, #tpu.memory_space<vmem>>, vector<8x16x16xf32>
    tpu.vector_store %arg9[%c0_36, %c0_37, %c0_38], %88 {strides = array<i32>} : memref<8x16x16xf32, #tpu.memory_space<vmem>>, vector<8x16x16xf32>,
    return
  }
  func.func @transform_0(%arg0: i32) -> (i32, i32, i32) {
    %c0_i32 = arith.constant 0 : i32
    %c0_i32_0 = arith.constant 0 : i32
    %c0_i32_1 = arith.constant 0 : i32
    return %arg0, %c0_i32, %c0_i32_0 : i32, i32, i32
  }
  func.func @transform_1(%arg0: i32) -> (i32, i32) {
    %c0_i32 = arith.constant 0 : i32
    %c0_i32_0 = arith.constant 0 : i32
    %c0_i32_1 = arith.constant 0 : i32
    return %c0_i32, %c0_i32_0 : i32, i32
  }
  func.func @transform_2(%arg0: i32) -> (i32, i32) {
    %c0_i32 = arith.constant 0 : i32
    %c0_i32_0 = arith.constant 0 : i32
    %c0_i32_1 = arith.constant 0 : i32
    return %c0_i32, %c0_i32_0 : i32, i32
  }
  func.func @transform_3(%arg0: i32) -> (i32, i32) {
    %c0_i32 = arith.constant 0 : i32
    %c0_i32_0 = arith.constant 0 : i32
    %c0_i32_1 = arith.constant 0 : i32
    return %c0_i32, %c0_i32_0 : i32, i32
  }
  func.func @transform_4(%arg0: i32) -> (i32, i32) {
    %c0_i32 = arith.constant 0 : i32
    %c0_i32_0 = arith.constant 0 : i32
    %c0_i32_1 = arith.constant 0 : i32
    return %c0_i32, %c0_i32_0 : i32, i32
  }
  func.func @transform_5(%arg0: i32) -> (i32, i32) {
    %c0_i32 = arith.constant 0 : i32
    %c0_i32_0 = arith.constant 0 : i32
    %c0_i32_1 = arith.constant 0 : i32
    return %c0_i32, %c0_i32_0 : i32, i32
  }
  func.func @transform_6(%arg0: i32) -> (i32, i32) {
    %c0_i32 = arith.constant 0 : i32
    %c0_i32_0 = arith.constant 0 : i32
    %c0_i32_1 = arith.constant 0 : i32
    return %c0_i32, %c0_i32_0 : i32, i32
  }
  func.func @transform_7(%arg0: i32) -> (i32, i32) {
    %c0_i32 = arith.constant 0 : i32
    %c0_i32_0 = arith.constant 0 : i32
    %c0_i32_1 = arith.constant 0 : i32
    return %c0_i32, %c0_i32_0 : i32, i32
  }
  func.func @transform_8(%arg0: i32) -> (i32, i32, i32) {
    %c0_i32 = arith.constant 0 : i32
    %c0_i32_0 = arith.constant 0 : i32
    %c0_i32_1 = arith.constant 0 : i32
    return %arg0, %c0_i32, %c0_i32_0 : i32, i32, i32
  }
}

module attributes {stable_mosaic.version = 11 : i64} {
  func.func @conv_out_kernel(%arg0: i32, %arg1: memref<8x16x16xf32, #tpu.memory_space<vmem>>, %arg2: memref<2x16xf32, #tpu.memory_space<vmem>>, %arg3: memref<16x8xf32, #tpu.memory_space<vmem>>, %arg4: memref<16x8xf32, #tpu.memory_space<vmem>>, %arg5: memref<1xf32, #tpu.memory_space<smem>>, %arg6: memref<8x8xf32, #tpu.memory_space<vmem>>) attributes {dimension_semantics = [#tpu.dimension_semantics<parallel>], iteration_bounds = array<i64: 2>, scalar_prefetch = 0 : i64, scratch_operands = 0 : i64, tpu.core_type = #tpu.core_type<tc>, window_params = [{transform_indices = @transform_0, window_bounds = array<i64: 8, 16, 16>}, {pipeline_mode = #tpu.pipeline_mode<synchronous>, transform_indices = @transform_1, window_bounds = array<i64: 2, 16>}, {pipeline_mode = #tpu.pipeline_mode<synchronous>, transform_indices = @transform_2, window_bounds = array<i64: 16, 8>}, {pipeline_mode = #tpu.pipeline_mode<synchronous>, transform_indices = @transform_3, window_bounds = array<i64: 16, 8>}, {transform_indices = @transform_4, window_bounds = array<i64: 1>}, {transform_indices = @transform_5, window_bounds = array<i64: 8, 8>}]} {
    %c0 = arith.constant 0 : index
    %c0_0 = arith.constant 0 : index
    %c0_1 = arith.constant 0 : index
    %0 = vector.load %arg1[%c0, %c0_0, %c0_1] : memref<8x16x16xf32, #tpu.memory_space<vmem>>, vector<8x16x16xf32>
    %c0_2 = arith.constant 0 : index
    %c0_3 = arith.constant 0 : index
    %1 = vector.load %arg2[%c0_2, %c0_3] : memref<2x16xf32, #tpu.memory_space<vmem>>, vector<1x16xf32>
    %2 = vector.shape_cast %1 : vector<1x16xf32> to vector<1x1x16xf32>
    %3 = vector.broadcast %2 : vector<1x1x16xf32> to vector<8x16x16xf32>
    %4 = arith.mulf %0, %3 : vector<8x16x16xf32>
    %cst = arith.constant dense<0.000000e+00> : vector<8x16xf32>
    %5 = vector.multi_reduction <add>, %4, %cst [2] : vector<8x16x16xf32> to vector<8x16xf32>
    %c1 = arith.constant 1 : index
    %c0_4 = arith.constant 0 : index
    %6 = vector.load %arg2[%c1, %c0_4] : memref<2x16xf32, #tpu.memory_space<vmem>>, vector<1x16xf32>
    %7 = vector.shape_cast %6 : vector<1x16xf32> to vector<1x1x16xf32>
    %8 = vector.broadcast %7 : vector<1x1x16xf32> to vector<8x16x16xf32>
    %9 = arith.mulf %0, %8 : vector<8x16x16xf32>
    %cst_5 = arith.constant dense<0.000000e+00> : vector<8x16xf32>
    %10 = vector.multi_reduction <add>, %9, %cst_5 [2] : vector<8x16x16xf32> to vector<8x16xf32>
    %c0_6 = arith.constant 0 : index
    %c0_7 = arith.constant 0 : index
    %11 = vector.load %arg3[%c0_6, %c0_7] : memref<16x8xf32, #tpu.memory_space<vmem>>, vector<16x8xf32>
    %cst_8 = arith.constant dense<0.000000e+00> : vector<8x8xf32>
    %12 = tpu.matmul %5, %11, %cst_8 {dimension_numbers = #tpu.dot_dimension_numbers<[1], [0], [0], [1], [0, 0, 1, 1], [], []>} : vector<8x16xf32>, vector<16x8xf32>, vector<8x8xf32> -> vector<8x8xf32>
    %c0_9 = arith.constant 0 : index
    %c0_10 = arith.constant 0 : index
    %13 = vector.load %arg4[%c0_9, %c0_10] : memref<16x8xf32, #tpu.memory_space<vmem>>, vector<16x8xf32>
    %cst_11 = arith.constant dense<0.000000e+00> : vector<8x8xf32>
    %14 = tpu.matmul %10, %13, %cst_11 {dimension_numbers = #tpu.dot_dimension_numbers<[1], [0], [0], [1], [0, 0, 1, 1], [], []>} : vector<8x16xf32>, vector<16x8xf32>, vector<8x8xf32> -> vector<8x8xf32>
    %15 = arith.addf %12, %14 : vector<8x8xf32>
    %c0_12 = arith.constant 0 : index
    %16 = memref.load %arg5[%c0_12] : memref<1xf32, #tpu.memory_space<smem>>
    %17 = vector.broadcast %16 : f32 to vector<8x8xf32>
    %18 = arith.addf %15, %17 : vector<8x8xf32>
    %c0_13 = arith.constant 0 : index
    %c0_14 = arith.constant 0 : index
    %19 = vector.load %arg6[%c0_13, %c0_14] : memref<8x8xf32, #tpu.memory_space<vmem>>, vector<8x8xf32>
    tpu.vector_store %arg6[%c0_13, %c0_14], %18 {strides = array<i32>} : memref<8x8xf32, #tpu.memory_space<vmem>>, vector<8x8xf32>,
    return
  }
  func.func @transform_0(%arg0: i32) -> (i32, i32, i32) {
    %c0_i32 = arith.constant 0 : i32
    %c0_i32_0 = arith.constant 0 : i32
    %c0_i32_1 = arith.constant 0 : i32
    return %arg0, %c0_i32, %c0_i32_0 : i32, i32, i32
  }
  func.func @transform_1(%arg0: i32) -> (i32, i32) {
    %c0_i32 = arith.constant 0 : i32
    %c0_i32_0 = arith.constant 0 : i32
    %c0_i32_1 = arith.constant 0 : i32
    return %c0_i32, %c0_i32_0 : i32, i32
  }
  func.func @transform_2(%arg0: i32) -> (i32, i32) {
    %c0_i32 = arith.constant 0 : i32
    %c0_i32_0 = arith.constant 0 : i32
    %c0_i32_1 = arith.constant 0 : i32
    return %c0_i32, %c0_i32_0 : i32, i32
  }
  func.func @transform_3(%arg0: i32) -> (i32, i32) {
    %c0_i32 = arith.constant 0 : i32
    %c0_i32_0 = arith.constant 0 : i32
    %c0_i32_1 = arith.constant 0 : i32
    return %c0_i32, %c0_i32_0 : i32, i32
  }
  func.func @transform_4(%arg0: i32) -> i32 {
    %c0_i32 = arith.constant 0 : i32
    %c0_i32_0 = arith.constant 0 : i32
    return %c0_i32 : i32
  }
  func.func @transform_5(%arg0: i32) -> (i32, i32) {
    %c0_i32 = arith.constant 0 : i32
    %c0_i32_0 = arith.constant 0 : i32
    return %arg0, %c0_i32 : i32, i32
  }
}

</mosaic_0001>

<llo_original>
// kernel: encoder_forward.7
$region0: #{encoder_forward.7}
  #allocation0 [shape = 'u32[]', space=smem, size = 0x4, offset = 0x4, fixed_abs, tag = 'smem constant byte address 0x4 - core index']
  #allocation1 [shape = 'u32[144,128]{1,0:T(1,128)}', space=vmem, size = 0x12000, scoped, tag = 'internal scratch']
  %s0 = inlined_call_operand.vmem [shape: f32[16,16,16], index: 0, kind: input, shape index: {}]
  %s1 = inlined_call_operand.vmem [shape: f32[2,16], index: 1, kind: output, shape index: {}]
  %s2 = sld [smem:[#allocation0]]
  $region41: #{encoder_forward.7} parent=0
    _
  %s4 = ssub.s32 1, %s2
  %s5 = scalar_select 0, %s4, %s2
  loop: start=0, step=1, limit=4
  $region2: #{encoder_forward.7} parent=0 // loop_pre_header
    _
  $region3: #{encoder_forward.7} parent=0 // loop_header
    %s7 = sphi 0, %s11
    %p8 = scmp.ge.s32.totalorder %s7, 4
    %s17 = sphi 0, %s19
    %s20 = sphi 0, %s17
    %s21 = sphi 0, %s20
    %s37 = sphi 0, %s21
    %s41 = sphi 0, %s41
    %s43 = sphi 0, %s41
    %s44 = sphi 0, %s43
    %s58 = sphi 0, %s44
  $region4: #{encoder_forward.7} parent=0 // loop_header_branch
    %10 = sbr.rel (%p8) target = $region8
  $region5: #{encoder_forward.7} parent=0 // loop_body
    %s12 = ssub.s32 %s7, 1
    %s13 = ssub.s32 %s7, 2
    %s14 = sadd.s32 %s7, 1
    %s15 = ssub.s32 %s7, %s14
    %p16 = scmp.eq.s32.totalorder %s15, 0
    %s18 = sadd.s32 %s17, 1
    %s19 = scalar_select %p16, %s17, %s18
    %p22 = pneg %p16
    %p23 = scmp.eq.s32.totalorder %s7, 1
    %p24 = por %p22, %p23
    %p25 = scmp.ne.s32.totalorder %s17, %s20
    %p26 = scmp.eq.s32.totalorder %s7, 0
    %p27 = por %p25, %p26
    %p28 = scmp.ne.s32.totalorder %s17, %s20
    %p29 = scmp.eq.s32.totalorder %s12, 1
    %p30 = por %p28, %p29
    %p31 = scmp.ne.s32.totalorder %s20, %s21
    %p32 = scmp.eq.s32.totalorder %s12, 0
    %p33 = por %p31, %p32
    %p34 = scmp.ne.s32.totalorder %s20, %s21
    %p35 = scmp.eq.s32.totalorder %s13, 1
    %p36 = por %p34, %p35
    %p38 = scmp.ne.s32.totalorder %s21, %s37
    %p39 = scmp.eq.s32.totalorder %s13, 0
    %p40 = por %p38, %p39
    %s42 = sadd.s32 %s41, 1
    %p45 = scmp.eq.s32.totalorder %s7, 1
    %p46 = scmp.ne.s32.totalorder %s41, %s43
    %p47 = scmp.eq.s32.totalorder %s7, 0
    %p48 = por %p46, %p47
    %p49 = scmp.ne.s32.totalorder %s41, %s43
    %p50 = scmp.eq.s32.totalorder %s12, 1
    %p51 = por %p49, %p50
    %p52 = scmp.ne.s32.totalorder %s43, %s44
    %p53 = scmp.eq.s32.totalorder %s12, 0
    %p54 = por %p52, %p53
    %p55 = scmp.ne.s32.totalorder %s43, %s44
    %p56 = scmp.eq.s32.totalorder %s13, 1
    %p57 = por %p55, %p56
    %p59 = scmp.ne.s32.totalorder %s44, %s58
    %p60 = scmp.eq.s32.totalorder %s13, 0
    %p61 = por %p59, %p60
    %p62 = scmp.le.s32.totalorder 1, %s7
    %p63 = scmp.lt.s32.totalorder %s7, 3
    %p64 = pnand %p62, %p63
    %p65 = pneg %p64
    // Predicated region
    $region9: #{encoder_forward.7} parent=5 // pred_check
      _
    $region10: #{encoder_forward.7} parent=5 // pred_check_branch
      %67 = sbr.rel (%p64) target = $region12
    $region11: #{encoder_forward.7} parent=5 // pred_region
      %s68 = ssub.s32 %s7, 1
    $region12: #{encoder_forward.7} parent=5 // pred_fallthru
      _
    %p69 = scmp.lt.s32.totalorder %s7, 2
    // Predicated region
    $region13: #{encoder_forward.7} parent=5 // pred_check
      %p70 = pneg %p69
    $region14: #{encoder_forward.7} parent=5 // pred_check_branch
      %72 = sbr.rel (%p70) target = $region16
    $region15: #{encoder_forward.7} parent=5 // pred_region
      // Predicated region
      $region17: #{encoder_forward.7} parent=15 // pred_check
        %p73 = pneg %p27
      $region18: #{encoder_forward.7} parent=15 // pred_check_branch
        %75 = sbr.rel (%p73) target = $region20
      $region19: #{encoder_forward.7} parent=15 // pred_region
        %s76 = smul.u32 8, %s7
        %p77 = scmp.lt.s32.totalorder %s76, 15
        %s78 = scalar_select %p77, %s76, 15
        %s79 = smul.addr %s78, 2
        %s80 = smul.addr %s79, 8
        %s81 = scalar_lea.vmem %s0, %s80
        %s82 = smul.u32 8, %s7
      $region20: #{encoder_forward.7} parent=15 // pred_fallthru
        _
    $region16: #{encoder_forward.7} parent=5 // pred_fallthru
      _
    %p83 = scmp.le.s32.totalorder 1, %s7
    %p84 = scmp.lt.s32.totalorder %s7, 3
    %p85 = pnand %p83, %p84
    %p86 = pneg %p85
    // Predicated region
    $region21: #{encoder_forward.7} parent=5 // pred_check
      _
    $region22: #{encoder_forward.7} parent=5 // pred_check_branch
      %88 = sbr.rel (%p85) target = $region24
    $region23: #{encoder_forward.7} parent=5 // pred_region
      %s89 = ssub.s32 %s7, 1
      %s90 = smul.u32 8, %s12
      %p91 = scmp.lt.s32.totalorder %s90, 15
      %s92 = scalar_select %p91, %s90, 15
      %s93 = smul.addr %s92, 2
      %s94 = smul.addr %s93, 8
      %s95 = scalar_lea.vmem %s0, %s94
      %p96 = pneg %p33
      %p97 = pneg %p30
      %p98 = pneg %p54
      %p99 = pneg %p51
      %s100 = smul.u32 8, %s12
      %p101 = scmp.lt.s32.totalorder %s100, 15
      %s102 = scalar_select %p101, %s100, 15
      %s103 = smul.addr %s102, 2
      %s104 = smul.addr %s103, 8
      %s105 = scalar_lea.vmem %s0, %s104
      %s106 = smul.u32 8, %s12
      %p107 = scmp.eq.s32.totalorder %s12, 0
      // Predicated region
      $region25: #{encoder_forward.7} parent=23 // pred_check
        %p108 = pneg %p107
      $region26: #{encoder_forward.7} parent=23 // pred_check_branch
        %110 = sbr.rel (%p108) target = $region28
      $region27: #{encoder_forward.7} parent=23 // pred_region
        %vm111 = vcmask 123904
        %112 = vst.msk [vmem:[%s1] sm:$0x3] %vm111, 0.0
      $region28: #{encoder_forward.7} parent=23 // pred_fallthru
        _
      %v113 = vld [vmem:[%s105] sm:$0xff]
      %v114 = vld [vmem:[%s105 + $0x8] sm:$0xff]
      %v115 = vld [vmem:[%s105 + $0x10] sm:$0xff]
      %v116 = vld [vmem:[%s105 + $0x18] sm:$0xff]
      %v117 = vld [vmem:[%s105 + $0x20] sm:$0xff]
      %v118 = vld [vmem:[%s105 + $0x28] sm:$0xff]
      %v119 = vld [vmem:[%s105 + $0x30] sm:$0xff]
      %v120 = vld [vmem:[%s105 + $0x38] sm:$0xff]
      %v121 = vld [vmem:[%s105 + $0x40] sm:$0xff]
      %v122 = vld [vmem:[%s105 + $0x48] sm:$0xff]
      %v123 = vld [vmem:[%s105 + $0x50] sm:$0xff]
      %v124 = vld [vmem:[%s105 + $0x58] sm:$0xff]
      %v125 = vld [vmem:[%s105 + $0x60] sm:$0xff]
      %v126 = vld [vmem:[%s105 + $0x68] sm:$0xff]
      %v127 = vld [vmem:[%s105 + $0x70] sm:$0xff]
      %v128 = vld [vmem:[%s105 + $0x78] sm:$0xff]
      %vm129 = vcmask 130048
      %v130 = vsel %vm129, %v113, 0.0
      %v131 = vsel %vm129, %v114, 0.0
      %v132 = vadd.f32 %v130, %v131
      %v133 = vsel %vm129, %v115, 0.0
      %v134 = vadd.f32 %v132, %v133
      %v135 = vsel %vm129, %v116, 0.0
      %v136 = vadd.f32 %v134, %v135
      %v137 = vsel %vm129, %v117, 0.0
      %v138 = vadd.f32 %v136, %v137
      %v139 = vsel %vm129, %v118, 0.0
      %v140 = vadd.f32 %v138, %v139
      %v141 = vsel %vm129, %v119, 0.0
      %v142 = vadd.f32 %v140, %v141
      %v143 = vsel %vm129, %v120, 0.0
      %v144 = vadd.f32 %v142, %v143
      %v145 = vsel %vm129, %v121, 0.0
      %v146 = vadd.f32 %v144, %v145
      %v147 = vsel %vm129, %v122, 0.0
      %v148 = vadd.f32 %v146, %v147
      %v149 = vsel %vm129, %v123, 0.0
      %v150 = vadd.f32 %v148, %v149
      %v151 = vsel %vm129, %v124, 0.0
      %v152 = vadd.f32 %v150, %v151
      %v153 = vsel %vm129, %v125, 0.0
      %v154 = vadd.f32 %v152, %v153
      %v155 = vsel %vm129, %v126, 0.0
      %v156 = vadd.f32 %v154, %v155
      %v157 = vsel %vm129, %v127, 0.0
      %v158 = vadd.f32 %v156, %v157
      %v159 = vsel %vm129, %v128, 0.0
      %v160 = vadd.f32 %v158, %v159
      %v161 = vrot.slane %v160, 4
      %v162 = vadd.f32 %v160, %v161
      %v163 = vrot.slane %v162, 2
      %v164 = vadd.f32 %v162, %v163
      %v165 = vrot.slane %v164, 1
      %v166 = vadd.f32 %v164, %v165
      %v167 = vmul.f32 %v113, %v113
      %v168 = vmul.f32 %v114, %v114
      %v169 = vmul.f32 %v115, %v115
      %v170 = vmul.f32 %v116, %v116
      %v171 = vmul.f32 %v117, %v117
      %v172 = vmul.f32 %v118, %v118
      %v173 = vmul.f32 %v119, %v119
      %v174 = vmul.f32 %v120, %v120
      %v175 = vmul.f32 %v121, %v121
      %v176 = vmul.f32 %v122, %v122
      %v177 = vmul.f32 %v123, %v123
      %v178 = vmul.f32 %v124, %v124
      %v179 = vmul.f32 %v125, %v125
      %v180 = vmul.f32 %v126, %v126
      %v181 = vmul.f32 %v127, %v127
      %v182 = vmul.f32 %v128, %v128
      %v183 = vsel %vm129, %v167, 0.0
      %v184 = vsel %vm129, %v168, 0.0
      %v185 = vadd.f32 %v183, %v184
      %v186 = vsel %vm129, %v169, 0.0
      %v187 = vadd.f32 %v185, %v186
      %v188 = vsel %vm129, %v170, 0.0
      %v189 = vadd.f32 %v187, %v188
      %v190 = vsel %vm129, %v171, 0.0
      %v191 = vadd.f32 %v189, %v190
      %v192 = vsel %vm129, %v172, 0.0
      %v193 = vadd.f32 %v191, %v192
      %v194 = vsel %vm129, %v173, 0.0
      %v195 = vadd.f32 %v193, %v194
      %v196 = vsel %vm129, %v174, 0.0
      %v197 = vadd.f32 %v195, %v196
      %v198 = vsel %vm129, %v175, 0.0
      %v199 = vadd.f32 %v197, %v198
      %v200 = vsel %vm129, %v176, 0.0
      %v201 = vadd.f32 %v199, %v200
      %v202 = vsel %vm129, %v177, 0.0
      %v203 = vadd.f32 %v201, %v202
      %v204 = vsel %vm129, %v178, 0.0
      %v205 = vadd.f32 %v203, %v204
      %v206 = vsel %vm129, %v179, 0.0
      %v207 = vadd.f32 %v205, %v206
      %v208 = vsel %vm129, %v180, 0.0
      %v209 = vadd.f32 %v207, %v208
      %v210 = vsel %vm129, %v181, 0.0
      %v211 = vadd.f32 %v209, %v210
      %v212 = vsel %vm129, %v182, 0.0
      %v213 = vadd.f32 %v211, %v212
      %v214 = vrot.slane %v213, 4
      %v215 = vadd.f32 %v213, %v214
      %v216 = vrot.slane %v215, 2
      %v217 = vadd.f32 %v215, %v216
      %v218 = vrot.slane %v217, 1
      %v219 = vadd.f32 %v217, %v218
      %v220 = vld [vmem:[%s1] sm:$0x3]
      %vm221 = vcmask 1040384
      %v222 = vsel %vm221, %v166, %v219
      %v223 = vadd.f32 %v220, %v222
      %vm224 = vcmask 123904
      %225 = vst.msk [vmem:[%s1] sm:$0x3] %vm224, %v223
      // Predicated region
      $region29: #{encoder_forward.7} parent=23 // pred_check
        %p226 = pneg %p51
      $region30: #{encoder_forward.7} parent=23 // pred_check_branch
        %228 = sbr.rel (%p226) target = $region32
      $region31: #{encoder_forward.7} parent=23 // pred_region
        _
      $region32: #{encoder_forward.7} parent=23 // pred_fallthru
        _
      // Predicated region
      $region33: #{encoder_forward.7} parent=23 // pred_check
        %p229 = pneg %p51
      $region34: #{encoder_forward.7} parent=23 // pred_check_branch
        %231 = sbr.rel (%p229) target = $region36
      $region35: #{encoder_forward.7} parent=23 // pred_region
        _
      $region36: #{encoder_forward.7} parent=23 // pred_fallthru
        _
    $region24: #{encoder_forward.7} parent=5 // pred_fallthru
      _
    %p232 = scmp.le.s32.totalorder 2, %s7
    // Predicated region
    $region37: #{encoder_forward.7} parent=5 // pred_check
      %p233 = pneg %p232
    $region38: #{encoder_forward.7} parent=5 // pred_check_branch
      %235 = sbr.rel (%p233) target = $region40
    $region39: #{encoder_forward.7} parent=5 // pred_region
      %s236 = ssub.s32 %s7, 2
    $region40: #{encoder_forward.7} parent=5 // pred_fallthru
      _
  $region6: #{encoder_forward.7} parent=0 // loop_footer
    %s11 = sadd.s32 1, %s7
  $region7: #{encoder_forward.7} parent=0 // loop_footer_branch
    %6 = sbr.rel target = $region3
  $region8: #{encoder_forward.7} parent=0 // loop_exit
    _

// kernel: encoder_forward.11
$region0: #{encoder_forward.11}
  #allocation0 [shape = 'u32[]', space=smem, size = 0x4, offset = 0x4, fixed_abs, tag = 'smem constant byte address 0x4 - core index']
  #allocation1 [shape = 'u32[144,128]{1,0:T(1,128)}', space=vmem, size = 0x12000, scoped, tag = 'internal scratch']
  #allocation2 [shape = 'f32[1]{0:T(128)S(6)}', space=smem, size = 0x200, scoped, tag = 'scoped memory for encoder_forward.11']
  %s0 = inlined_call_operand.vmem [shape: f32[16,16,16], index: 0, kind: input, shape index: {}]
  %s1 = inlined_call_operand.vmem [shape: f32[2,16], index: 1, kind: input, shape index: {}]
  %s2 = inlined_call_operand.vmem [shape: f32[16,8], index: 2, kind: input, shape index: {}]
  %s3 = inlined_call_operand.vmem [shape: f32[16,8], index: 3, kind: input, shape index: {}]
  %s4 = inlined_call_operand.<no memory space> [shape: f32[1], index: 4, kind: input, shape index: {}]
  %s5 = inlined_call_operand.hbm [shape: f32[16,8], index: 5, kind: output, shape index: {}]
  %s6 = sld [smem:[#allocation0]]
  $region53: #{encoder_forward.11} parent=0
    _
  %s8 = ssub.s32 1, %s6
  %s9 = scalar_select 0, %s8, %s6
  %10 = sst [smem:[#allocation2]] %s4
  $region1: #{encoder_forward.11} parent=0
    #allocation3 [shape = 'u8[8192]{0}', space=vmem, size = 0x2000, scoped, tag = 'output window, operand 0']
    #allocation4 [shape = 's32[2]{0}', space=sflag, size = 0x8, scoped, tag = 'scoped memory for encoder_forward.11']
    %11 = vsyncpa [#allocation4], 0
    %s12 = scalar_lea.sflag [#allocation4], 1
    %13 = vsyncpa %s12, 0
    loop: start=0, step=1, limit=4
    $region2: #{encoder_forward.11} parent=1 // loop_pre_header
      _
    $region3: #{encoder_forward.11} parent=1 // loop_header
      %s15 = sphi 0, %s19
      %p16 = scmp.ge.s32.totalorder %s15, 4
      %s25 = sphi 0, %s27
      %s28 = sphi 0, %s25
      %s29 = sphi 0, %s28
      %s45 = sphi 0, %s29
      %s49 = sphi 0, %s49
      %s51 = sphi 0, %s49
      %s52 = sphi 0, %s51
      %s66 = sphi 0, %s52
      %s70 = sphi 0, %s70
      %s72 = sphi 0, %s70
      %s73 = sphi 0, %s72
      %s87 = sphi 0, %s73
      %s91 = sphi 0, %s91
      %s93 = sphi 0, %s91
      %s94 = sphi 0, %s93
      %s108 = sphi 0, %s94
      %s112 = sphi 0, %s112
      %s114 = sphi 0, %s112
      %s115 = sphi 0, %s114
      %s129 = sphi 0, %s115
      %s135 = sphi 0, %s137
      %s138 = sphi 0, %s135
      %s139 = sphi 0, %s138
      %s155 = sphi 0, %s139
    $region4: #{encoder_forward.11} parent=1 // loop_header_branch
      %18 = sbr.rel (%p16) target = $region8
    $region5: #{encoder_forward.11} parent=1 // loop_body
      %s20 = ssub.s32 %s15, 1
      %s21 = ssub.s32 %s15, 2
      %s22 = sadd.s32 %s15, 1
      %s23 = ssub.s32 %s15, %s22
      %p24 = scmp.eq.s32.totalorder %s23, 0
      %s26 = sadd.s32 %s25, 1
      %s27 = scalar_select %p24, %s25, %s26
      %p30 = pneg %p24
      %p31 = scmp.eq.s32.totalorder %s15, 1
      %p32 = por %p30, %p31
      %p33 = scmp.ne.s32.totalorder %s25, %s28
      %p34 = scmp.eq.s32.totalorder %s15, 0
      %p35 = por %p33, %p34
      %p36 = scmp.ne.s32.totalorder %s25, %s28
      %p37 = scmp.eq.s32.totalorder %s20, 1
      %p38 = por %p36, %p37
      %p39 = scmp.ne.s32.totalorder %s28, %s29
      %p40 = scmp.eq.s32.totalorder %s20, 0
      %p41 = por %p39, %p40
      %p42 = scmp.ne.s32.totalorder %s28, %s29
      %p43 = scmp.eq.s32.totalorder %s21, 1
      %p44 = por %p42, %p43
      %p46 = scmp.ne.s32.totalorder %s29, %s45
      %p47 = scmp.eq.s32.totalorder %s21, 0
      %p48 = por %p46, %p47
      %s50 = sadd.s32 %s49, 1
      %p53 = scmp.eq.s32.totalorder %s15, 1
      %p54 = scmp.ne.s32.totalorder %s49, %s51
      %p55 = scmp.eq.s32.totalorder %s15, 0
      %p56 = por %p54, %p55
      %p57 = scmp.ne.s32.totalorder %s49, %s51
      %p58 = scmp.eq.s32.totalorder %s20, 1
      %p59 = por %p57, %p58
      %p60 = scmp.ne.s32.totalorder %s51, %s52
      %p61 = scmp.eq.s32.totalorder %s20, 0
      %p62 = por %p60, %p61
      %p63 = scmp.ne.s32.totalorder %s51, %s52
      %p64 = scmp.eq.s32.totalorder %s21, 1
      %p65 = por %p63, %p64
      %p67 = scmp.ne.s32.totalorder %s52, %s66
      %p68 = scmp.eq.s32.totalorder %s21, 0
      %p69 = por %p67, %p68
      %s71 = sadd.s32 %s70, 1
      %p74 = scmp.eq.s32.totalorder %s15, 1
      %p75 = scmp.ne.s32.totalorder %s70, %s72
      %p76 = scmp.eq.s32.totalorder %s15, 0
      %p77 = por %p75, %p76
      %p78 = scmp.ne.s32.totalorder %s70, %s72
      %p79 = scmp.eq.s32.totalorder %s20, 1
      %p80 = por %p78, %p79
      %p81 = scmp.ne.s32.totalorder %s72, %s73
      %p82 = scmp.eq.s32.totalorder %s20, 0
      %p83 = por %p81, %p82
      %p84 = scmp.ne.s32.totalorder %s72, %s73
      %p85 = scmp.eq.s32.totalorder %s21, 1
      %p86 = por %p84, %p85
      %p88 = scmp.ne.s32.totalorder %s73, %s87
      %p89 = scmp.eq.s32.totalorder %s21, 0
      %p90 = por %p88, %p89
      %s92 = sadd.s32 %s91, 1
      %p95 = scmp.eq.s32.totalorder %s15, 1
      %p96 = scmp.ne.s32.totalorder %s91, %s93
      %p97 = scmp.eq.s32.totalorder %s15, 0
      %p98 = por %p96, %p97
      %p99 = scmp.ne.s32.totalorder %s91, %s93
      %p100 = scmp.eq.s32.totalorder %s20, 1
      %p101 = por %p99, %p100
      %p102 = scmp.ne.s32.totalorder %s93, %s94
      %p103 = scmp.eq.s32.totalorder %s20, 0
      %p104 = por %p102, %p103
      %p105 = scmp.ne.s32.totalorder %s93, %s94
      %p106 = scmp.eq.s32.totalorder %s21, 1
      %p107 = por %p105, %p106
      %p109 = scmp.ne.s32.totalorder %s94, %s108
      %p110 = scmp.eq.s32.totalorder %s21, 0
      %p111 = por %p109, %p110
      %s113 = sadd.s32 %s112, 1
      %p116 = scmp.eq.s32.totalorder %s15, 1
      %p117 = scmp.ne.s32.totalorder %s112, %s114
      %p118 = scmp.eq.s32.totalorder %s15, 0
      %p119 = por %p117, %p118
      %p120 = scmp.ne.s32.totalorder %s112, %s114
      %p121 = scmp.eq.s32.totalorder %s20, 1
      %p122 = por %p120, %p121
      %p123 = scmp.ne.s32.totalorder %s114, %s115
      %p124 = scmp.eq.s32.totalorder %s20, 0
      %p125 = por %p123, %p124
      %p126 = scmp.ne.s32.totalorder %s114, %s115
      %p127 = scmp.eq.s32.totalorder %s21, 1
      %p128 = por %p126, %p127
      %p130 = scmp.ne.s32.totalorder %s115, %s129
      %p131 = scmp.eq.s32.totalorder %s21, 0
      %p132 = por %p130, %p131
      %s133 = ssub.s32 %s15, %s22
      %p134 = scmp.eq.s32.totalorder %s133, 0
      %s136 = sadd.s32 %s135, 1
      %s137 = scalar_select %p134, %s135, %s136
      %p140 = pneg %p134
      %p141 = scmp.eq.s32.totalorder %s15, 1
      %p142 = por %p140, %p141
      %p143 = scmp.ne.s32.totalorder %s135, %s138
      %p144 = scmp.eq.s32.totalorder %s15, 0
      %p145 = por %p143, %p144
      %p146 = scmp.ne.s32.totalorder %s135, %s138
      %p147 = scmp.eq.s32.totalorder %s20, 1
      %p148 = por %p146, %p147
      %p149 = scmp.ne.s32.totalorder %s138, %s139
      %p150 = scmp.eq.s32.totalorder %s20, 0
      %p151 = por %p149, %p150
      %p152 = scmp.ne.s32.totalorder %s138, %s139
      %p153 = scmp.eq.s32.totalorder %s21, 1
      %p154 = por %p152, %p153
      %p156 = scmp.ne.s32.totalorder %s139, %s155
      %p157 = scmp.eq.s32.totalorder %s21, 0
      %p158 = por %p156, %p157
      %p159 = scmp.le.s32.totalorder 1, %s15
      %p160 = scmp.lt.s32.totalorder %s15, 3
      %p161 = pnand %p159, %p160
      %p162 = pneg %p161
      // Predicated region
      $region9: #{encoder_forward.11} parent=5 // pred_check
        _
      $region10: #{encoder_forward.11} parent=5 // pred_check_branch
        %164 = sbr.rel (%p161) target = $region12
      $region11: #{encoder_forward.11} parent=5 // pred_region
        %s165 = ssub.s32 %s15, 1
        // Predicated region
        $region13: #{encoder_forward.11} parent=11 // pred_check
          %p166 = pneg %p62
        $region14: #{encoder_forward.11} parent=11 // pred_check_branch
          %168 = sbr.rel (%p166) target = $region16
        $region15: #{encoder_forward.11} parent=11 // pred_region
          _
        $region16: #{encoder_forward.11} parent=11 // pred_fallthru
          _
        // Predicated region
        $region17: #{encoder_forward.11} parent=11 // pred_check
          %p169 = pneg %p83
        $region18: #{encoder_forward.11} parent=11 // pred_check_branch
          %171 = sbr.rel (%p169) target = $region20
        $region19: #{encoder_forward.11} parent=11 // pred_region
          _
        $region20: #{encoder_forward.11} parent=11 // pred_fallthru
          _
        // Predicated region
        $region21: #{encoder_forward.11} parent=11 // pred_check
          %p172 = pneg %p104
        $region22: #{encoder_forward.11} parent=11 // pred_check_branch
          %174 = sbr.rel (%p172) target = $region24
        $region23: #{encoder_forward.11} parent=11 // pred_region
          _
        $region24: #{encoder_forward.11} parent=11 // pred_fallthru
          _
        // Predicated region
        $region25: #{encoder_forward.11} parent=11 // pred_check
          %p175 = pneg %p125
        $region26: #{encoder_forward.11} parent=11 // pred_check_branch
          %177 = sbr.rel (%p175) target = $region28
        $region27: #{encoder_forward.11} parent=11 // pred_region
          _
        $region28: #{encoder_forward.11} parent=11 // pred_fallthru
          _
      $region12: #{encoder_forward.11} parent=5 // pred_fallthru
        _
      %p178 = scmp.lt.s32.totalorder %s15, 2
      // Predicated region
      $region29: #{encoder_forward.11} parent=5 // pred_check
        %p179 = pneg %p178
      $region30: #{encoder_forward.11} parent=5 // pred_check_branch
        %181 = sbr.rel (%p179) target = $region32
      $region31: #{encoder_forward.11} parent=5 // pred_region
        // Predicated region
        $region33: #{encoder_forward.11} parent=31 // pred_check
          %p182 = pneg %p35
        $region34: #{encoder_forward.11} parent=31 // pred_check_branch
          %184 = sbr.rel (%p182) target = $region36
        $region35: #{encoder_forward.11} parent=31 // pred_region
          %s185 = smul.u32 8, %s15
          %p186 = scmp.lt.s32.totalorder %s185, 15
          %s187 = scalar_select %p186, %s185, 15
          %s188 = smul.addr %s187, 2
          %s189 = smul.addr %s188, 8
          %s190 = scalar_lea.vmem %s0, %s189
          %s191 = smul.u32 8, %s15
        $region36: #{encoder_forward.11} parent=31 // pred_fallthru
          _
      $region32: #{encoder_forward.11} parent=5 // pred_fallthru
        _
      %p192 = scmp.le.s32.totalorder 1, %s15
      %p193 = scmp.lt.s32.totalorder %s15, 3
      %p194 = pnand %p192, %p193
      %p195 = pneg %p194
      // Predicated region
      $region37: #{encoder_forward.11} parent=5 // pred_check
        _
      $region38: #{encoder_forward.11} parent=5 // pred_check_branch
        %197 = sbr.rel (%p194) target = $region40
      $region39: #{encoder_forward.11} parent=5 // pred_region
        %s198 = ssub.s32 %s15, 1
        %s199 = smul.u32 8, %s20
        %p200 = scmp.lt.s32.totalorder %s199, 15
        %s201 = scalar_select %p200, %s199, 15
        %s202 = smul.addr %s201, 2
        %s203 = smul.addr %s202, 8
        %s204 = scalar_lea.vmem %s0, %s203
        %p205 = pneg %p41
        %p206 = pneg %p38
        %p207 = pneg %p62
        %p208 = pneg %p59
        %p209 = pneg %p83
        %p210 = pneg %p80
        %p211 = pneg %p104
        %p212 = pneg %p101
        %p213 = pneg %p125
        %p214 = pneg %p122
        %p215 = pneg %p151
        %p216 = pneg %p148
        %s217 = sand.u32 %s138, 1
        %s218 = scalar_lea.sflag [#allocation4], %s217
        %s219 = sand.u32 %s138, 1
        %s220 = smul.addr %s219, 8
        %s221 = scalar_lea.vmem [#allocation3], %s220
        %s222 = smul.u32 8, %s20
        %p223 = scmp.lt.s32.totalorder %s222, 15
        %s224 = scalar_select %p223, %s222, 15
        %s225 = smul.addr %s224, 2
        %s226 = smul.addr %s225, 8
        %s227 = scalar_lea.vmem %s0, %s226
        %s228 = smul.u32 8, %s20
        %v229 = vld [vmem:[%s227] sm:$0xff]
        %v230 = vld [vmem:[%s227 + $0x8] sm:$0xff]
        %v231 = vld [vmem:[%s227 + $0x10] sm:$0xff]
        %v232 = vld [vmem:[%s227 + $0x18] sm:$0xff]
        %v233 = vld [vmem:[%s227 + $0x20] sm:$0xff]
        %v234 = vld [vmem:[%s227 + $0x28] sm:$0xff]
        %v235 = vld [vmem:[%s227 + $0x30] sm:$0xff]
        %v236 = vld [vmem:[%s227 + $0x38] sm:$0xff]
        %v237 = vld [vmem:[%s227 + $0x40] sm:$0xff]
        %v238 = vld [vmem:[%s227 + $0x48] sm:$0xff]
        %v239 = vld [vmem:[%s227 + $0x50] sm:$0xff]
        %v240 = vld [vmem:[%s227 + $0x58] sm:$0xff]
        %v241 = vld [vmem:[%s227 + $0x60] sm:$0xff]
        %v242 = vld [vmem:[%s227 + $0x68] sm:$0xff]
        %v243 = vld [vmem:[%s227 + $0x70] sm:$0xff]
        %v244 = vld [vmem:[%s227 + $0x78] sm:$0xff]
        %v245 = vld [vmem:[%s1] sm:$0x1]
        %v246 = vlaneseq
        %v247 = vshrl.u32 %v246, 7
        %v248 = vsub.s32 0, %v247
        %v249 = vrot.slane %v245, %v248
        %v250 = vmul.f32 %v229, %v249
        %v251 = vmul.f32 %v230, %v249
        %v252 = vmul.f32 %v231, %v249
        %v253 = vmul.f32 %v232, %v249
        %v254 = vmul.f32 %v233, %v249
        %v255 = vmul.f32 %v234, %v249
        %v256 = vmul.f32 %v235, %v249
        %v257 = vmul.f32 %v236, %v249
        %v258 = vmul.f32 %v237, %v249
        %v259 = vmul.f32 %v238, %v249
        %v260 = vmul.f32 %v239, %v249
        %v261 = vmul.f32 %v240, %v249
        %v262 = vmul.f32 %v241, %v249
        %v263 = vmul.f32 %v242, %v249
        %v264 = vmul.f32 %v243, %v249
        %v265 = vmul.f32 %v244, %v249
        %vm266 = vcmask 130048
        %v267 = vsel %vm266, %v250, 0.0
        %268 = vadd.xlane.f32.xlu0 %v267
        %v269 = vpop.xlane.xlu0 %268
        %v270 = vsel %vm266, %v251, 0.0
        %271 = vadd.xlane.f32.xlu0 %v270
        %v272 = vpop.xlane.xlu0 %271
        %v273 = vsel %vm266, %v252, 0.0
        %274 = vadd.xlane.f32.xlu0 %v273
        %v275 = vpop.xlane.xlu0 %274
        %v276 = vsel %vm266, %v253, 0.0
        %277 = vadd.xlane.f32.xlu0 %v276
        %v278 = vpop.xlane.xlu0 %277
        %v279 = vsel %vm266, %v254, 0.0
        %280 = vadd.xlane.f32.xlu0 %v279
        %v281 = vpop.xlane.xlu0 %280
        %v282 = vsel %vm266, %v255, 0.0
        %283 = vadd.xlane.f32.xlu0 %v282
        %v284 = vpop.xlane.xlu0 %283
        %v285 = vsel %vm266, %v256, 0.0
        %286 = vadd.xlane.f32.xlu0 %v285
        %v287 = vpop.xlane.xlu0 %286
        %v288 = vsel %vm266, %v257, 0.0
        %289 = vadd.xlane.f32.xlu0 %v288
        %v290 = vpop.xlane.xlu0 %289
        %v291 = vsel %vm266, %v258, 0.0
        %292 = vadd.xlane.f32.xlu0 %v291
        %v293 = vpop.xlane.xlu0 %292
        %v294 = vsel %vm266, %v259, 0.0
        %295 = vadd.xlane.f32.xlu0 %v294
        %v296 = vpop.xlane.xlu0 %295
        %v297 = vsel %vm266, %v260, 0.0
        %298 = vadd.xlane.f32.xlu0 %v297
        %v299 = vpop.xlane.xlu0 %298
        %v300 = vsel %vm266, %v261, 0.0
        %301 = vadd.xlane.f32.xlu0 %v300
        %v302 = vpop.xlane.xlu0 %301
        %v303 = vsel %vm266, %v262, 0.0
        %304 = vadd.xlane.f32.xlu0 %v303
        %v305 = vpop.xlane.xlu0 %304
        %v306 = vsel %vm266, %v263, 0.0
        %307 = vadd.xlane.f32.xlu0 %v306
        %v308 = vpop.xlane.xlu0 %307
        %v309 = vsel %vm266, %v264, 0.0
        %310 = vadd.xlane.f32.xlu0 %v309
        %v311 = vpop.xlane.xlu0 %310
        %v312 = vsel %vm266, %v265, 0.0
        %313 = vadd.xlane.f32.xlu0 %v312
        %v314 = vpop.xlane.xlu0 %313
        %v315 = vld [vmem:[%s1 + $0x1] sm:$0x1]
        %v316 = vlaneseq
        %v317 = vshrl.u32 %v316, 7
        %v318 = vsub.s32 0, %v317
        %v319 = vrot.slane %v315, %v318
        %v320 = vmul.f32 %v229, %v319
        %v321 = vmul.f32 %v230, %v319
        %v322 = vmul.f32 %v231, %v319
        %v323 = vmul.f32 %v232, %v319
        %v324 = vmul.f32 %v233, %v319
        %v325 = vmul.f32 %v234, %v319
        %v326 = vmul.f32 %v235, %v319
        %v327 = vmul.f32 %v236, %v319
        %v328 = vmul.f32 %v237, %v319
        %v329 = vmul.f32 %v238, %v319
        %v330 = vmul.f32 %v239, %v319
        %v331 = vmul.f32 %v240, %v319
        %v332 = vmul.f32 %v241, %v319
        %v333 = vmul.f32 %v242, %v319
        %v334 = vmul.f32 %v243, %v319
        %v335 = vmul.f32 %v244, %v319
        %v336 = vsel %vm266, %v320, 0.0
        %337 = vadd.xlane.f32.xlu0 %v336
        %v338 = vpop.xlane.xlu0 %337
        %v339 = vsel %vm266, %v321, 0.0
        %340 = vadd.xlane.f32.xlu0 %v339
        %v341 = vpop.xlane.xlu0 %340
        %v342 = vsel %vm266, %v322, 0.0
        %343 = vadd.xlane.f32.xlu0 %v342
        %v344 = vpop.xlane.xlu0 %343
        %v345 = vsel %vm266, %v323, 0.0
        %346 = vadd.xlane.f32.xlu0 %v345
        %v347 = vpop.xlane.xlu0 %346
        %v348 = vsel %vm266, %v324, 0.0
        %349 = vadd.xlane.f32.xlu0 %v348
        %v350 = vpop.xlane.xlu0 %349
        %v351 = vsel %vm266, %v325, 0.0
        %352 = vadd.xlane.f32.xlu0 %v351
        %v353 = vpop.xlane.xlu0 %352
        %v354 = vsel %vm266, %v326, 0.0
        %355 = vadd.xlane.f32.xlu0 %v354
        %v356 = vpop.xlane.xlu0 %355
        %v357 = vsel %vm266, %v327, 0.0
        %358 = vadd.xlane.f32.xlu0 %v357
        %v359 = vpop.xlane.xlu0 %358
        %v360 = vsel %vm266, %v328, 0.0
        %361 = vadd.xlane.f32.xlu0 %v360
        %v362 = vpop.xlane.xlu0 %361
        %v363 = vsel %vm266, %v329, 0.0
        %364 = vadd.xlane.f32.xlu0 %v363
        %v365 = vpop.xlane.xlu0 %364
        %v366 = vsel %vm266, %v330, 0.0
        %367 = vadd.xlane.f32.xlu0 %v366
        %v368 = vpop.xlane.xlu0 %367
        %v369 = vsel %vm266, %v331, 0.0
        %370 = vadd.xlane.f32.xlu0 %v369
        %v371 = vpop.xlane.xlu0 %370
        %v372 = vsel %vm266, %v332, 0.0
        %373 = vadd.xlane.f32.xlu0 %v372
        %v374 = vpop.xlane.xlu0 %373
        %v375 = vsel %vm266, %v333, 0.0
        %376 = vadd.xlane.f32.xlu0 %v375
        %v377 = vpop.xlane.xlu0 %376
        %v378 = vsel %vm266, %v334, 0.0
        %379 = vadd.xlane.f32.xlu0 %v378
        %v380 = vpop.xlane.xlu0 %379
        %v381 = vsel %vm266, %v335, 0.0
        %382 = vadd.xlane.f32.xlu0 %v381
        %v383 = vpop.xlane.xlu0 %382
        %v384 = vld [vmem:[%s2] sm:$0xff]
        %v385 = vld [vmem:[%s2 + $0x8] sm:$0xff]
        %v386 = vld [vmem:[%s3] sm:$0xff]
        %v387 = vld [vmem:[%s3 + $0x8] sm:$0xff]
        %v404 = vlaneseq
        %v405 = vand.u32 %v404, 127
        %v406 = vlaneseq
        %v407 = vshrl.u32 %v406, 7
        %v408 = vsub.s32 %v405, %v407
        %v409 = vrot.slane %v338, %v408
        %v410 = vadd.s32 %v405, 4294967288
        %v411 = vlaneseq
        %v412 = vshrl.u32 %v411, 7
        %v413 = vsub.s32 %v410, %v412
        %v414 = vrot.slane %v341, %v413
        %vm415 = vcmask 130112
        %v416 = vsel %vm415, %v414, %v409
        %v417 = vlaneseq
        %v418 = vshrl.u32 %v417, 7
        %v419 = vsub.s32 %v405, %v418
        %v420 = vrot.slane %v344, %v419
        %v421 = vlaneseq
        %v422 = vshrl.u32 %v421, 7
        %v423 = vsub.s32 %v410, %v422
        %v424 = vrot.slane %v347, %v423
        %v425 = vsel %vm415, %v424, %v420
        %v426 = vlaneseq
        %v427 = vshrl.u32 %v426, 7
        %v428 = vsub.s32 %v405, %v427
        %v429 = vrot.slane %v350, %v428
        %v430 = vlaneseq
        %v431 = vshrl.u32 %v430, 7
        %v432 = vsub.s32 %v410, %v431
        %v433 = vrot.slane %v353, %v432
        %v434 = vsel %vm415, %v433, %v429
        %v435 = vlaneseq
        %v436 = vshrl.u32 %v435, 7
        %v437 = vsub.s32 %v405, %v436
        %v438 = vrot.slane %v356, %v437
        %v439 = vlaneseq
        %v440 = vshrl.u32 %v439, 7
        %v441 = vsub.s32 %v410, %v440
        %v442 = vrot.slane %v359, %v441
        %v443 = vsel %vm415, %v442, %v438
        %v444 = vlaneseq
        %v445 = vshrl.u32 %v444, 7
        %v446 = vsub.s32 %v405, %v445
        %v447 = vrot.slane %v362, %v446
        %v448 = vlaneseq
        %v449 = vshrl.u32 %v448, 7
        %v450 = vsub.s32 %v410, %v449
        %v451 = vrot.slane %v365, %v450
        %v452 = vsel %vm415, %v451, %v447
        %v453 = vlaneseq
        %v454 = vshrl.u32 %v453, 7
        %v455 = vsub.s32 %v405, %v454
        %v456 = vrot.slane %v368, %v455
        %v457 = vlaneseq
        %v458 = vshrl.u32 %v457, 7
        %v459 = vsub.s32 %v410, %v458
        %v460 = vrot.slane %v371, %v459
        %v461 = vsel %vm415, %v460, %v456
        %v462 = vlaneseq
        %v463 = vshrl.u32 %v462, 7
        %v464 = vsub.s32 %v405, %v463
        %v465 = vrot.slane %v374, %v464
        %v466 = vlaneseq
        %v467 = vshrl.u32 %v466, 7
        %v468 = vsub.s32 %v410, %v467
        %v469 = vrot.slane %v377, %v468
        %v470 = vsel %vm415, %v469, %v465
        %v471 = vlaneseq
        %v472 = vshrl.u32 %v471, 7
        %v473 = vsub.s32 %v405, %v472
        %v474 = vrot.slane %v380, %v473
        %v475 = vlaneseq
        %v476 = vshrl.u32 %v475, 7
        %v477 = vsub.s32 %v410, %v476
        %v478 = vrot.slane %v383, %v477
        %v479 = vsel %vm415, %v478, %v474
        %vm480 = vcmask 1041409
        %v481 = vsel %vm480, %v425, %v416
        %vm482 = vcmask 1042434
        %v483 = vsel %vm482, %v434, %v481
        %vm484 = vcmask 1043459
        %v485 = vsel %vm484, %v443, %v483
        %vm486 = vcmask 1044484
        %v487 = vsel %vm486, %v452, %v485
        %vm488 = vcmask 1045509
        %v489 = vsel %vm488, %v461, %v487
        %vm490 = vcmask 1046534
        %v491 = vsel %vm490, %v470, %v489
        %vm492 = vcmask 1047559
        %v493 = vsel %vm492, %v479, %v491
        %v494 = vsel %vm266, %v493, 0
        %496 = vmatprep.subr.mxu0 0.0
        %497 = vmatpush1.msra.mxu0 %v386
        %498 = vmatprep.subr.mxu0 0.0
        %499 = vmatpush1.msra.mxu0 %v387
        %500 = vmatprep.subr.mxu0 0.0
        %501 = vmatpush1.msra.mxu0 0.0
        %502 = vmatprep.subr.mxu0 0.0
        %503 = vmatpush1.msra.mxu0 0.0
        %504 = vmatprep.subr.mxu0 0.0
        %505 = vmatpush1.msra.mxu0 0.0
        %506 = vmatprep.subr.mxu0 0.0
        %507 = vmatpush1.msra.mxu0 0.0
        %508 = vmatprep.subr.mxu0 0.0
        %509 = vmatpush1.msra.mxu0 0.0
        %510 = vmatprep.subr.mxu0 0.0
        %511 = vmatpush1.msra.mxu0 0.0
        %512 = vmatprep.subr.mxu0 0.0
        %513 = vmatpush1.msra.mxu0 0.0
        %514 = vmatprep.subr.mxu0 0.0
        %515 = vmatpush1.msra.mxu0 0.0
        %516 = vmatprep.subr.mxu0 0.0
        %517 = vmatpush1.msra.mxu0 0.0
        %518 = vmatprep.subr.mxu0 0.0
        %519 = vmatpush1.msra.mxu0 0.0
        %520 = vmatprep.subr.mxu0 0.0
        %521 = vmatpush1.msra.mxu0 0.0
        %522 = vmatprep.subr.mxu0 0.0
        %523 = vmatpush1.msra.mxu0 0.0
        %524 = vmatprep.subr.mxu0 0.0
        %525 = vmatpush1.msra.mxu0 0.0
        %526 = vmatprep.subr.mxu0 0.0
        %527 = vmatpush1.msra.mxu0 0.0
        %528 = vmatprep.subr.mxu0 0.0
        %529 = vmatpush1.msra.mxu0 0.0
        %530 = vmatprep.subr.mxu0 0.0
        %531 = vmatpush1.msra.mxu0 0.0
        %532 = vmatprep.subr.mxu0 0.0
        %533 = vmatpush1.msra.mxu0 0.0
        %534 = vmatprep.subr.mxu0 0.0
        %535 = vmatpush1.msra.mxu0 0.0
        %536 = vmatprep.subr.mxu0 0.0
        %537 = vmatpush1.msra.mxu0 0.0
        %538 = vmatprep.subr.mxu0 0.0
        %539 = vmatpush1.msra.mxu0 0.0
        %540 = vmatprep.subr.mxu0 0.0
        %541 = vmatpush1.msra.mxu0 0.0
        %542 = vmatprep.subr.mxu0 0.0
        %543 = vmatpush1.msra.mxu0 0.0
        %544 = vmatprep.subr.mxu0 0.0
        %545 = vmatpush1.msra.mxu0 0.0
        %546 = vmatprep.subr.mxu0 0.0
        %547 = vmatpush1.msra.mxu0 0.0
        %548 = vmatprep.subr.mxu0 0.0
        %549 = vmatpush1.msra.mxu0 0.0
        %550 = vmatprep.subr.mxu0 0.0
        %551 = vmatpush1.msra.mxu0 0.0
        %552 = vmatprep.subr.mxu0 0.0
        %553 = vmatpush1.msra.mxu0 0.0
        %554 = vmatprep.subr.mxu0 0.0
        %555 = vmatpush1.msra.mxu0 0.0
        %556 = vmatprep.subr.mxu0 0.0
        %557 = vmatpush1.msra.mxu0 0.0
        %558 = vmatprep.subr.mxu0 0.0
        %559 = vmatpush1.msra.mxu0 0.0
        %560 = vmatprep.mubr.f32.mxu0 0.0
        %561 = vmatmul.mubr.f32.gmra.mrb[0].mxu0 %v494
        %v562 = vpop.f32.mrb[0].mxu0
        %v563 = vadd.f32 0.0, %v562
        %v564 = vpop.f32.mrb[0].mxu0
        %565 = vdwg.mxu0
        %v582 = vlaneseq
        %v583 = vshrl.u32 %v582, 7
        %v584 = vsub.s32 %v405, %v583
        %v585 = vrot.slane %v269, %v584
        %v586 = vlaneseq
        %v587 = vshrl.u32 %v586, 7
        %v588 = vsub.s32 %v410, %v587
        %v589 = vrot.slane %v272, %v588
        %v590 = vsel %vm415, %v589, %v585
        %v591 = vlaneseq
        %v592 = vshrl.u32 %v591, 7
        %v593 = vsub.s32 %v405, %v592
        %v594 = vrot.slane %v275, %v593
        %v595 = vlaneseq
        %v596 = vshrl.u32 %v595, 7
        %v597 = vsub.s32 %v410, %v596
        %v598 = vrot.slane %v278, %v597
        %v599 = vsel %vm415, %v598, %v594
        %v600 = vlaneseq
        %v601 = vshrl.u32 %v600, 7
        %v602 = vsub.s32 %v405, %v601
        %v603 = vrot.slane %v281, %v602
        %v604 = vlaneseq
        %v605 = vshrl.u32 %v604, 7
        %v606 = vsub.s32 %v410, %v605
        %v607 = vrot.slane %v284, %v606
        %v608 = vsel %vm415, %v607, %v603
        %v609 = vlaneseq
        %v610 = vshrl.u32 %v609, 7
        %v611 = vsub.s32 %v405, %v610
        %v612 = vrot.slane %v287, %v611
        %v613 = vlaneseq
        %v614 = vshrl.u32 %v613, 7
        %v615 = vsub.s32 %v410, %v614
        %v616 = vrot.slane %v290, %v615
        %v617 = vsel %vm415, %v616, %v612
        %v618 = vlaneseq
        %v619 = vshrl.u32 %v618, 7
        %v620 = vsub.s32 %v405, %v619
        %v621 = vrot.slane %v293, %v620
        %v622 = vlaneseq
        %v623 = vshrl.u32 %v622, 7
        %v624 = vsub.s32 %v410, %v623
        %v625 = vrot.slane %v296, %v624
        %v626 = vsel %vm415, %v625, %v621
        %v627 = vlaneseq
        %v628 = vshrl.u32 %v627, 7
        %v629 = vsub.s32 %v405, %v628
        %v630 = vrot.slane %v299, %v629
        %v631 = vlaneseq
        %v632 = vshrl.u32 %v631, 7
        %v633 = vsub.s32 %v410, %v632
        %v634 = vrot.slane %v302, %v633
        %v635 = vsel %vm415, %v634, %v630
        %v636 = vlaneseq
        %v637 = vshrl.u32 %v636, 7
        %v638 = vsub.s32 %v405, %v637
        %v639 = vrot.slane %v305, %v638
        %v640 = vlaneseq
        %v641 = vshrl.u32 %v640, 7
        %v642 = vsub.s32 %v410, %v641
        %v643 = vrot.slane %v308, %v642
        %v644 = vsel %vm415, %v643, %v639
        %v645 = vlaneseq
        %v646 = vshrl.u32 %v645, 7
        %v647 = vsub.s32 %v405, %v646
        %v648 = vrot.slane %v311, %v647
        %v649 = vlaneseq
        %v650 = vshrl.u32 %v649, 7
        %v651 = vsub.s32 %v410, %v650
        %v652 = vrot.slane %v314, %v651
        %v653 = vsel %vm415, %v652, %v648
        %v654 = vsel %vm480, %v599, %v590
        %v655 = vsel %vm482, %v608, %v654
        %v656 = vsel %vm484, %v617, %v655
        %v657 = vsel %vm486, %v626, %v656
        %v658 = vsel %vm488, %v635, %v657
        %v659 = vsel %vm490, %v644, %v658
        %v660 = vsel %vm492, %v653, %v659
        %v661 = vsel %vm266, %v660, 0
        %663 = vmatprep.subr.mxu0 0.0
        %664 = vmatpush1.msra.mxu0 %v384
        %665 = vmatprep.subr.mxu0 0.0
        %666 = vmatpush1.msra.mxu0 %v385
        %667 = vmatprep.subr.mxu0 0.0
        %668 = vmatpush1.msra.mxu0 0.0
        %669 = vmatprep.subr.mxu0 0.0
        %670 = vmatpush1.msra.mxu0 0.0
        %671 = vmatprep.subr.mxu0 0.0
        %672 = vmatpush1.msra.mxu0 0.0
        %673 = vmatprep.subr.mxu0 0.0
        %674 = vmatpush1.msra.mxu0 0.0
        %675 = vmatprep.subr.mxu0 0.0
        %676 = vmatpush1.msra.mxu0 0.0
        %677 = vmatprep.subr.mxu0 0.0
        %678 = vmatpush1.msra.mxu0 0.0
        %679 = vmatprep.subr.mxu0 0.0
        %680 = vmatpush1.msra.mxu0 0.0
        %681 = vmatprep.subr.mxu0 0.0
        %682 = vmatpush1.msra.mxu0 0.0
        %683 = vmatprep.subr.mxu0 0.0
        %684 = vmatpush1.msra.mxu0 0.0
        %685 = vmatprep.subr.mxu0 0.0
        %686 = vmatpush1.msra.mxu0 0.0
        %687 = vmatprep.subr.mxu0 0.0
        %688 = vmatpush1.msra.mxu0 0.0
        %689 = vmatprep.subr.mxu0 0.0
        %690 = vmatpush1.msra.mxu0 0.0
        %691 = vmatprep.subr.mxu0 0.0
        %692 = vmatpush1.msra.mxu0 0.0
        %693 = vmatprep.subr.mxu0 0.0
        %694 = vmatpush1.msra.mxu0 0.0
        %695 = vmatprep.subr.mxu0 0.0
        %696 = vmatpush1.msra.mxu0 0.0
        %697 = vmatprep.subr.mxu0 0.0
        %698 = vmatpush1.msra.mxu0 0.0
        %699 = vmatprep.subr.mxu0 0.0
        %700 = vmatpush1.msra.mxu0 0.0
        %701 = vmatprep.subr.mxu0 0.0
        %702 = vmatpush1.msra.mxu0 0.0
        %703 = vmatprep.subr.mxu0 0.0
        %704 = vmatpush1.msra.mxu0 0.0
        %705 = vmatprep.subr.mxu0 0.0
        %706 = vmatpush1.msra.mxu0 0.0
        %707 = vmatprep.subr.mxu0 0.0
        %708 = vmatpush1.msra.mxu0 0.0
        %709 = vmatprep.subr.mxu0 0.0
        %710 = vmatpush1.msra.mxu0 0.0
        %711 = vmatprep.subr.mxu0 0.0
        %712 = vmatpush1.msra.mxu0 0.0
        %713 = vmatprep.subr.mxu0 0.0
        %714 = vmatpush1.msra.mxu0 0.0
        %715 = vmatprep.subr.mxu0 0.0
        %716 = vmatpush1.msra.mxu0 0.0
        %717 = vmatprep.subr.mxu0 0.0
        %718 = vmatpush1.msra.mxu0 0.0
        %719 = vmatprep.subr.mxu0 0.0
        %720 = vmatpush1.msra.mxu0 0.0
        %721 = vmatprep.subr.mxu0 0.0
        %722 = vmatpush1.msra.mxu0 0.0
        %723 = vmatprep.subr.mxu0 0.0
        %724 = vmatpush1.msra.mxu0 0.0
        %725 = vmatprep.subr.mxu0 0.0
        %726 = vmatpush1.msra.mxu0 0.0
        %727 = vmatprep.mubr.f32.mxu0 0.0
        %728 = vmatmul.mubr.f32.gmra.mrb[0].mxu0 %v661
        %v729 = vpop.f32.mrb[0].mxu0
        %v730 = vadd.f32 %v563, %v729
        %v731 = vpop.f32.mrb[0].mxu0
        %732 = vdwg.mxu0
        %s733 = sld [smem:[#allocation2]]
        %v734 = vstv %s733
        %v735 = vadd.f32 %v730, %v734
        %vm736 = vcmask 64512
        %737 = vst.msk [vmem:[%s221] sm:$0xff] %vm736, %v735
        %s738 = sand.u32 %s138, 1
        %s739 = scalar_lea.sflag [#allocation4], %s738
        %s740 = sand.u32 %s138, 1
        %s741 = smul.addr %s740, 8
        %s742 = scalar_lea.vmem [#allocation3], %s741
        // Predicated region
        $region41: #{encoder_forward.11} parent=39 // pred_check
          %p743 = pneg %p148
        $region42: #{encoder_forward.11} parent=39 // pred_check_branch
          %745 = sbr.rel (%p743) target = $region44
        $region43: #{encoder_forward.11} parent=39 // pred_region
          %s747 = ssub.s32 128, 128
          %748 = vsyncadd %s739, %s747
          %s749 = smul.addr %s20, 128
          %s750 = scalar_lea.hbm %s5, %s749
          %s752 = sshll.u32 %s742, 4
          %s753 = int_to_ptr.vmem [resolvable:$true] %s752
          %755 = dma.vmem_to_hbm [thread:$0]  %s753, 128, %s750, %s739
        $region44: #{encoder_forward.11} parent=39 // pred_fallthru
          _
      $region40: #{encoder_forward.11} parent=5 // pred_fallthru
        _
      %p756 = scmp.le.s32.totalorder 2, %s15
      // Predicated region
      $region45: #{encoder_forward.11} parent=5 // pred_check
        %p757 = pneg %p756
      $region46: #{encoder_forward.11} parent=5 // pred_check_branch
        %759 = sbr.rel (%p757) target = $region48
      $region47: #{encoder_forward.11} parent=5 // pred_region
        %s760 = ssub.s32 %s15, 2
        // Predicated region
        $region49: #{encoder_forward.11} parent=47 // pred_check
          %p761 = pneg %p154
        $region50: #{encoder_forward.11} parent=47 // pred_check_branch
          %763 = sbr.rel (%p761) target = $region52
        $region51: #{encoder_forward.11} parent=47 // pred_region
          %s764 = sand.u32 %s139, 1
          %s765 = scalar_lea.sflag [#allocation4], %s764
          %s766 = sand.u32 %s139, 1
          %s767 = smul.addr %s766, 8
          %s768 = scalar_lea.vmem [#allocation3], %s767
          %769 = dma.done %s765, 128
        $region52: #{encoder_forward.11} parent=47 // pred_fallthru
          _
      $region48: #{encoder_forward.11} parent=5 // pred_fallthru
        _
    $region6: #{encoder_forward.11} parent=1 // loop_footer
      %s19 = sadd.s32 1, %s15
    $region7: #{encoder_forward.11} parent=1 // loop_footer_branch
      %14 = sbr.rel target = $region3
    $region8: #{encoder_forward.11} parent=1 // loop_exit
      _
    %770 = vsyncpa [#allocation4], 1
    %s771 = scalar_lea.sflag [#allocation4], 1
    %772 = vsyncpa %s771, 1

// kernel: encoder_forward.6
$region0: #{encoder_forward.6}
  #allocation0 [shape = 'u32[]', space=smem, size = 0x4, offset = 0x4, fixed_abs, tag = 'smem constant byte address 0x4 - core index']
  #allocation1 [shape = 'u32[144,128]{1,0:T(1,128)}', space=vmem, size = 0x12000, scoped, tag = 'internal scratch']
  %s0 = inlined_call_operand.vmem [shape: f32[16,16,1], index: 0, kind: input, shape index: {}]
  %s1 = inlined_call_operand.vmem [shape: f32[3,16], index: 1, kind: input, shape index: {}]
  %s2 = inlined_call_operand.vmem [shape: f32[1,16], index: 2, kind: input, shape index: {}]
  %s3 = inlined_call_operand.vmem [shape: f32[16,16,16], index: 3, kind: output, shape index: {}]
  %s4 = sld [smem:[#allocation0]]
  $region45: #{encoder_forward.6} parent=0
    _
  %s6 = ssub.s32 1, %s4
  %s7 = scalar_select 0, %s6, %s4
  loop: start=0, step=1, limit=4
  $region2: #{encoder_forward.6} parent=0 // loop_pre_header
    _
  $region3: #{encoder_forward.6} parent=0 // loop_header
    %s9 = sphi 0, %s13
    %p10 = scmp.ge.s32.totalorder %s9, 4
    %s19 = sphi 0, %s21
    %s22 = sphi 0, %s19
    %s23 = sphi 0, %s22
    %s39 = sphi 0, %s23
    %s43 = sphi 0, %s43
    %s45 = sphi 0, %s43
    %s46 = sphi 0, %s45
    %s60 = sphi 0, %s46
    %s64 = sphi 0, %s64
    %s66 = sphi 0, %s64
    %s67 = sphi 0, %s66
    %s81 = sphi 0, %s67
    %s87 = sphi 0, %s89
    %s90 = sphi 0, %s87
    %s91 = sphi 0, %s90
    %s107 = sphi 0, %s91
  $region4: #{encoder_forward.6} parent=0 // loop_header_branch
    %12 = sbr.rel (%p10) target = $region8
  $region5: #{encoder_forward.6} parent=0 // loop_body
    %s14 = ssub.s32 %s9, 1
    %s15 = ssub.s32 %s9, 2
    %s16 = sadd.s32 %s9, 1
    %s17 = ssub.s32 %s9, %s16
    %p18 = scmp.eq.s32.totalorder %s17, 0
    %s20 = sadd.s32 %s19, 1
    %s21 = scalar_select %p18, %s19, %s20
    %p24 = pneg %p18
    %p25 = scmp.eq.s32.totalorder %s9, 1
    %p26 = por %p24, %p25
    %p27 = scmp.ne.s32.totalorder %s19, %s22
    %p28 = scmp.eq.s32.totalorder %s9, 0
    %p29 = por %p27, %p28
    %p30 = scmp.ne.s32.totalorder %s19, %s22
    %p31 = scmp.eq.s32.totalorder %s14, 1
    %p32 = por %p30, %p31
    %p33 = scmp.ne.s32.totalorder %s22, %s23
    %p34 = scmp.eq.s32.totalorder %s14, 0
    %p35 = por %p33, %p34
    %p36 = scmp.ne.s32.totalorder %s22, %s23
    %p37 = scmp.eq.s32.totalorder %s15, 1
    %p38 = por %p36, %p37
    %p40 = scmp.ne.s32.totalorder %s23, %s39
    %p41 = scmp.eq.s32.totalorder %s15, 0
    %p42 = por %p40, %p41
    %s44 = sadd.s32 %s43, 1
    %p47 = scmp.eq.s32.totalorder %s9, 1
    %p48 = scmp.ne.s32.totalorder %s43, %s45
    %p49 = scmp.eq.s32.totalorder %s9, 0
    %p50 = por %p48, %p49
    %p51 = scmp.ne.s32.totalorder %s43, %s45
    %p52 = scmp.eq.s32.totalorder %s14, 1
    %p53 = por %p51, %p52
    %p54 = scmp.ne.s32.totalorder %s45, %s46
    %p55 = scmp.eq.s32.totalorder %s14, 0
    %p56 = por %p54, %p55
    %p57 = scmp.ne.s32.totalorder %s45, %s46
    %p58 = scmp.eq.s32.totalorder %s15, 1
    %p59 = por %p57, %p58
    %p61 = scmp.ne.s32.totalorder %s46, %s60
    %p62 = scmp.eq.s32.totalorder %s15, 0
    %p63 = por %p61, %p62
    %s65 = sadd.s32 %s64, 1
    %p68 = scmp.eq.s32.totalorder %s9, 1
    %p69 = scmp.ne.s32.totalorder %s64, %s66
    %p70 = scmp.eq.s32.totalorder %s9, 0
    %p71 = por %p69, %p70
    %p72 = scmp.ne.s32.totalorder %s64, %s66
    %p73 = scmp.eq.s32.totalorder %s14, 1
    %p74 = por %p72, %p73
    %p75 = scmp.ne.s32.totalorder %s66, %s67
    %p76 = scmp.eq.s32.totalorder %s14, 0
    %p77 = por %p75, %p76
    %p78 = scmp.ne.s32.totalorder %s66, %s67
    %p79 = scmp.eq.s32.totalorder %s15, 1
    %p80 = por %p78, %p79
    %p82 = scmp.ne.s32.totalorder %s67, %s81
    %p83 = scmp.eq.s32.totalorder %s15, 0
    %p84 = por %p82, %p83
    %s85 = ssub.s32 %s9, %s16
    %p86 = scmp.eq.s32.totalorder %s85, 0
    %s88 = sadd.s32 %s87, 1
    %s89 = scalar_select %p86, %s87, %s88
    %p92 = pneg %p86
    %p93 = scmp.eq.s32.totalorder %s9, 1
    %p94 = por %p92, %p93
    %p95 = scmp.ne.s32.totalorder %s87, %s90
    %p96 = scmp.eq.s32.totalorder %s9, 0
    %p97 = por %p95, %p96
    %p98 = scmp.ne.s32.totalorder %s87, %s90
    %p99 = scmp.eq.s32.totalorder %s14, 1
    %p100 = por %p98, %p99
    %p101 = scmp.ne.s32.totalorder %s90, %s91
    %p102 = scmp.eq.s32.totalorder %s14, 0
    %p103 = por %p101, %p102
    %p104 = scmp.ne.s32.totalorder %s90, %s91
    %p105 = scmp.eq.s32.totalorder %s15, 1
    %p106 = por %p104, %p105
    %p108 = scmp.ne.s32.totalorder %s91, %s107
    %p109 = scmp.eq.s32.totalorder %s15, 0
    %p110 = por %p108, %p109
    %p111 = scmp.le.s32.totalorder 1, %s9
    %p112 = scmp.lt.s32.totalorder %s9, 3
    %p113 = pnand %p111, %p112
    %p114 = pneg %p113
    // Predicated region
    $region9: #{encoder_forward.6} parent=5 // pred_check
      _
    $region10: #{encoder_forward.6} parent=5 // pred_check_branch
      %116 = sbr.rel (%p113) target = $region12
    $region11: #{encoder_forward.6} parent=5 // pred_region
      %s117 = ssub.s32 %s9, 1
      // Predicated region
      $region13: #{encoder_forward.6} parent=11 // pred_check
        %p118 = pneg %p56
      $region14: #{encoder_forward.6} parent=11 // pred_check_branch
        %120 = sbr.rel (%p118) target = $region16
      $region15: #{encoder_forward.6} parent=11 // pred_region
        _
      $region16: #{encoder_forward.6} parent=11 // pred_fallthru
        _
      // Predicated region
      $region17: #{encoder_forward.6} parent=11 // pred_check
        %p121 = pneg %p77
      $region18: #{encoder_forward.6} parent=11 // pred_check_branch
        %123 = sbr.rel (%p121) target = $region20
      $region19: #{encoder_forward.6} parent=11 // pred_region
        _
      $region20: #{encoder_forward.6} parent=11 // pred_fallthru
        _
    $region12: #{encoder_forward.6} parent=5 // pred_fallthru
      _
    %p124 = scmp.lt.s32.totalorder %s9, 2
    // Predicated region
    $region21: #{encoder_forward.6} parent=5 // pred_check
      %p125 = pneg %p124
    $region22: #{encoder_forward.6} parent=5 // pred_check_branch
      %127 = sbr.rel (%p125) target = $region24
    $region23: #{encoder_forward.6} parent=5 // pred_region
      // Predicated region
      $region25: #{encoder_forward.6} parent=23 // pred_check
        %p128 = pneg %p29
      $region26: #{encoder_forward.6} parent=23 // pred_check_branch
        %130 = sbr.rel (%p128) target = $region28
      $region27: #{encoder_forward.6} parent=23 // pred_region
        %s131 = smul.u32 8, %s9
        %p132 = scmp.lt.s32.totalorder %s131, 15
        %s133 = scalar_select %p132, %s131, 15
        %s134 = smul.addr %s133, 2
        %s135 = smul.addr %s134, 8
        %s136 = scalar_lea.vmem %s0, %s135
        %s137 = smul.u32 8, %s9
      $region28: #{encoder_forward.6} parent=23 // pred_fallthru
        _
    $region24: #{encoder_forward.6} parent=5 // pred_fallthru
      _
    %p138 = scmp.le.s32.totalorder 1, %s9
    %p139 = scmp.lt.s32.totalorder %s9, 3
    %p140 = pnand %p138, %p139
    %p141 = pneg %p140
    // Predicated region
    $region29: #{encoder_forward.6} parent=5 // pred_check
      _
    $region30: #{encoder_forward.6} parent=5 // pred_check_branch
      %143 = sbr.rel (%p140) target = $region32
    $region31: #{encoder_forward.6} parent=5 // pred_region
      %s144 = ssub.s32 %s9, 1
      %s145 = smul.u32 8, %s14
      %p146 = scmp.lt.s32.totalorder %s145, 15
      %s147 = scalar_select %p146, %s145, 15
      %s148 = smul.addr %s147, 2
      %s149 = smul.addr %s148, 8
      %s150 = scalar_lea.vmem %s0, %s149
      %p151 = pneg %p35
      %p152 = pneg %p32
      %p153 = pneg %p56
      %p154 = pneg %p53
      %p155 = pneg %p77
      %p156 = pneg %p74
      %p157 = pneg %p103
      %p158 = pneg %p100
      %s159 = smul.u32 8, %s14
      %p160 = scmp.lt.s32.totalorder %s159, 15
      %s161 = scalar_select %p160, %s159, 15
      %s162 = smul.addr %s161, 2
      %s163 = smul.addr %s162, 8
      %s164 = scalar_lea.vmem %s3, %s163
      %s165 = smul.u32 8, %s14
      %p166 = scmp.lt.s32.totalorder %s165, 15
      %s167 = scalar_select %p166, %s165, 15
      %s168 = smul.addr %s167, 2
      %s169 = smul.addr %s168, 8
      %s170 = scalar_lea.vmem %s0, %s169
      %s171 = smul.u32 8, %s14
      %s172 = smul.u32 8, %s14
      %p173 = scmp.lt.s32.totalorder %s172, 15
      %s174 = scalar_select %p173, %s172, 15
      %s175 = smul.addr %s174, 2
      %s176 = smul.addr %s175, 8
      %s177 = scalar_lea.vmem %s3, %s176
      %s178 = smul.u32 8, %s14
      %v179 = vld [vmem:[%s170] sm:$0xff]
      %v180 = vld [vmem:[%s170 + $0x8] sm:$0xff]
      %v181 = vld [vmem:[%s170 + $0x10] sm:$0xff]
      %v182 = vld [vmem:[%s170 + $0x18] sm:$0xff]
      %v183 = vld [vmem:[%s170 + $0x20] sm:$0xff]
      %v184 = vld [vmem:[%s170 + $0x28] sm:$0xff]
      %v185 = vld [vmem:[%s170 + $0x30] sm:$0xff]
      %v186 = vld [vmem:[%s170 + $0x38] sm:$0xff]
      %v187 = vld [vmem:[%s170 + $0x40] sm:$0xff]
      %v188 = vld [vmem:[%s170 + $0x48] sm:$0xff]
      %v189 = vld [vmem:[%s170 + $0x50] sm:$0xff]
      %v190 = vld [vmem:[%s170 + $0x58] sm:$0xff]
      %v191 = vld [vmem:[%s170 + $0x60] sm:$0xff]
      %v192 = vld [vmem:[%s170 + $0x68] sm:$0xff]
      %v193 = vld [vmem:[%s170 + $0x70] sm:$0xff]
      %v194 = vld [vmem:[%s170 + $0x78] sm:$0xff]
      %v195 = vlaneseq
      %v196 = vshrl.u32 %v195, 7
      %v197 = vadd.s32 %v196, 8
      %v198 = vadd.s32 %v196, 16
      %v199 = vadd.s32 %v196, 24
      %v200 = vadd.s32 %v196, 32
      %v201 = vadd.s32 %v196, 40
      %v202 = vadd.s32 %v196, 48
      %v203 = vadd.s32 %v196, 56
      %v204 = vadd.s32 %v196, 64
      %v205 = vadd.s32 %v196, 72
      %v206 = vadd.s32 %v196, 80
      %v207 = vadd.s32 %v196, 88
      %v208 = vadd.s32 %v196, 96
      %v209 = vadd.s32 %v196, 104
      %v210 = vadd.s32 %v196, 112
      %v211 = vadd.s32 %v196, 120
      %vm212 = vcmp.lt.s32.totalorder %v196, 0
      %v213 = vsub.s32 0, %v196
      %v214 = vsel %vm212, %v213, %v196
      %v215 = vshrl.u32 %v214, 4
      %v216 = vand.u32 %v214, 15
      %v217 = vsub.s32 0, %v216
      %v218 = vsel %vm212, %v217, %v216
      %vm219 = vcmp.lt.s32.totalorder %v197, 0
      %v220 = vsub.s32 0, %v197
      %v221 = vsel %vm219, %v220, %v197
      %v222 = vshrl.u32 %v221, 4
      %v223 = vand.u32 %v221, 15
      %v224 = vsub.s32 0, %v223
      %v225 = vsel %vm219, %v224, %v223
      %vm226 = vcmp.lt.s32.totalorder %v198, 0
      %v227 = vsub.s32 0, %v198
      %v228 = vsel %vm226, %v227, %v198
      %v229 = vshrl.u32 %v228, 4
      %v230 = vand.u32 %v228, 15
      %v231 = vsub.s32 0, %v230
      %v232 = vsel %vm226, %v231, %v230
      %vm233 = vcmp.lt.s32.totalorder %v199, 0
      %v234 = vsub.s32 0, %v199
      %v235 = vsel %vm233, %v234, %v199
      %v236 = vshrl.u32 %v235, 4
      %v237 = vand.u32 %v235, 15
      %v238 = vsub.s32 0, %v237
      %v239 = vsel %vm233, %v238, %v237
      %vm240 = vcmp.lt.s32.totalorder %v200, 0
      %v241 = vsub.s32 0, %v200
      %v242 = vsel %vm240, %v241, %v200
      %v243 = vshrl.u32 %v242, 4
      %v244 = vand.u32 %v242, 15
      %v245 = vsub.s32 0, %v244
      %v246 = vsel %vm240, %v245, %v244
      %vm247 = vcmp.lt.s32.totalorder %v201, 0
      %v248 = vsub.s32 0, %v201
      %v249 = vsel %vm247, %v248, %v201
      %v250 = vshrl.u32 %v249, 4
      %v251 = vand.u32 %v249, 15
      %v252 = vsub.s32 0, %v251
      %v253 = vsel %vm247, %v252, %v251
      %vm254 = vcmp.lt.s32.totalorder %v202, 0
      %v255 = vsub.s32 0, %v202
      %v256 = vsel %vm254, %v255, %v202
      %v257 = vshrl.u32 %v256, 4
      %v258 = vand.u32 %v256, 15
      %v259 = vsub.s32 0, %v258
      %v260 = vsel %vm254, %v259, %v258
      %vm261 = vcmp.lt.s32.totalorder %v203, 0
      %v262 = vsub.s32 0, %v203
      %v263 = vsel %vm261, %v262, %v203
      %v264 = vshrl.u32 %v263, 4
      %v265 = vand.u32 %v263, 15
      %v266 = vsub.s32 0, %v265
      %v267 = vsel %vm261, %v266, %v265
      %vm268 = vcmp.lt.s32.totalorder %v204, 0
      %v269 = vsub.s32 0, %v204
      %v270 = vsel %vm268, %v269, %v204
      %v271 = vshrl.u32 %v270, 4
      %v272 = vand.u32 %v270, 15
      %v273 = vsub.s32 0, %v272
      %v274 = vsel %vm268, %v273, %v272
      %vm275 = vcmp.lt.s32.totalorder %v205, 0
      %v276 = vsub.s32 0, %v205
      %v277 = vsel %vm275, %v276, %v205
      %v278 = vshrl.u32 %v277, 4
      %v279 = vand.u32 %v277, 15
      %v280 = vsub.s32 0, %v279
      %v281 = vsel %vm275, %v280, %v279
      %vm282 = vcmp.lt.s32.totalorder %v206, 0
      %v283 = vsub.s32 0, %v206
      %v284 = vsel %vm282, %v283, %v206
      %v285 = vshrl.u32 %v284, 4
      %v286 = vand.u32 %v284, 15
      %v287 = vsub.s32 0, %v286
      %v288 = vsel %vm282, %v287, %v286
      %vm289 = vcmp.lt.s32.totalorder %v207, 0
      %v290 = vsub.s32 0, %v207
      %v291 = vsel %vm289, %v290, %v207
      %v292 = vshrl.u32 %v291, 4
      %v293 = vand.u32 %v291, 15
      %v294 = vsub.s32 0, %v293
      %v295 = vsel %vm289, %v294, %v293
      %vm296 = vcmp.lt.s32.totalorder %v208, 0
      %v297 = vsub.s32 0, %v208
      %v298 = vsel %vm296, %v297, %v208
      %v299 = vshrl.u32 %v298, 4
      %v300 = vand.u32 %v298, 15
      %v301 = vsub.s32 0, %v300
      %v302 = vsel %vm296, %v301, %v300
      %vm303 = vcmp.lt.s32.totalorder %v209, 0
      %v304 = vsub.s32 0, %v209
      %v305 = vsel %vm303, %v304, %v209
      %v306 = vshrl.u32 %v305, 4
      %v307 = vand.u32 %v305, 15
      %v308 = vsub.s32 0, %v307
      %v309 = vsel %vm303, %v308, %v307
      %vm310 = vcmp.lt.s32.totalorder %v210, 0
      %v311 = vsub.s32 0, %v210
      %v312 = vsel %vm310, %v311, %v210
      %v313 = vshrl.u32 %v312, 4
      %v314 = vand.u32 %v312, 15
      %v315 = vsub.s32 0, %v314
      %v316 = vsel %vm310, %v315, %v314
      %vm317 = vcmp.lt.s32.totalorder %v211, 0
      %v318 = vsub.s32 0, %v211
      %v319 = vsel %vm317, %v318, %v211
      %v320 = vshrl.u32 %v319, 4
      %v321 = vand.u32 %v319, 15
      %v322 = vsub.s32 0, %v321
      %v323 = vsel %vm317, %v322, %v321
      %vm324 = vcmp.ne.s32.totalorder %v218, 0
      %vm325 = vcmp.ne.s32.totalorder %v225, 0
      %vm326 = vcmp.ne.s32.totalorder %v232, 0
      %vm327 = vcmp.ne.s32.totalorder %v239, 0
      %vm328 = vcmp.ne.s32.totalorder %v246, 0
      %vm329 = vcmp.ne.s32.totalorder %v253, 0
      %vm330 = vcmp.ne.s32.totalorder %v260, 0
      %vm331 = vcmp.ne.s32.totalorder %v267, 0
      %vm332 = vcmp.ne.s32.totalorder %v274, 0
      %vm333 = vcmp.ne.s32.totalorder %v281, 0
      %vm334 = vcmp.ne.s32.totalorder %v288, 0
      %vm335 = vcmp.ne.s32.totalorder %v295, 0
      %vm336 = vcmp.ne.s32.totalorder %v302, 0
      %vm337 = vcmp.ne.s32.totalorder %v309, 0
      %vm338 = vcmp.ne.s32.totalorder %v316, 0
      %vm339 = vcmp.ne.s32.totalorder %v323, 0
      %vm340 = vcmp.lt.s32.totalorder %v218, 0
      %vm341 = vcmp.lt.s32.totalorder %v225, 0
      %vm342 = vcmp.lt.s32.totalorder %v232, 0
      %vm343 = vcmp.lt.s32.totalorder %v239, 0
      %vm344 = vcmp.lt.s32.totalorder %v246, 0
      %vm345 = vcmp.lt.s32.totalorder %v253, 0
      %vm346 = vcmp.lt.s32.totalorder %v260, 0
      %vm347 = vcmp.lt.s32.totalorder %v267, 0
      %vm348 = vcmp.lt.s32.totalorder %v274, 0
      %vm349 = vcmp.lt.s32.totalorder %v281, 0
      %vm350 = vcmp.lt.s32.totalorder %v288, 0
      %vm351 = vcmp.lt.s32.totalorder %v295, 0
      %vm352 = vcmp.lt.s32.totalorder %v302, 0
      %vm353 = vcmp.lt.s32.totalorder %v309, 0
      %vm354 = vcmp.lt.s32.totalorder %v316, 0
      %vm355 = vcmp.lt.s32.totalorder %v323, 0
      %vm356 = vmand %vm340, %vm324
      %vm357 = vmand %vm341, %vm325
      %vm358 = vmand %vm342, %vm326
      %vm359 = vmand %vm343, %vm327
      %vm360 = vmand %vm344, %vm328
      %vm361 = vmand %vm345, %vm329
      %vm362 = vmand %vm346, %vm330
      %vm363 = vmand %vm347, %vm331
      %vm364 = vmand %vm348, %vm332
      %vm365 = vmand %vm349, %vm333
      %vm366 = vmand %vm350, %vm334
      %vm367 = vmand %vm351, %vm335
      %vm368 = vmand %vm352, %vm336
      %vm369 = vmand %vm353, %vm337
      %vm370 = vmand %vm354, %vm338
      %vm371 = vmand %vm355, %vm339
      %v372 = vadd.s32 %v218, 16
      %v373 = vadd.s32 %v225, 16
      %v374 = vadd.s32 %v232, 16
      %v375 = vadd.s32 %v239, 16
      %v376 = vadd.s32 %v246, 16
      %v377 = vadd.s32 %v253, 16
      %v378 = vadd.s32 %v260, 16
      %v379 = vadd.s32 %v267, 16
      %v380 = vadd.s32 %v274, 16
      %v381 = vadd.s32 %v281, 16
      %v382 = vadd.s32 %v288, 16
      %v383 = vadd.s32 %v295, 16
      %v384 = vadd.s32 %v302, 16
      %v385 = vadd.s32 %v309, 16
      %v386 = vadd.s32 %v316, 16
      %v387 = vadd.s32 %v323, 16
      %v388 = vsel %vm356, %v372, %v218
      %v389 = vsel %vm357, %v373, %v225
      %v390 = vsel %vm358, %v374, %v232
      %v391 = vsel %vm359, %v375, %v239
      %v392 = vsel %vm360, %v376, %v246
      %v393 = vsel %vm361, %v377, %v253
      %v394 = vsel %vm362, %v378, %v260
      %v395 = vsel %vm363, %v379, %v267
      %v396 = vsel %vm364, %v380, %v274
      %v397 = vsel %vm365, %v381, %v281
      %v398 = vsel %vm366, %v382, %v288
      %v399 = vsel %vm367, %v383, %v295
      %v400 = vsel %vm368, %v384, %v302
      %v401 = vsel %vm369, %v385, %v309
      %v402 = vsel %vm370, %v386, %v316
      %v403 = vsel %vm371, %v387, %v323
      %v404 = vrot.slane %v179, 5
      %v405 = vrot.slane %v180, 5
      %v406 = vrot.slane %v181, 5
      %v407 = vrot.slane %v182, 5
      %v408 = vrot.slane %v183, 5
      %v409 = vrot.slane %v184, 5
      %v410 = vrot.slane %v185, 5
      %v411 = vrot.slane %v186, 5
      %v412 = vrot.slane %v187, 5
      %v413 = vrot.slane %v188, 5
      %v414 = vrot.slane %v189, 5
      %v415 = vrot.slane %v190, 5
      %v416 = vrot.slane %v191, 5
      %v417 = vrot.slane %v192, 5
      %v418 = vrot.slane %v193, 5
      %v419 = vrot.slane %v194, 5
      %vm420 = vcmp.lt.s32.totalorder %v196, 3
      %v421 = vsel %vm420, %v418, %v419
      %v422 = vsel %vm420, %v417, %v418
      %v423 = vsel %vm420, %v416, %v417
      %v424 = vsel %vm420, %v415, %v416
      %v425 = vsel %vm420, %v414, %v415
      %v426 = vsel %vm420, %v413, %v414
      %v427 = vsel %vm420, %v412, %v413
      %v428 = vsel %vm420, %v411, %v412
      %v429 = vsel %vm420, %v410, %v411
      %v430 = vsel %vm420, %v409, %v410
      %v431 = vsel %vm420, %v408, %v409
      %v432 = vsel %vm420, %v407, %v408
      %v433 = vsel %vm420, %v406, %v407
      %v434 = vsel %vm420, %v405, %v406
      %v435 = vsel %vm420, %v404, %v405
      %v436 = vsel %vm420, %v419, %v404
      %vm437 = vcmp.ge.s32.totalorder %v388, 3
      %vm438 = vcmp.ge.s32.totalorder %v389, 3
      %vm439 = vcmp.ge.s32.totalorder %v390, 3
      %vm440 = vcmp.ge.s32.totalorder %v391, 3
      %vm441 = vcmp.ge.s32.totalorder %v392, 3
      %vm442 = vcmp.ge.s32.totalorder %v393, 3
      %vm443 = vcmp.ge.s32.totalorder %v394, 3
      %vm444 = vcmp.ge.s32.totalorder %v395, 3
      %vm445 = vcmp.ge.s32.totalorder %v396, 3
      %vm446 = vcmp.ge.s32.totalorder %v397, 3
      %vm447 = vcmp.ge.s32.totalorder %v398, 3
      %vm448 = vcmp.ge.s32.totalorder %v399, 3
      %vm449 = vcmp.ge.s32.totalorder %v400, 3
      %vm450 = vcmp.ge.s32.totalorder %v401, 3
      %vm451 = vcmp.ge.s32.totalorder %v402, 3
      %vm452 = vcmp.ge.s32.totalorder %v403, 3
      %v453 = vsel %vm437, %v436, 0.0
      %v454 = vsel %vm438, %v435, 0.0
      %v455 = vsel %vm439, %v434, 0.0
      %v456 = vsel %vm440, %v433, 0.0
      %v457 = vsel %vm441, %v432, 0.0
      %v458 = vsel %vm442, %v431, 0.0
      %v459 = vsel %vm443, %v430, 0.0
      %v460 = vsel %vm444, %v429, 0.0
      %v461 = vsel %vm445, %v428, 0.0
      %v462 = vsel %vm446, %v427, 0.0
      %v463 = vsel %vm447, %v426, 0.0
      %v464 = vsel %vm448, %v425, 0.0
      %v465 = vsel %vm449, %v424, 0.0
      %v466 = vsel %vm450, %v423, 0.0
      %v467 = vsel %vm451, %v422, 0.0
      %v468 = vsel %vm452, %v421, 0.0
      %v469 = vrot.slane %v179, 3
      %v470 = vrot.slane %v180, 3
      %v471 = vrot.slane %v181, 3
      %v472 = vrot.slane %v182, 3
      %v473 = vrot.slane %v183, 3
      %v474 = vrot.slane %v184, 3
      %v475 = vrot.slane %v185, 3
      %v476 = vrot.slane %v186, 3
      %v477 = vrot.slane %v187, 3
      %v478 = vrot.slane %v188, 3
      %v479 = vrot.slane %v189, 3
      %v480 = vrot.slane %v190, 3
      %v481 = vrot.slane %v191, 3
      %v482 = vrot.slane %v192, 3
      %v483 = vrot.slane %v193, 3
      %v484 = vrot.slane %v194, 3
      %vm485 = vcmp.lt.s32.totalorder %v196, 5
      %v486 = vsel %vm485, %v483, %v484
      %v487 = vsel %vm485, %v482, %v483
      %v488 = vsel %vm485, %v481, %v482
      %v489 = vsel %vm485, %v480, %v481
      %v490 = vsel %vm485, %v479, %v480
      %v491 = vsel %vm485, %v478, %v479
      %v492 = vsel %vm485, %v477, %v478
      %v493 = vsel %vm485, %v476, %v477
      %v494 = vsel %vm485, %v475, %v476
      %v495 = vsel %vm485, %v474, %v475
      %v496 = vsel %vm485, %v473, %v474
      %v497 = vsel %vm485, %v472, %v473
      %v498 = vsel %vm485, %v471, %v472
      %v499 = vsel %vm485, %v470, %v471
      %v500 = vsel %vm485, %v469, %v470
      %v501 = vsel %vm485, %v484, %v469
      %vm502 = vcmp.lt.s32.totalorder %v388, 13
      %vm503 = vcmp.lt.s32.totalorder %v389, 13
      %vm504 = vcmp.lt.s32.totalorder %v390, 13
      %vm505 = vcmp.lt.s32.totalorder %v391, 13
      %vm506 = vcmp.lt.s32.totalorder %v392, 13
      %vm507 = vcmp.lt.s32.totalorder %v393, 13
      %vm508 = vcmp.lt.s32.totalorder %v394, 13
      %vm509 = vcmp.lt.s32.totalorder %v395, 13
      %vm510 = vcmp.lt.s32.totalorder %v396, 13
      %vm511 = vcmp.lt.s32.totalorder %v397, 13
      %vm512 = vcmp.lt.s32.totalorder %v398, 13
      %vm513 = vcmp.lt.s32.totalorder %v399, 13
      %vm514 = vcmp.lt.s32.totalorder %v400, 13
      %vm515 = vcmp.lt.s32.totalorder %v401, 13
      %vm516 = vcmp.lt.s32.totalorder %v402, 13
      %vm517 = vcmp.lt.s32.totalorder %v403, 13
      %v518 = vsel %vm502, %v500, 0.0
      %v519 = vsel %vm503, %v499, 0.0
      %v520 = vsel %vm504, %v498, 0.0
      %v521 = vsel %vm505, %v497, 0.0
      %v522 = vsel %vm506, %v496, 0.0
      %v523 = vsel %vm507, %v495, 0.0
      %v524 = vsel %vm508, %v494, 0.0
      %v525 = vsel %vm509, %v493, 0.0
      %v526 = vsel %vm510, %v492, 0.0
      %v527 = vsel %vm511, %v491, 0.0
      %v528 = vsel %vm512, %v490, 0.0
      %v529 = vsel %vm513, %v489, 0.0
      %v530 = vsel %vm514, %v488, 0.0
      %v531 = vsel %vm515, %v487, 0.0
      %v532 = vsel %vm516, %v486, 0.0
      %v533 = vsel %vm517, %v501, 0.0
      %v534 = vld [vmem:[%s1] sm:$0x1]
      %536 = vset.pattern.permute.xlu0 0
      %537 = vperm.xlu0 %536, %v453
      %v538 = vpop.permute.xlu0 %537
      %541 = vset.pattern.permute.xlu0 0
      %542 = vperm.xlu0 %541, %v454
      %v543 = vpop.permute.xlu0 %542
      %546 = vset.pattern.permute.xlu0 0
      %547 = vperm.xlu0 %546, %v455
      %v548 = vpop.permute.xlu0 %547
      %551 = vset.pattern.permute.xlu0 0
      %552 = vperm.xlu0 %551, %v456
      %v553 = vpop.permute.xlu0 %552
      %556 = vset.pattern.permute.xlu0 0
      %557 = vperm.xlu0 %556, %v457
      %v558 = vpop.permute.xlu0 %557
      %561 = vset.pattern.permute.xlu0 0
      %562 = vperm.xlu0 %561, %v458
      %v563 = vpop.permute.xlu0 %562
      %566 = vset.pattern.permute.xlu0 0
      %567 = vperm.xlu0 %566, %v459
      %v568 = vpop.permute.xlu0 %567
      %571 = vset.pattern.permute.xlu0 0
      %572 = vperm.xlu0 %571, %v460
      %v573 = vpop.permute.xlu0 %572
      %576 = vset.pattern.permute.xlu0 0
      %577 = vperm.xlu0 %576, %v461
      %v578 = vpop.permute.xlu0 %577
      %581 = vset.pattern.permute.xlu0 0
      %582 = vperm.xlu0 %581, %v462
      %v583 = vpop.permute.xlu0 %582
      %586 = vset.pattern.permute.xlu0 0
      %587 = vperm.xlu0 %586, %v463
      %v588 = vpop.permute.xlu0 %587
      %591 = vset.pattern.permute.xlu0 0
      %592 = vperm.xlu0 %591, %v464
      %v593 = vpop.permute.xlu0 %592
      %596 = vset.pattern.permute.xlu0 0
      %597 = vperm.xlu0 %596, %v465
      %v598 = vpop.permute.xlu0 %597
      %601 = vset.pattern.permute.xlu0 0
      %602 = vperm.xlu0 %601, %v466
      %v603 = vpop.permute.xlu0 %602
      %606 = vset.pattern.permute.xlu0 0
      %607 = vperm.xlu0 %606, %v467
      %v608 = vpop.permute.xlu0 %607
      %611 = vset.pattern.permute.xlu0 0
      %612 = vperm.xlu0 %611, %v468
      %v613 = vpop.permute.xlu0 %612
      %v615 = vlaneseq
      %v616 = vshrl.u32 %v615, 7
      %v617 = vsub.s32 0, %v616
      %v618 = vrot.slane %v534, %v617
      %v619 = vmul.f32 %v538, %v618
      %v620 = vmul.f32 %v543, %v618
      %v621 = vmul.f32 %v548, %v618
      %v622 = vmul.f32 %v553, %v618
      %v623 = vmul.f32 %v558, %v618
      %v624 = vmul.f32 %v563, %v618
      %v625 = vmul.f32 %v568, %v618
      %v626 = vmul.f32 %v573, %v618
      %v627 = vmul.f32 %v578, %v618
      %v628 = vmul.f32 %v583, %v618
      %v629 = vmul.f32 %v588, %v618
      %v630 = vmul.f32 %v593, %v618
      %v631 = vmul.f32 %v598, %v618
      %v632 = vmul.f32 %v603, %v618
      %v633 = vmul.f32 %v608, %v618
      %v634 = vmul.f32 %v613, %v618
      %v635 = vld [vmem:[%s1 + $0x1] sm:$0x1]
      %637 = vset.pattern.permute.xlu0 0
      %638 = vperm.xlu0 %637, %v179
      %v639 = vpop.permute.xlu0 %638
      %642 = vset.pattern.permute.xlu0 0
      %643 = vperm.xlu0 %642, %v180
      %v644 = vpop.permute.xlu0 %643
      %647 = vset.pattern.permute.xlu0 0
      %648 = vperm.xlu0 %647, %v181
      %v649 = vpop.permute.xlu0 %648
      %652 = vset.pattern.permute.xlu0 0
      %653 = vperm.xlu0 %652, %v182
      %v654 = vpop.permute.xlu0 %653
      %657 = vset.pattern.permute.xlu0 0
      %658 = vperm.xlu0 %657, %v183
      %v659 = vpop.permute.xlu0 %658
      %662 = vset.pattern.permute.xlu0 0
      %663 = vperm.xlu0 %662, %v184
      %v664 = vpop.permute.xlu0 %663
      %667 = vset.pattern.permute.xlu0 0
      %668 = vperm.xlu0 %667, %v185
      %v669 = vpop.permute.xlu0 %668
      %672 = vset.pattern.permute.xlu0 0
      %673 = vperm.xlu0 %672, %v186
      %v674 = vpop.permute.xlu0 %673
      %677 = vset.pattern.permute.xlu0 0
      %678 = vperm.xlu0 %677, %v187
      %v679 = vpop.permute.xlu0 %678
      %682 = vset.pattern.permute.xlu0 0
      %683 = vperm.xlu0 %682, %v188
      %v684 = vpop.permute.xlu0 %683
      %687 = vset.pattern.permute.xlu0 0
      %688 = vperm.xlu0 %687, %v189
      %v689 = vpop.permute.xlu0 %688
      %692 = vset.pattern.permute.xlu0 0
      %693 = vperm.xlu0 %692, %v190
      %v694 = vpop.permute.xlu0 %693
      %697 = vset.pattern.permute.xlu0 0
      %698 = vperm.xlu0 %697, %v191
      %v699 = vpop.permute.xlu0 %698
      %702 = vset.pattern.permute.xlu0 0
      %703 = vperm.xlu0 %702, %v192
      %v704 = vpop.permute.xlu0 %703
      %707 = vset.pattern.permute.xlu0 0
      %708 = vperm.xlu0 %707, %v193
      %v709 = vpop.permute.xlu0 %708
      %712 = vset.pattern.permute.xlu0 0
      %713 = vperm.xlu0 %712, %v194
      %v714 = vpop.permute.xlu0 %713
      %v716 = vlaneseq
      %v717 = vshrl.u32 %v716, 7
      %v718 = vsub.s32 0, %v717
      %v719 = vrot.slane %v635, %v718
      %v720 = vmul.f32 %v639, %v719
      %v721 = vmul.f32 %v644, %v719
      %v722 = vmul.f32 %v649, %v719
      %v723 = vmul.f32 %v654, %v719
      %v724 = vmul.f32 %v659, %v719
      %v725 = vmul.f32 %v664, %v719
      %v726 = vmul.f32 %v669, %v719
      %v727 = vmul.f32 %v674, %v719
      %v728 = vmul.f32 %v679, %v719
      %v729 = vmul.f32 %v684, %v719
      %v730 = vmul.f32 %v689, %v719
      %v731 = vmul.f32 %v694, %v719
      %v732 = vmul.f32 %v699, %v719
      %v733 = vmul.f32 %v704, %v719
      %v734 = vmul.f32 %v709, %v719
      %v735 = vmul.f32 %v714, %v719
      %v736 = vadd.f32 %v619, %v720
      %v737 = vadd.f32 %v620, %v721
      %v738 = vadd.f32 %v621, %v722
      %v739 = vadd.f32 %v622, %v723
      %v740 = vadd.f32 %v623, %v724
      %v741 = vadd.f32 %v624, %v725
      %v742 = vadd.f32 %v625, %v726
      %v743 = vadd.f32 %v626, %v727
      %v744 = vadd.f32 %v627, %v728
      %v745 = vadd.f32 %v628, %v729
      %v746 = vadd.f32 %v629, %v730
      %v747 = vadd.f32 %v630, %v731
      %v748 = vadd.f32 %v631, %v732
      %v749 = vadd.f32 %v632, %v733
      %v750 = vadd.f32 %v633, %v734
      %v751 = vadd.f32 %v634, %v735
      %v752 = vld [vmem:[%s1 + $0x2] sm:$0x1]
      %754 = vset.pattern.permute.xlu0 0
      %755 = vperm.xlu0 %754, %v518
      %v756 = vpop.permute.xlu0 %755
      %759 = vset.pattern.permute.xlu0 0
      %760 = vperm.xlu0 %759, %v519
      %v761 = vpop.permute.xlu0 %760
      %764 = vset.pattern.permute.xlu0 0
      %765 = vperm.xlu0 %764, %v520
      %v766 = vpop.permute.xlu0 %765
      %769 = vset.pattern.permute.xlu0 0
      %770 = vperm.xlu0 %769, %v521
      %v771 = vpop.permute.xlu0 %770
      %774 = vset.pattern.permute.xlu0 0
      %775 = vperm.xlu0 %774, %v522
      %v776 = vpop.permute.xlu0 %775
      %779 = vset.pattern.permute.xlu0 0
      %780 = vperm.xlu0 %779, %v523
      %v781 = vpop.permute.xlu0 %780
      %784 = vset.pattern.permute.xlu0 0
      %785 = vperm.xlu0 %784, %v524
      %v786 = vpop.permute.xlu0 %785
      %789 = vset.pattern.permute.xlu0 0
      %790 = vperm.xlu0 %789, %v525
      %v791 = vpop.permute.xlu0 %790
      %794 = vset.pattern.permute.xlu0 0
      %795 = vperm.xlu0 %794, %v526
      %v796 = vpop.permute.xlu0 %795
      %799 = vset.pattern.permute.xlu0 0
      %800 = vperm.xlu0 %799, %v527
      %v801 = vpop.permute.xlu0 %800
      %804 = vset.pattern.permute.xlu0 0
      %805 = vperm.xlu0 %804, %v528
      %v806 = vpop.permute.xlu0 %805
      %809 = vset.pattern.permute.xlu0 0
      %810 = vperm.xlu0 %809, %v529
      %v811 = vpop.permute.xlu0 %810
      %814 = vset.pattern.permute.xlu0 0
      %815 = vperm.xlu0 %814, %v530
      %v816 = vpop.permute.xlu0 %815
      %819 = vset.pattern.permute.xlu0 0
      %820 = vperm.xlu0 %819, %v531
      %v821 = vpop.permute.xlu0 %820
      %824 = vset.pattern.permute.xlu0 0
      %825 = vperm.xlu0 %824, %v532
      %v826 = vpop.permute.xlu0 %825
      %829 = vset.pattern.permute.xlu0 0
      %830 = vperm.xlu0 %829, %v533
      %v831 = vpop.permute.xlu0 %830
      %v833 = vlaneseq
      %v834 = vshrl.u32 %v833, 7
      %v835 = vsub.s32 0, %v834
      %v836 = vrot.slane %v752, %v835
      %v837 = vmul.f32 %v756, %v836
      %v838 = vmul.f32 %v761, %v836
      %v839 = vmul.f32 %v766, %v836
      %v840 = vmul.f32 %v771, %v836
      %v841 = vmul.f32 %v776, %v836
      %v842 = vmul.f32 %v781, %v836
      %v843 = vmul.f32 %v786, %v836
      %v844 = vmul.f32 %v791, %v836
      %v845 = vmul.f32 %v796, %v836
      %v846 = vmul.f32 %v801, %v836
      %v847 = vmul.f32 %v806, %v836
      %v848 = vmul.f32 %v811, %v836
      %v849 = vmul.f32 %v816, %v836
      %v850 = vmul.f32 %v821, %v836
      %v851 = vmul.f32 %v826, %v836
      %v852 = vmul.f32 %v831, %v836
      %v853 = vadd.f32 %v736, %v837
      %v854 = vadd.f32 %v737, %v838
      %v855 = vadd.f32 %v738, %v839
      %v856 = vadd.f32 %v739, %v840
      %v857 = vadd.f32 %v740, %v841
      %v858 = vadd.f32 %v741, %v842
      %v859 = vadd.f32 %v742, %v843
      %v860 = vadd.f32 %v743, %v844
      %v861 = vadd.f32 %v744, %v845
      %v862 = vadd.f32 %v745, %v846
      %v863 = vadd.f32 %v746, %v847
      %v864 = vadd.f32 %v747, %v848
      %v865 = vadd.f32 %v748, %v849
      %v866 = vadd.f32 %v749, %v850
      %v867 = vadd.f32 %v750, %v851
      %v868 = vadd.f32 %v751, %v852
      %v869 = vld [vmem:[%s2] sm:$0x1]
      %v871 = vlaneseq
      %v872 = vshrl.u32 %v871, 7
      %v873 = vsub.s32 0, %v872
      %v874 = vrot.slane %v869, %v873
      %v876 = vadd.f32 %v853, %v874
      %v877 = vadd.f32 %v854, %v874
      %v878 = vadd.f32 %v855, %v874
      %v879 = vadd.f32 %v856, %v874
      %v880 = vadd.f32 %v857, %v874
      %v881 = vadd.f32 %v858, %v874
      %v882 = vadd.f32 %v859, %v874
      %v883 = vadd.f32 %v860, %v874
      %v884 = vadd.f32 %v861, %v874
      %v885 = vadd.f32 %v862, %v874
      %v886 = vadd.f32 %v863, %v874
      %v887 = vadd.f32 %v864, %v874
      %v888 = vadd.f32 %v865, %v874
      %v889 = vadd.f32 %v866, %v874
      %v890 = vadd.f32 %v867, %v874
      %v891 = vadd.f32 %v868, %v874
      %vm892 = vcmask 130048
      %893 = vst.msk [vmem:[%s177] sm:$0xff] %vm892, %v876
      %894 = vst.msk [vmem:[%s177 + $0x8] sm:$0xff] %vm892, %v877
      %895 = vst.msk [vmem:[%s177 + $0x10] sm:$0xff] %vm892, %v878
      %896 = vst.msk [vmem:[%s177 + $0x18] sm:$0xff] %vm892, %v879
      %897 = vst.msk [vmem:[%s177 + $0x20] sm:$0xff] %vm892, %v880
      %898 = vst.msk [vmem:[%s177 + $0x28] sm:$0xff] %vm892, %v881
      %899 = vst.msk [vmem:[%s177 + $0x30] sm:$0xff] %vm892, %v882
      %900 = vst.msk [vmem:[%s177 + $0x38] sm:$0xff] %vm892, %v883
      %901 = vst.msk [vmem:[%s177 + $0x40] sm:$0xff] %vm892, %v884
      %902 = vst.msk [vmem:[%s177 + $0x48] sm:$0xff] %vm892, %v885
      %903 = vst.msk [vmem:[%s177 + $0x50] sm:$0xff] %vm892, %v886
      %904 = vst.msk [vmem:[%s177 + $0x58] sm:$0xff] %vm892, %v887
      %905 = vst.msk [vmem:[%s177 + $0x60] sm:$0xff] %vm892, %v888
      %906 = vst.msk [vmem:[%s177 + $0x68] sm:$0xff] %vm892, %v889
      %907 = vst.msk [vmem:[%s177 + $0x70] sm:$0xff] %vm892, %v890
      %908 = vst.msk [vmem:[%s177 + $0x78] sm:$0xff] %vm892, %v891
      %s909 = smul.u32 8, %s14
      %p910 = scmp.lt.s32.totalorder %s909, 15
      %s911 = scalar_select %p910, %s909, 15
      %s912 = smul.addr %s911, 2
      %s913 = smul.addr %s912, 8
      %s914 = scalar_lea.vmem %s3, %s913
      // Predicated region
      $region33: #{encoder_forward.6} parent=31 // pred_check
        %p915 = pneg %p100
      $region34: #{encoder_forward.6} parent=31 // pred_check_branch
        %917 = sbr.rel (%p915) target = $region36
      $region35: #{encoder_forward.6} parent=31 // pred_region
        %s918 = smul.u32 8, %s14
      $region36: #{encoder_forward.6} parent=31 // pred_fallthru
        _
    $region32: #{encoder_forward.6} parent=5 // pred_fallthru
      _
    %p919 = scmp.le.s32.totalorder 2, %s9
    // Predicated region
    $region37: #{encoder_forward.6} parent=5 // pred_check
      %p920 = pneg %p919
    $region38: #{encoder_forward.6} parent=5 // pred_check_branch
      %922 = sbr.rel (%p920) target = $region40
    $region39: #{encoder_forward.6} parent=5 // pred_region
      %s923 = ssub.s32 %s9, 2
      // Predicated region
      $region41: #{encoder_forward.6} parent=39 // pred_check
        %p924 = pneg %p106
      $region42: #{encoder_forward.6} parent=39 // pred_check_branch
        %926 = sbr.rel (%p924) target = $region44
      $region43: #{encoder_forward.6} parent=39 // pred_region
        %s927 = smul.u32 8, %s15
        %p928 = scmp.lt.s32.totalorder %s927, 15
        %s929 = scalar_select %p928, %s927, 15
        %s930 = smul.addr %s929, 2
        %s931 = smul.addr %s930, 8
        %s932 = scalar_lea.vmem %s3, %s931
      $region44: #{encoder_forward.6} parent=39 // pred_fallthru
        _
    $region40: #{encoder_forward.6} parent=5 // pred_fallthru
      _
  $region6: #{encoder_forward.6} parent=0 // loop_footer
    %s13 = sadd.s32 1, %s9
  $region7: #{encoder_forward.6} parent=0 // loop_footer_branch
    %8 = sbr.rel target = $region3
  $region8: #{encoder_forward.6} parent=0 // loop_exit
    _

// kernel: encoder_forward.8
$region0: #{encoder_forward.8}
  #allocation0 [shape = 'u32[]', space=smem, size = 0x4, offset = 0x4, fixed_abs, tag = 'smem constant byte address 0x4 - core index']
  #allocation1 [shape = 'u32[144,128]{1,0:T(1,128)}', space=vmem, size = 0x12000, scoped, tag = 'internal scratch']
  %s0 = inlined_call_operand.vmem [shape: f32[16,16,16], index: 0, kind: input, shape index: {}]
  %s1 = inlined_call_operand.vmem [shape: f32[2,16], index: 1, kind: input, shape index: {}]
  %s2 = inlined_call_operand.vmem [shape: f32[1,16], index: 2, kind: input, shape index: {}]
  %s3 = inlined_call_operand.vmem [shape: f32[1,16], index: 3, kind: input, shape index: {}]
  %s4 = inlined_call_operand.vmem [shape: bf16[48,16], index: 4, kind: input, shape index: {}]
  %s5 = inlined_call_operand.vmem [shape: f32[1,16], index: 5, kind: input, shape index: {}]
  %s6 = inlined_call_operand.vmem [shape: bf16[48,16], index: 6, kind: input, shape index: {}]
  %s7 = inlined_call_operand.vmem [shape: f32[1,16], index: 7, kind: input, shape index: {}]
  %s8 = inlined_call_operand.vmem [shape: f32[16,16,16], index: 8, kind: output, shape index: {}]
  %s9 = sld [smem:[#allocation0]]
  $region65: #{encoder_forward.8} parent=0
    _
  %s11 = ssub.s32 1, %s9
  %s12 = scalar_select 0, %s11, %s9
  loop: start=0, step=1, limit=4
  $region2: #{encoder_forward.8} parent=0 // loop_pre_header
    _
  $region3: #{encoder_forward.8} parent=0 // loop_header
    %s14 = sphi 0, %s18
    %p15 = scmp.ge.s32.totalorder %s14, 4
    %s24 = sphi 0, %s26
    %s27 = sphi 0, %s24
    %s28 = sphi 0, %s27
    %s44 = sphi 0, %s28
    %s48 = sphi 0, %s48
    %s50 = sphi 0, %s48
    %s51 = sphi 0, %s50
    %s65 = sphi 0, %s51
    %s69 = sphi 0, %s69
    %s71 = sphi 0, %s69
    %s72 = sphi 0, %s71
    %s86 = sphi 0, %s72
    %s90 = sphi 0, %s90
    %s92 = sphi 0, %s90
    %s93 = sphi 0, %s92
    %s107 = sphi 0, %s93
    %s111 = sphi 0, %s111
    %s113 = sphi 0, %s111
    %s114 = sphi 0, %s113
    %s128 = sphi 0, %s114
    %s132 = sphi 0, %s132
    %s134 = sphi 0, %s132
    %s135 = sphi 0, %s134
    %s149 = sphi 0, %s135
    %s153 = sphi 0, %s153
    %s155 = sphi 0, %s153
    %s156 = sphi 0, %s155
    %s170 = sphi 0, %s156
    %s174 = sphi 0, %s174
    %s176 = sphi 0, %s174
    %s177 = sphi 0, %s176
    %s191 = sphi 0, %s177
    %s197 = sphi 0, %s199
    %s200 = sphi 0, %s197
    %s201 = sphi 0, %s200
    %s217 = sphi 0, %s201
  $region4: #{encoder_forward.8} parent=0 // loop_header_branch
    %17 = sbr.rel (%p15) target = $region8
  $region5: #{encoder_forward.8} parent=0 // loop_body
    %s19 = ssub.s32 %s14, 1
    %s20 = ssub.s32 %s14, 2
    %s21 = sadd.s32 %s14, 1
    %s22 = ssub.s32 %s14, %s21
    %p23 = scmp.eq.s32.totalorder %s22, 0
    %s25 = sadd.s32 %s24, 1
    %s26 = scalar_select %p23, %s24, %s25
    %p29 = pneg %p23
    %p30 = scmp.eq.s32.totalorder %s14, 1
    %p31 = por %p29, %p30
    %p32 = scmp.ne.s32.totalorder %s24, %s27
    %p33 = scmp.eq.s32.totalorder %s14, 0
    %p34 = por %p32, %p33
    %p35 = scmp.ne.s32.totalorder %s24, %s27
    %p36 = scmp.eq.s32.totalorder %s19, 1
    %p37 = por %p35, %p36
    %p38 = scmp.ne.s32.totalorder %s27, %s28
    %p39 = scmp.eq.s32.totalorder %s19, 0
    %p40 = por %p38, %p39
    %p41 = scmp.ne.s32.totalorder %s27, %s28
    %p42 = scmp.eq.s32.totalorder %s20, 1
    %p43 = por %p41, %p42
    %p45 = scmp.ne.s32.totalorder %s28, %s44
    %p46 = scmp.eq.s32.totalorder %s20, 0
    %p47 = por %p45, %p46
    %s49 = sadd.s32 %s48, 1
    %p52 = scmp.eq.s32.totalorder %s14, 1
    %p53 = scmp.ne.s32.totalorder %s48, %s50
    %p54 = scmp.eq.s32.totalorder %s14, 0
    %p55 = por %p53, %p54
    %p56 = scmp.ne.s32.totalorder %s48, %s50
    %p57 = scmp.eq.s32.totalorder %s19, 1
    %p58 = por %p56, %p57
    %p59 = scmp.ne.s32.totalorder %s50, %s51
    %p60 = scmp.eq.s32.totalorder %s19, 0
    %p61 = por %p59, %p60
    %p62 = scmp.ne.s32.totalorder %s50, %s51
    %p63 = scmp.eq.s32.totalorder %s20, 1
    %p64 = por %p62, %p63
    %p66 = scmp.ne.s32.totalorder %s51, %s65
    %p67 = scmp.eq.s32.totalorder %s20, 0
    %p68 = por %p66, %p67
    %s70 = sadd.s32 %s69, 1
    %p73 = scmp.eq.s32.totalorder %s14, 1
    %p74 = scmp.ne.s32.totalorder %s69, %s71
    %p75 = scmp.eq.s32.totalorder %s14, 0
    %p76 = por %p74, %p75
    %p77 = scmp.ne.s32.totalorder %s69, %s71
    %p78 = scmp.eq.s32.totalorder %s19, 1
    %p79 = por %p77, %p78
    %p80 = scmp.ne.s32.totalorder %s71, %s72
    %p81 = scmp.eq.s32.totalorder %s19, 0
    %p82 = por %p80, %p81
    %p83 = scmp.ne.s32.totalorder %s71, %s72
    %p84 = scmp.eq.s32.totalorder %s20, 1
    %p85 = por %p83, %p84
    %p87 = scmp.ne.s32.totalorder %s72, %s86
    %p88 = scmp.eq.s32.totalorder %s20, 0
    %p89 = por %p87, %p88
    %s91 = sadd.s32 %s90, 1
    %p94 = scmp.eq.s32.totalorder %s14, 1
    %p95 = scmp.ne.s32.totalorder %s90, %s92
    %p96 = scmp.eq.s32.totalorder %s14, 0
    %p97 = por %p95, %p96
    %p98 = scmp.ne.s32.totalorder %s90, %s92
    %p99 = scmp.eq.s32.totalorder %s19, 1
    %p100 = por %p98, %p99
    %p101 = scmp.ne.s32.totalorder %s92, %s93
    %p102 = scmp.eq.s32.totalorder %s19, 0
    %p103 = por %p101, %p102
    %p104 = scmp.ne.s32.totalorder %s92, %s93
    %p105 = scmp.eq.s32.totalorder %s20, 1
    %p106 = por %p104, %p105
    %p108 = scmp.ne.s32.totalorder %s93, %s107
    %p109 = scmp.eq.s32.totalorder %s20, 0
    %p110 = por %p108, %p109
    %s112 = sadd.s32 %s111, 1
    %p115 = scmp.eq.s32.totalorder %s14, 1
    %p116 = scmp.ne.s32.totalorder %s111, %s113
    %p117 = scmp.eq.s32.totalorder %s14, 0
    %p118 = por %p116, %p117
    %p119 = scmp.ne.s32.totalorder %s111, %s113
    %p120 = scmp.eq.s32.totalorder %s19, 1
    %p121 = por %p119, %p120
    %p122 = scmp.ne.s32.totalorder %s113, %s114
    %p123 = scmp.eq.s32.totalorder %s19, 0
    %p124 = por %p122, %p123
    %p125 = scmp.ne.s32.totalorder %s113, %s114
    %p126 = scmp.eq.s32.totalorder %s20, 1
    %p127 = por %p125, %p126
    %p129 = scmp.ne.s32.totalorder %s114, %s128
    %p130 = scmp.eq.s32.totalorder %s20, 0
    %p131 = por %p129, %p130
    %s133 = sadd.s32 %s132, 1
    %p136 = scmp.eq.s32.totalorder %s14, 1
    %p137 = scmp.ne.s32.totalorder %s132, %s134
    %p138 = scmp.eq.s32.totalorder %s14, 0
    %p139 = por %p137, %p138
    %p140 = scmp.ne.s32.totalorder %s132, %s134
    %p141 = scmp.eq.s32.totalorder %s19, 1
    %p142 = por %p140, %p141
    %p143 = scmp.ne.s32.totalorder %s134, %s135
    %p144 = scmp.eq.s32.totalorder %s19, 0
    %p145 = por %p143, %p144
    %p146 = scmp.ne.s32.totalorder %s134, %s135
    %p147 = scmp.eq.s32.totalorder %s20, 1
    %p148 = por %p146, %p147
    %p150 = scmp.ne.s32.totalorder %s135, %s149
    %p151 = scmp.eq.s32.totalorder %s20, 0
    %p152 = por %p150, %p151
    %s154 = sadd.s32 %s153, 1
    %p157 = scmp.eq.s32.totalorder %s14, 1
    %p158 = scmp.ne.s32.totalorder %s153, %s155
    %p159 = scmp.eq.s32.totalorder %s14, 0
    %p160 = por %p158, %p159
    %p161 = scmp.ne.s32.totalorder %s153, %s155
    %p162 = scmp.eq.s32.totalorder %s19, 1
    %p163 = por %p161, %p162
    %p164 = scmp.ne.s32.totalorder %s155, %s156
    %p165 = scmp.eq.s32.totalorder %s19, 0
    %p166 = por %p164, %p165
    %p167 = scmp.ne.s32.totalorder %s155, %s156
    %p168 = scmp.eq.s32.totalorder %s20, 1
    %p169 = por %p167, %p168
    %p171 = scmp.ne.s32.totalorder %s156, %s170
    %p172 = scmp.eq.s32.totalorder %s20, 0
    %p173 = por %p171, %p172
    %s175 = sadd.s32 %s174, 1
    %p178 = scmp.eq.s32.totalorder %s14, 1
    %p179 = scmp.ne.s32.totalorder %s174, %s176
    %p180 = scmp.eq.s32.totalorder %s14, 0
    %p181 = por %p179, %p180
    %p182 = scmp.ne.s32.totalorder %s174, %s176
    %p183 = scmp.eq.s32.totalorder %s19, 1
    %p184 = por %p182, %p183
    %p185 = scmp.ne.s32.totalorder %s176, %s177
    %p186 = scmp.eq.s32.totalorder %s19, 0
    %p187 = por %p185, %p186
    %p188 = scmp.ne.s32.totalorder %s176, %s177
    %p189 = scmp.eq.s32.totalorder %s20, 1
    %p190 = por %p188, %p189
    %p192 = scmp.ne.s32.totalorder %s177, %s191
    %p193 = scmp.eq.s32.totalorder %s20, 0
    %p194 = por %p192, %p193
    %s195 = ssub.s32 %s14, %s21
    %p196 = scmp.eq.s32.totalorder %s195, 0
    %s198 = sadd.s32 %s197, 1
    %s199 = scalar_select %p196, %s197, %s198
    %p202 = pneg %p196
    %p203 = scmp.eq.s32.totalorder %s14, 1
    %p204 = por %p202, %p203
    %p205 = scmp.ne.s32.totalorder %s197, %s200
    %p206 = scmp.eq.s32.totalorder %s14, 0
    %p207 = por %p205, %p206
    %p208 = scmp.ne.s32.totalorder %s197, %s200
    %p209 = scmp.eq.s32.totalorder %s19, 1
    %p210 = por %p208, %p209
    %p211 = scmp.ne.s32.totalorder %s200, %s201
    %p212 = scmp.eq.s32.totalorder %s19, 0
    %p213 = por %p211, %p212
    %p214 = scmp.ne.s32.totalorder %s200, %s201
    %p215 = scmp.eq.s32.totalorder %s20, 1
    %p216 = por %p214, %p215
    %p218 = scmp.ne.s32.totalorder %s201, %s217
    %p219 = scmp.eq.s32.totalorder %s20, 0
    %p220 = por %p218, %p219
    %p221 = scmp.le.s32.totalorder 1, %s14
    %p222 = scmp.lt.s32.totalorder %s14, 3
    %p223 = pnand %p221, %p222
    %p224 = pneg %p223
    // Predicated region
    $region9: #{encoder_forward.8} parent=5 // pred_check
      _
    $region10: #{encoder_forward.8} parent=5 // pred_check_branch
      %226 = sbr.rel (%p223) target = $region12
    $region11: #{encoder_forward.8} parent=5 // pred_region
      %s227 = ssub.s32 %s14, 1
      // Predicated region
      $region13: #{encoder_forward.8} parent=11 // pred_check
        %p228 = pneg %p61
      $region14: #{encoder_forward.8} parent=11 // pred_check_branch
        %230 = sbr.rel (%p228) target = $region16
      $region15: #{encoder_forward.8} parent=11 // pred_region
        _
      $region16: #{encoder_forward.8} parent=11 // pred_fallthru
        _
      // Predicated region
      $region17: #{encoder_forward.8} parent=11 // pred_check
        %p231 = pneg %p82
      $region18: #{encoder_forward.8} parent=11 // pred_check_branch
        %233 = sbr.rel (%p231) target = $region20
      $region19: #{encoder_forward.8} parent=11 // pred_region
        _
      $region20: #{encoder_forward.8} parent=11 // pred_fallthru
        _
      // Predicated region
      $region21: #{encoder_forward.8} parent=11 // pred_check
        %p234 = pneg %p103
      $region22: #{encoder_forward.8} parent=11 // pred_check_branch
        %236 = sbr.rel (%p234) target = $region24
      $region23: #{encoder_forward.8} parent=11 // pred_region
        _
      $region24: #{encoder_forward.8} parent=11 // pred_fallthru
        _
      // Predicated region
      $region25: #{encoder_forward.8} parent=11 // pred_check
        %p237 = pneg %p124
      $region26: #{encoder_forward.8} parent=11 // pred_check_branch
        %239 = sbr.rel (%p237) target = $region28
      $region27: #{encoder_forward.8} parent=11 // pred_region
        _
      $region28: #{encoder_forward.8} parent=11 // pred_fallthru
        _
      // Predicated region
      $region29: #{encoder_forward.8} parent=11 // pred_check
        %p240 = pneg %p145
      $region30: #{encoder_forward.8} parent=11 // pred_check_branch
        %242 = sbr.rel (%p240) target = $region32
      $region31: #{encoder_forward.8} parent=11 // pred_region
        _
      $region32: #{encoder_forward.8} parent=11 // pred_fallthru
        _
      // Predicated region
      $region33: #{encoder_forward.8} parent=11 // pred_check
        %p243 = pneg %p166
      $region34: #{encoder_forward.8} parent=11 // pred_check_branch
        %245 = sbr.rel (%p243) target = $region36
      $region35: #{encoder_forward.8} parent=11 // pred_region
        _
      $region36: #{encoder_forward.8} parent=11 // pred_fallthru
        _
      // Predicated region
      $region37: #{encoder_forward.8} parent=11 // pred_check
        %p246 = pneg %p187
      $region38: #{encoder_forward.8} parent=11 // pred_check_branch
        %248 = sbr.rel (%p246) target = $region40
      $region39: #{encoder_forward.8} parent=11 // pred_region
        _
      $region40: #{encoder_forward.8} parent=11 // pred_fallthru
        _
    $region12: #{encoder_forward.8} parent=5 // pred_fallthru
      _
    %p249 = scmp.lt.s32.totalorder %s14, 2
    // Predicated region
    $region41: #{encoder_forward.8} parent=5 // pred_check
      %p250 = pneg %p249
    $region42: #{encoder_forward.8} parent=5 // pred_check_branch
      %252 = sbr.rel (%p250) target = $region44
    $region43: #{encoder_forward.8} parent=5 // pred_region
      // Predicated region
      $region45: #{encoder_forward.8} parent=43 // pred_check
        %p253 = pneg %p34
      $region46: #{encoder_forward.8} parent=43 // pred_check_branch
        %255 = sbr.rel (%p253) target = $region48
      $region47: #{encoder_forward.8} parent=43 // pred_region
        %s256 = smul.u32 8, %s14
        %p257 = scmp.lt.s32.totalorder %s256, 15
        %s258 = scalar_select %p257, %s256, 15
        %s259 = smul.addr %s258, 2
        %s260 = smul.addr %s259, 8
        %s261 = scalar_lea.vmem %s0, %s260
        %s262 = smul.u32 8, %s14
      $region48: #{encoder_forward.8} parent=43 // pred_fallthru
        _
    $region44: #{encoder_forward.8} parent=5 // pred_fallthru
      _
    %p263 = scmp.le.s32.totalorder 1, %s14
    %p264 = scmp.lt.s32.totalorder %s14, 3
    %p265 = pnand %p263, %p264
    %p266 = pneg %p265
    // Predicated region
    $region49: #{encoder_forward.8} parent=5 // pred_check
      _
    $region50: #{encoder_forward.8} parent=5 // pred_check_branch
      %268 = sbr.rel (%p265) target = $region52
    $region51: #{encoder_forward.8} parent=5 // pred_region
      %s269 = ssub.s32 %s14, 1
      %s270 = smul.u32 8, %s19
      %p271 = scmp.lt.s32.totalorder %s270, 15
      %s272 = scalar_select %p271, %s270, 15
      %s273 = smul.addr %s272, 2
      %s274 = smul.addr %s273, 8
      %s275 = scalar_lea.vmem %s0, %s274
      %p276 = pneg %p40
      %p277 = pneg %p37
      %p278 = pneg %p61
      %p279 = pneg %p58
      %p280 = pneg %p82
      %p281 = pneg %p79
      %p282 = pneg %p103
      %p283 = pneg %p100
      %p284 = pneg %p124
      %p285 = pneg %p121
      %p286 = pneg %p145
      %p287 = pneg %p142
      %p288 = pneg %p166
      %p289 = pneg %p163
      %p290 = pneg %p187
      %p291 = pneg %p184
      %p292 = pneg %p213
      %p293 = pneg %p210
      %s294 = smul.u32 8, %s19
      %p295 = scmp.lt.s32.totalorder %s294, 15
      %s296 = scalar_select %p295, %s294, 15
      %s297 = smul.addr %s296, 2
      %s298 = smul.addr %s297, 8
      %s299 = scalar_lea.vmem %s8, %s298
      %s300 = smul.u32 8, %s19
      %p301 = scmp.lt.s32.totalorder %s300, 15
      %s302 = scalar_select %p301, %s300, 15
      %s303 = smul.addr %s302, 2
      %s304 = smul.addr %s303, 8
      %s305 = scalar_lea.vmem %s0, %s304
      %s306 = smul.u32 8, %s19
      %s307 = smul.u32 8, %s19
      %p308 = scmp.lt.s32.totalorder %s307, 15
      %s309 = scalar_select %p308, %s307, 15
      %s310 = smul.addr %s309, 2
      %s311 = smul.addr %s310, 8
      %s312 = scalar_lea.vmem %s8, %s311
      %s313 = smul.u32 8, %s19
      %v315 = vlaneseq
      %v316 = vshrl.u32 %v315, 7
      %v317 = vadd.s32 %v316, 8
      %v318 = vadd.s32 %v316, 16
      %v319 = vadd.s32 %v316, 24
      %v320 = vadd.s32 %v316, 32
      %v321 = vadd.s32 %v316, 40
      %v322 = vadd.s32 %v316, 48
      %v323 = vadd.s32 %v316, 56
      %v324 = vadd.s32 %v316, 64
      %v325 = vadd.s32 %v316, 72
      %v326 = vadd.s32 %v316, 80
      %v327 = vadd.s32 %v316, 88
      %v328 = vadd.s32 %v316, 96
      %v329 = vadd.s32 %v316, 104
      %v330 = vadd.s32 %v316, 112
      %v331 = vadd.s32 %v316, 120
      %vm332 = vcmp.lt.s32.totalorder %v316, 0
      %v333 = vsub.s32 0, %v316
      %v334 = vsel %vm332, %v333, %v316
      %v335 = vshrl.u32 %v334, 4
      %v336 = vand.u32 %v334, 15
      %v337 = vsub.s32 0, %v336
      %v338 = vsel %vm332, %v337, %v336
      %vm339 = vcmp.lt.s32.totalorder %v317, 0
      %v340 = vsub.s32 0, %v317
      %v341 = vsel %vm339, %v340, %v317
      %v342 = vshrl.u32 %v341, 4
      %v343 = vand.u32 %v341, 15
      %v344 = vsub.s32 0, %v343
      %v345 = vsel %vm339, %v344, %v343
      %vm346 = vcmp.lt.s32.totalorder %v318, 0
      %v347 = vsub.s32 0, %v318
      %v348 = vsel %vm346, %v347, %v318
      %v349 = vshrl.u32 %v348, 4
      %v350 = vand.u32 %v348, 15
      %v351 = vsub.s32 0, %v350
      %v352 = vsel %vm346, %v351, %v350
      %vm353 = vcmp.lt.s32.totalorder %v319, 0
      %v354 = vsub.s32 0, %v319
      %v355 = vsel %vm353, %v354, %v319
      %v356 = vshrl.u32 %v355, 4
      %v357 = vand.u32 %v355, 15
      %v358 = vsub.s32 0, %v357
      %v359 = vsel %vm353, %v358, %v357
      %vm360 = vcmp.lt.s32.totalorder %v320, 0
      %v361 = vsub.s32 0, %v320
      %v362 = vsel %vm360, %v361, %v320
      %v363 = vshrl.u32 %v362, 4
      %v364 = vand.u32 %v362, 15
      %v365 = vsub.s32 0, %v364
      %v366 = vsel %vm360, %v365, %v364
      %vm367 = vcmp.lt.s32.totalorder %v321, 0
      %v368 = vsub.s32 0, %v321
      %v369 = vsel %vm367, %v368, %v321
      %v370 = vshrl.u32 %v369, 4
      %v371 = vand.u32 %v369, 15
      %v372 = vsub.s32 0, %v371
      %v373 = vsel %vm367, %v372, %v371
      %vm374 = vcmp.lt.s32.totalorder %v322, 0
      %v375 = vsub.s32 0, %v322
      %v376 = vsel %vm374, %v375, %v322
      %v377 = vshrl.u32 %v376, 4
      %v378 = vand.u32 %v376, 15
      %v379 = vsub.s32 0, %v378
      %v380 = vsel %vm374, %v379, %v378
      %vm381 = vcmp.lt.s32.totalorder %v323, 0
      %v382 = vsub.s32 0, %v323
      %v383 = vsel %vm381, %v382, %v323
      %v384 = vshrl.u32 %v383, 4
      %v385 = vand.u32 %v383, 15
      %v386 = vsub.s32 0, %v385
      %v387 = vsel %vm381, %v386, %v385
      %vm388 = vcmp.lt.s32.totalorder %v324, 0
      %v389 = vsub.s32 0, %v324
      %v390 = vsel %vm388, %v389, %v324
      %v391 = vshrl.u32 %v390, 4
      %v392 = vand.u32 %v390, 15
      %v393 = vsub.s32 0, %v392
      %v394 = vsel %vm388, %v393, %v392
      %vm395 = vcmp.lt.s32.totalorder %v325, 0
      %v396 = vsub.s32 0, %v325
      %v397 = vsel %vm395, %v396, %v325
      %v398 = vshrl.u32 %v397, 4
      %v399 = vand.u32 %v397, 15
      %v400 = vsub.s32 0, %v399
      %v401 = vsel %vm395, %v400, %v399
      %vm402 = vcmp.lt.s32.totalorder %v326, 0
      %v403 = vsub.s32 0, %v326
      %v404 = vsel %vm402, %v403, %v326
      %v405 = vshrl.u32 %v404, 4
      %v406 = vand.u32 %v404, 15
      %v407 = vsub.s32 0, %v406
      %v408 = vsel %vm402, %v407, %v406
      %vm409 = vcmp.lt.s32.totalorder %v327, 0
      %v410 = vsub.s32 0, %v327
      %v411 = vsel %vm409, %v410, %v327
      %v412 = vshrl.u32 %v411, 4
      %v413 = vand.u32 %v411, 15
      %v414 = vsub.s32 0, %v413
      %v415 = vsel %vm409, %v414, %v413
      %vm416 = vcmp.lt.s32.totalorder %v328, 0
      %v417 = vsub.s32 0, %v328
      %v418 = vsel %vm416, %v417, %v328
      %v419 = vshrl.u32 %v418, 4
      %v420 = vand.u32 %v418, 15
      %v421 = vsub.s32 0, %v420
      %v422 = vsel %vm416, %v421, %v420
      %vm423 = vcmp.lt.s32.totalorder %v329, 0
      %v424 = vsub.s32 0, %v329
      %v425 = vsel %vm423, %v424, %v329
      %v426 = vshrl.u32 %v425, 4
      %v427 = vand.u32 %v425, 15
      %v428 = vsub.s32 0, %v427
      %v429 = vsel %vm423, %v428, %v427
      %vm430 = vcmp.lt.s32.totalorder %v330, 0
      %v431 = vsub.s32 0, %v330
      %v432 = vsel %vm430, %v431, %v330
      %v433 = vshrl.u32 %v432, 4
      %v434 = vand.u32 %v432, 15
      %v435 = vsub.s32 0, %v434
      %v436 = vsel %vm430, %v435, %v434
      %vm437 = vcmp.lt.s32.totalorder %v331, 0
      %v438 = vsub.s32 0, %v331
      %v439 = vsel %vm437, %v438, %v331
      %v440 = vshrl.u32 %v439, 4
      %v441 = vand.u32 %v439, 15
      %v442 = vsub.s32 0, %v441
      %v443 = vsel %vm437, %v442, %v441
      %vm444 = vcmp.ne.s32.totalorder %v338, 0
      %vm445 = vcmp.ne.s32.totalorder %v345, 0
      %vm446 = vcmp.ne.s32.totalorder %v352, 0
      %vm447 = vcmp.ne.s32.totalorder %v359, 0
      %vm448 = vcmp.ne.s32.totalorder %v366, 0
      %vm449 = vcmp.ne.s32.totalorder %v373, 0
      %vm450 = vcmp.ne.s32.totalorder %v380, 0
      %vm451 = vcmp.ne.s32.totalorder %v387, 0
      %vm452 = vcmp.ne.s32.totalorder %v394, 0
      %vm453 = vcmp.ne.s32.totalorder %v401, 0
      %vm454 = vcmp.ne.s32.totalorder %v408, 0
      %vm455 = vcmp.ne.s32.totalorder %v415, 0
      %vm456 = vcmp.ne.s32.totalorder %v422, 0
      %vm457 = vcmp.ne.s32.totalorder %v429, 0
      %vm458 = vcmp.ne.s32.totalorder %v436, 0
      %vm459 = vcmp.ne.s32.totalorder %v443, 0
      %vm460 = vcmp.lt.s32.totalorder %v338, 0
      %vm461 = vcmp.lt.s32.totalorder %v345, 0
      %vm462 = vcmp.lt.s32.totalorder %v352, 0
      %vm463 = vcmp.lt.s32.totalorder %v359, 0
      %vm464 = vcmp.lt.s32.totalorder %v366, 0
      %vm465 = vcmp.lt.s32.totalorder %v373, 0
      %vm466 = vcmp.lt.s32.totalorder %v380, 0
      %vm467 = vcmp.lt.s32.totalorder %v387, 0
      %vm468 = vcmp.lt.s32.totalorder %v394, 0
      %vm469 = vcmp.lt.s32.totalorder %v401, 0
      %vm470 = vcmp.lt.s32.totalorder %v408, 0
      %vm471 = vcmp.lt.s32.totalorder %v415, 0
      %vm472 = vcmp.lt.s32.totalorder %v422, 0
      %vm473 = vcmp.lt.s32.totalorder %v429, 0
      %vm474 = vcmp.lt.s32.totalorder %v436, 0
      %vm475 = vcmp.lt.s32.totalorder %v443, 0
      %vm476 = vmand %vm460, %vm444
      %vm477 = vmand %vm461, %vm445
      %vm478 = vmand %vm462, %vm446
      %vm479 = vmand %vm463, %vm447
      %vm480 = vmand %vm464, %vm448
      %vm481 = vmand %vm465, %vm449
      %vm482 = vmand %vm466, %vm450
      %vm483 = vmand %vm467, %vm451
      %vm484 = vmand %vm468, %vm452
      %vm485 = vmand %vm469, %vm453
      %vm486 = vmand %vm470, %vm454
      %vm487 = vmand %vm471, %vm455
      %vm488 = vmand %vm472, %vm456
      %vm489 = vmand %vm473, %vm457
      %vm490 = vmand %vm474, %vm458
      %vm491 = vmand %vm475, %vm459
      %v492 = vadd.s32 %v338, 16
      %v493 = vadd.s32 %v345, 16
      %v494 = vadd.s32 %v352, 16
      %v495 = vadd.s32 %v359, 16
      %v496 = vadd.s32 %v366, 16
      %v497 = vadd.s32 %v373, 16
      %v498 = vadd.s32 %v380, 16
      %v499 = vadd.s32 %v387, 16
      %v500 = vadd.s32 %v394, 16
      %v501 = vadd.s32 %v401, 16
      %v502 = vadd.s32 %v408, 16
      %v503 = vadd.s32 %v415, 16
      %v504 = vadd.s32 %v422, 16
      %v505 = vadd.s32 %v429, 16
      %v506 = vadd.s32 %v436, 16
      %v507 = vadd.s32 %v443, 16
      %v508 = vsel %vm476, %v492, %v338
      %v509 = vsel %vm477, %v493, %v345
      %v510 = vsel %vm478, %v494, %v352
      %v511 = vsel %vm479, %v495, %v359
      %v512 = vsel %vm480, %v496, %v366
      %v513 = vsel %vm481, %v497, %v373
      %v514 = vsel %vm482, %v498, %v380
      %v515 = vsel %vm483, %v499, %v387
      %v516 = vsel %vm484, %v500, %v394
      %v517 = vsel %vm485, %v501, %v401
      %v518 = vsel %vm486, %v502, %v408
      %v519 = vsel %vm487, %v503, %v415
      %v520 = vsel %vm488, %v504, %v422
      %v521 = vsel %vm489, %v505, %v429
      %v522 = vsel %vm490, %v506, %v436
      %v523 = vsel %vm491, %v507, %v443
      %v524 = vld [vmem:[%s1] sm:$0x1]
      %v525 = vmul.f32 %v524, 0.00390625
      %v526 = vld [vmem:[%s1 + $0x1] sm:$0x1]
      %v527 = vmul.f32 %v526, 0.00390625
      %v528 = vmul.f32 %v525, %v525
      %v529 = vsub.f32 %v527, %v528
      %v530 = vmax.f32 %v529, 0.0
      %v531 = vld [vmem:[%s2] sm:$0x1]
      %v532 = vadd.f32 %v530, 1e-05
      %v533 = vrsqrt.pop %v532
      %v534 = vmul.f32 %v531, %v533
      %v535 = vld [vmem:[%s3] sm:$0x1]
      %v536 = vmul.f32 %v525, %v534
      %v537 = vsub.f32 %v535, %v536
      %v538 = vld [vmem:[%s305] sm:$0xff]
      %v539 = vld [vmem:[%s305 + $0x8] sm:$0xff]
      %v540 = vld [vmem:[%s305 + $0x10] sm:$0xff]
      %v541 = vld [vmem:[%s305 + $0x18] sm:$0xff]
      %v542 = vld [vmem:[%s305 + $0x20] sm:$0xff]
      %v543 = vld [vmem:[%s305 + $0x28] sm:$0xff]
      %v544 = vld [vmem:[%s305 + $0x30] sm:$0xff]
      %v545 = vld [vmem:[%s305 + $0x38] sm:$0xff]
      %v546 = vld [vmem:[%s305 + $0x40] sm:$0xff]
      %v547 = vld [vmem:[%s305 + $0x48] sm:$0xff]
      %v548 = vld [vmem:[%s305 + $0x50] sm:$0xff]
      %v549 = vld [vmem:[%s305 + $0x58] sm:$0xff]
      %v550 = vld [vmem:[%s305 + $0x60] sm:$0xff]
      %v551 = vld [vmem:[%s305 + $0x68] sm:$0xff]
      %v552 = vld [vmem:[%s305 + $0x70] sm:$0xff]
      %v553 = vld [vmem:[%s305 + $0x78] sm:$0xff]
      %v555 = vlaneseq
      %v556 = vshrl.u32 %v555, 7
      %v557 = vsub.s32 0, %v556
      %v558 = vrot.slane %v534, %v557
      %v560 = vmul.f32 %v538, %v558
      %v561 = vmul.f32 %v539, %v558
      %v562 = vmul.f32 %v540, %v558
      %v563 = vmul.f32 %v541, %v558
      %v564 = vmul.f32 %v542, %v558
      %v565 = vmul.f32 %v543, %v558
      %v566 = vmul.f32 %v544, %v558
      %v567 = vmul.f32 %v545, %v558
      %v568 = vmul.f32 %v546, %v558
      %v569 = vmul.f32 %v547, %v558
      %v570 = vmul.f32 %v548, %v558
      %v571 = vmul.f32 %v549, %v558
      %v572 = vmul.f32 %v550, %v558
      %v573 = vmul.f32 %v551, %v558
      %v574 = vmul.f32 %v552, %v558
      %v575 = vmul.f32 %v553, %v558
      %v577 = vlaneseq
      %v578 = vshrl.u32 %v577, 7
      %v579 = vsub.s32 0, %v578
      %v580 = vrot.slane %v537, %v579
      %v582 = vadd.f32 %v560, %v580
      %v583 = vadd.f32 %v561, %v580
      %v584 = vadd.f32 %v562, %v580
      %v585 = vadd.f32 %v563, %v580
      %v586 = vadd.f32 %v564, %v580
      %v587 = vadd.f32 %v565, %v580
      %v588 = vadd.f32 %v566, %v580
      %v589 = vadd.f32 %v567, %v580
      %v590 = vadd.f32 %v568, %v580
      %v591 = vadd.f32 %v569, %v580
      %v592 = vadd.f32 %v570, %v580
      %v593 = vadd.f32 %v571, %v580
      %v594 = vadd.f32 %v572, %v580
      %v595 = vadd.f32 %v573, %v580
      %v596 = vadd.f32 %v574, %v580
      %v597 = vadd.f32 %v575, %v580
      %v598 = vld [vmem:[%s5] sm:$0x1]
      %v599 = vrot.slane %v582, 5
      %v600 = vrot.slane %v583, 5
      %v601 = vrot.slane %v584, 5
      %v602 = vrot.slane %v585, 5
      %v603 = vrot.slane %v586, 5
      %v604 = vrot.slane %v587, 5
      %v605 = vrot.slane %v588, 5
      %v606 = vrot.slane %v589, 5
      %v607 = vrot.slane %v590, 5
      %v608 = vrot.slane %v591, 5
      %v609 = vrot.slane %v592, 5
      %v610 = vrot.slane %v593, 5
      %v611 = vrot.slane %v594, 5
      %v612 = vrot.slane %v595, 5
      %v613 = vrot.slane %v596, 5
      %v614 = vrot.slane %v597, 5
      %vm615 = vcmp.lt.s32.totalorder %v316, 3
      %v616 = vsel %vm615, %v613, %v614
      %v617 = vsel %vm615, %v612, %v613
      %v618 = vsel %vm615, %v611, %v612
      %v619 = vsel %vm615, %v610, %v611
      %v620 = vsel %vm615, %v609, %v610
      %v621 = vsel %vm615, %v608, %v609
      %v622 = vsel %vm615, %v607, %v608
      %v623 = vsel %vm615, %v606, %v607
      %v624 = vsel %vm615, %v605, %v606
      %v625 = vsel %vm615, %v604, %v605
      %v626 = vsel %vm615, %v603, %v604
      %v627 = vsel %vm615, %v602, %v603
      %v628 = vsel %vm615, %v601, %v602
      %v629 = vsel %vm615, %v600, %v601
      %v630 = vsel %vm615, %v599, %v600
      %v631 = vsel %vm615, %v614, %v599
      %vm632 = vcmp.ge.s32.totalorder %v508, 3
      %vm633 = vcmp.ge.s32.totalorder %v509, 3
      %vm634 = vcmp.ge.s32.totalorder %v510, 3
      %vm635 = vcmp.ge.s32.totalorder %v511, 3
      %vm636 = vcmp.ge.s32.totalorder %v512, 3
      %vm637 = vcmp.ge.s32.totalorder %v513, 3
      %vm638 = vcmp.ge.s32.totalorder %v514, 3
      %vm639 = vcmp.ge.s32.totalorder %v515, 3
      %vm640 = vcmp.ge.s32.totalorder %v516, 3
      %vm641 = vcmp.ge.s32.totalorder %v517, 3
      %vm642 = vcmp.ge.s32.totalorder %v518, 3
      %vm643 = vcmp.ge.s32.totalorder %v519, 3
      %vm644 = vcmp.ge.s32.totalorder %v520, 3
      %vm645 = vcmp.ge.s32.totalorder %v521, 3
      %vm646 = vcmp.ge.s32.totalorder %v522, 3
      %vm647 = vcmp.ge.s32.totalorder %v523, 3
      %v648 = vsel %vm632, 1, 0
      %v649 = vsel %vm633, 1, 0
      %v650 = vsel %vm634, 1, 0
      %v651 = vsel %vm635, 1, 0
      %v652 = vsel %vm636, 1, 0
      %v653 = vsel %vm637, 1, 0
      %v654 = vsel %vm638, 1, 0
      %v655 = vsel %vm639, 1, 0
      %v656 = vsel %vm640, 1, 0
      %v657 = vsel %vm641, 1, 0
      %v658 = vsel %vm642, 1, 0
      %v659 = vsel %vm643, 1, 0
      %v660 = vsel %vm644, 1, 0
      %v661 = vsel %vm645, 1, 0
      %v662 = vsel %vm646, 1, 0
      %v663 = vsel %vm647, 1, 0
      %vm664 = vcmp.eq.s32.totalorder %v648, 1
      %vm665 = vcmp.eq.s32.totalorder %v649, 1
      %vm666 = vcmp.eq.s32.totalorder %v650, 1
      %vm667 = vcmp.eq.s32.totalorder %v651, 1
      %vm668 = vcmp.eq.s32.totalorder %v652, 1
      %vm669 = vcmp.eq.s32.totalorder %v653, 1
      %vm670 = vcmp.eq.s32.totalorder %v654, 1
      %vm671 = vcmp.eq.s32.totalorder %v655, 1
      %vm672 = vcmp.eq.s32.totalorder %v656, 1
      %vm673 = vcmp.eq.s32.totalorder %v657, 1
      %vm674 = vcmp.eq.s32.totalorder %v658, 1
      %vm675 = vcmp.eq.s32.totalorder %v659, 1
      %vm676 = vcmp.eq.s32.totalorder %v660, 1
      %vm677 = vcmp.eq.s32.totalorder %v661, 1
      %vm678 = vcmp.eq.s32.totalorder %v662, 1
      %vm679 = vcmp.eq.s32.totalorder %v663, 1
      %v680 = vsel %vm664, %v631, 0.0
      %v681 = vsel %vm665, %v630, 0.0
      %v682 = vsel %vm666, %v629, 0.0
      %v683 = vsel %vm667, %v628, 0.0
      %v684 = vsel %vm668, %v627, 0.0
      %v685 = vsel %vm669, %v626, 0.0
      %v686 = vsel %vm670, %v625, 0.0
      %v687 = vsel %vm671, %v624, 0.0
      %v688 = vsel %vm672, %v623, 0.0
      %v689 = vsel %vm673, %v622, 0.0
      %v690 = vsel %vm674, %v621, 0.0
      %v691 = vsel %vm675, %v620, 0.0
      %v692 = vsel %vm676, %v619, 0.0
      %v693 = vsel %vm677, %v618, 0.0
      %v694 = vsel %vm678, %v617, 0.0
      %v695 = vsel %vm679, %v616, 0.0
      %v696 = vrot.slane %v582, 3
      %v697 = vrot.slane %v583, 3
      %v698 = vrot.slane %v584, 3
      %v699 = vrot.slane %v585, 3
      %v700 = vrot.slane %v586, 3
      %v701 = vrot.slane %v587, 3
      %v702 = vrot.slane %v588, 3
      %v703 = vrot.slane %v589, 3
      %v704 = vrot.slane %v590, 3
      %v705 = vrot.slane %v591, 3
      %v706 = vrot.slane %v592, 3
      %v707 = vrot.slane %v593, 3
      %v708 = vrot.slane %v594, 3
      %v709 = vrot.slane %v595, 3
      %v710 = vrot.slane %v596, 3
      %v711 = vrot.slane %v597, 3
      %vm712 = vcmp.lt.s32.totalorder %v316, 5
      %v713 = vsel %vm712, %v710, %v711
      %v714 = vsel %vm712, %v709, %v710
      %v715 = vsel %vm712, %v708, %v709
      %v716 = vsel %vm712, %v707, %v708
      %v717 = vsel %vm712, %v706, %v707
      %v718 = vsel %vm712, %v705, %v706
      %v719 = vsel %vm712, %v704, %v705
      %v720 = vsel %vm712, %v703, %v704
      %v721 = vsel %vm712, %v702, %v703
      %v722 = vsel %vm712, %v701, %v702
      %v723 = vsel %vm712, %v700, %v701
      %v724 = vsel %vm712, %v699, %v700
      %v725 = vsel %vm712, %v698, %v699
      %v726 = vsel %vm712, %v697, %v698
      %v727 = vsel %vm712, %v696, %v697
      %v728 = vsel %vm712, %v711, %v696
      %vm729 = vcmp.lt.s32.totalorder %v508, 13
      %vm730 = vcmp.lt.s32.totalorder %v509, 13
      %vm731 = vcmp.lt.s32.totalorder %v510, 13
      %vm732 = vcmp.lt.s32.totalorder %v511, 13
      %vm733 = vcmp.lt.s32.totalorder %v512, 13
      %vm734 = vcmp.lt.s32.totalorder %v513, 13
      %vm735 = vcmp.lt.s32.totalorder %v514, 13
      %vm736 = vcmp.lt.s32.totalorder %v515, 13
      %vm737 = vcmp.lt.s32.totalorder %v516, 13
      %vm738 = vcmp.lt.s32.totalorder %v517, 13
      %vm739 = vcmp.lt.s32.totalorder %v518, 13
      %vm740 = vcmp.lt.s32.totalorder %v519, 13
      %vm741 = vcmp.lt.s32.totalorder %v520, 13
      %vm742 = vcmp.lt.s32.totalorder %v521, 13
      %vm743 = vcmp.lt.s32.totalorder %v522, 13
      %vm744 = vcmp.lt.s32.totalorder %v523, 13
      %v745 = vsel %vm729, 1, 0
      %v746 = vsel %vm730, 1, 0
      %v747 = vsel %vm731, 1, 0
      %v748 = vsel %vm732, 1, 0
      %v749 = vsel %vm733, 1, 0
      %v750 = vsel %vm734, 1, 0
      %v751 = vsel %vm735, 1, 0
      %v752 = vsel %vm736, 1, 0
      %v753 = vsel %vm737, 1, 0
      %v754 = vsel %vm738, 1, 0
      %v755 = vsel %vm739, 1, 0
      %v756 = vsel %vm740, 1, 0
      %v757 = vsel %vm741, 1, 0
      %v758 = vsel %vm742, 1, 0
      %v759 = vsel %vm743, 1, 0
      %v760 = vsel %vm744, 1, 0
      %vm761 = vcmp.eq.s32.totalorder %v745, 1
      %vm762 = vcmp.eq.s32.totalorder %v746, 1
      %vm763 = vcmp.eq.s32.totalorder %v747, 1
      %vm764 = vcmp.eq.s32.totalorder %v748, 1
      %vm765 = vcmp.eq.s32.totalorder %v749, 1
      %vm766 = vcmp.eq.s32.totalorder %v750, 1
      %vm767 = vcmp.eq.s32.totalorder %v751, 1
      %vm768 = vcmp.eq.s32.totalorder %v752, 1
      %vm769 = vcmp.eq.s32.totalorder %v753, 1
      %vm770 = vcmp.eq.s32.totalorder %v754, 1
      %vm771 = vcmp.eq.s32.totalorder %v755, 1
      %vm772 = vcmp.eq.s32.totalorder %v756, 1
      %vm773 = vcmp.eq.s32.totalorder %v757, 1
      %vm774 = vcmp.eq.s32.totalorder %v758, 1
      %vm775 = vcmp.eq.s32.totalorder %v759, 1
      %vm776 = vcmp.eq.s32.totalorder %v760, 1
      %v777 = vsel %vm761, %v727, 0.0
      %v778 = vsel %vm762, %v726, 0.0
      %v779 = vsel %vm763, %v725, 0.0
      %v780 = vsel %vm764, %v724, 0.0
      %v781 = vsel %vm765, %v723, 0.0
      %v782 = vsel %vm766, %v722, 0.0
      %v783 = vsel %vm767, %v721, 0.0
      %v784 = vsel %vm768, %v720, 0.0
      %v785 = vsel %vm769, %v719, 0.0
      %v786 = vsel %vm770, %v718, 0.0
      %v787 = vsel %vm771, %v717, 0.0
      %v788 = vsel %vm772, %v716, 0.0
      %v789 = vsel %vm773, %v715, 0.0
      %v790 = vsel %vm774, %v714, 0.0
      %v791 = vsel %vm775, %v713, 0.0
      %v792 = vsel %vm776, %v728, 0.0
      %809 = vrot.lane.b32.xlu0 %v582, 16
      %v810 = vpop.permute.xlu0 %809
      %811 = vrot.lane.b32.xlu0 %v583, 16
      %v812 = vpop.permute.xlu0 %811
      %813 = vrot.lane.b32.xlu0 %v584, 16
      %v814 = vpop.permute.xlu0 %813
      %815 = vrot.lane.b32.xlu0 %v585, 16
      %v816 = vpop.permute.xlu0 %815
      %817 = vrot.lane.b32.xlu0 %v586, 16
      %v818 = vpop.permute.xlu0 %817
      %819 = vrot.lane.b32.xlu0 %v587, 16
      %v820 = vpop.permute.xlu0 %819
      %821 = vrot.lane.b32.xlu0 %v588, 16
      %v822 = vpop.permute.xlu0 %821
      %823 = vrot.lane.b32.xlu0 %v589, 16
      %v824 = vpop.permute.xlu0 %823
      %825 = vrot.lane.b32.xlu0 %v590, 16
      %v826 = vpop.permute.xlu0 %825
      %827 = vrot.lane.b32.xlu0 %v591, 16
      %v828 = vpop.permute.xlu0 %827
      %829 = vrot.lane.b32.xlu0 %v592, 16
      %v830 = vpop.permute.xlu0 %829
      %831 = vrot.lane.b32.xlu0 %v593, 16
      %v832 = vpop.permute.xlu0 %831
      %833 = vrot.lane.b32.xlu0 %v594, 16
      %v834 = vpop.permute.xlu0 %833
      %835 = vrot.lane.b32.xlu0 %v595, 16
      %v836 = vpop.permute.xlu0 %835
      %837 = vrot.lane.b32.xlu0 %v596, 16
      %v838 = vpop.permute.xlu0 %837
      %839 = vrot.lane.b32.xlu0 %v597, 16
      %v840 = vpop.permute.xlu0 %839
      %873 = vrot.lane.b32.xlu0 %v777, 32
      %v874 = vpop.permute.xlu0 %873
      %875 = vrot.lane.b32.xlu0 %v778, 32
      %v876 = vpop.permute.xlu0 %875
      %877 = vrot.lane.b32.xlu0 %v779, 32
      %v878 = vpop.permute.xlu0 %877
      %879 = vrot.lane.b32.xlu0 %v780, 32
      %v880 = vpop.permute.xlu0 %879
      %881 = vrot.lane.b32.xlu0 %v781, 32
      %v882 = vpop.permute.xlu0 %881
      %883 = vrot.lane.b32.xlu0 %v782, 32
      %v884 = vpop.permute.xlu0 %883
      %885 = vrot.lane.b32.xlu0 %v783, 32
      %v886 = vpop.permute.xlu0 %885
      %887 = vrot.lane.b32.xlu0 %v784, 32
      %v888 = vpop.permute.xlu0 %887
      %889 = vrot.lane.b32.xlu0 %v785, 32
      %v890 = vpop.permute.xlu0 %889
      %891 = vrot.lane.b32.xlu0 %v786, 32
      %v892 = vpop.permute.xlu0 %891
      %893 = vrot.lane.b32.xlu0 %v787, 32
      %v894 = vpop.permute.xlu0 %893
      %895 = vrot.lane.b32.xlu0 %v788, 32
      %v896 = vpop.permute.xlu0 %895
      %897 = vrot.lane.b32.xlu0 %v789, 32
      %v898 = vpop.permute.xlu0 %897
      %899 = vrot.lane.b32.xlu0 %v790, 32
      %v900 = vpop.permute.xlu0 %899
      %901 = vrot.lane.b32.xlu0 %v791, 32
      %v902 = vpop.permute.xlu0 %901
      %903 = vrot.lane.b32.xlu0 %v792, 32
      %v904 = vpop.permute.xlu0 %903
      %vm921 = vcmask 130048
      %v922 = vsel %vm921, %v680, %v810
      %v923 = vsel %vm921, %v681, %v812
      %v924 = vsel %vm921, %v682, %v814
      %v925 = vsel %vm921, %v683, %v816
      %v926 = vsel %vm921, %v684, %v818
      %v927 = vsel %vm921, %v685, %v820
      %v928 = vsel %vm921, %v686, %v822
      %v929 = vsel %vm921, %v687, %v824
      %v930 = vsel %vm921, %v688, %v826
      %v931 = vsel %vm921, %v689, %v828
      %v932 = vsel %vm921, %v690, %v830
      %v933 = vsel %vm921, %v691, %v832
      %v934 = vsel %vm921, %v692, %v834
      %v935 = vsel %vm921, %v693, %v836
      %v936 = vsel %vm921, %v694, %v838
      %v937 = vsel %vm921, %v695, %v840
      %vm938 = vcmask 261120
      %v939 = vsel %vm938, %v922, %v874
      %v940 = vsel %vm938, %v923, %v876
      %v941 = vsel %vm938, %v924, %v878
      %v942 = vsel %vm938, %v925, %v880
      %v943 = vsel %vm938, %v926, %v882
      %v944 = vsel %vm938, %v927, %v884
      %v945 = vsel %vm938, %v928, %v886
      %v946 = vsel %vm938, %v929, %v888
      %v947 = vsel %vm938, %v930, %v890
      %v948 = vsel %vm938, %v931, %v892
      %v949 = vsel %vm938, %v932, %v894
      %v950 = vsel %vm938, %v933, %v896
      %v951 = vsel %vm938, %v934, %v898
      %v952 = vsel %vm938, %v935, %v900
      %v953 = vsel %vm938, %v936, %v902
      %v954 = vsel %vm938, %v937, %v904
      %v955 = vpack.c.bf16 %v940, %v939
      %v956 = vpack.c.bf16 %v942, %v941
      %v957 = vpack.c.bf16 %v944, %v943
      %v958 = vpack.c.bf16 %v946, %v945
      %v959 = vpack.c.bf16 %v948, %v947
      %v960 = vpack.c.bf16 %v950, %v949
      %v961 = vpack.c.bf16 %v952, %v951
      %v962 = vpack.c.bf16 %v954, %v953
      %v963 = vld [vmem:[%s4] sm:$0xf]
      %v964 = vld [vmem:[%s4 + $0x4] sm:$0xf]
      %v965 = vld [vmem:[%s4 + $0x8] sm:$0xf]
      %v966 = vld [vmem:[%s4 + $0xc] sm:$0xf]
      %v967 = vld [vmem:[%s4 + $0x10] sm:$0xf]
      %v968 = vld [vmem:[%s4 + $0x14] sm:$0xf]
      %v970 = vlaneseq
      %v971 = vshrl.u32 %v970, 7
      %v972 = vsub.s32 0, %v971
      %v973 = vrot.slane %v598, %v972
      %v981 = vunpack.c.l.b16 %v963
      %v982 = vunpack.c.l.b16 %v964
      %v983 = vunpack.c.l.b16 %v965
      %v984 = vunpack.c.l.b16 %v966
      %v985 = vunpack.c.l.b16 %v967
      %v986 = vunpack.c.l.b16 %v968
      %v987 = vpack.c.b16 %v982, %v981
      %v988 = vpack.c.b16 %v984, %v983
      %v989 = vpack.c.b16 %v986, %v985
      %vm993 = vcmask 392192
      %v995 = vsel %vm993, %v955, 0
      %v998 = vsel %vm993, %v956, 0
      %v1001 = vsel %vm993, %v957, 0
      %v1004 = vsel %vm993, %v958, 0
      %v1007 = vsel %vm993, %v959, 0
      %v1010 = vsel %vm993, %v960, 0
      %v1013 = vsel %vm993, %v961, 0
      %v1016 = vsel %vm993, %v962, 0
      %1018 = vmatprep.subr.bf16.mxu0 0
      %1019 = vmatpush1.bf16.msra.mxu0 %v987
      %1020 = vmatprep.subr.bf16.mxu0 0
      %1021 = vmatpush1.bf16.msra.mxu0 %v988
      %1022 = vmatprep.subr.bf16.mxu0 0
      %1023 = vmatpush1.bf16.msra.mxu0 %v989
      %1024 = vmatprep.subr.bf16.mxu0 0
      %1025 = vmatpush1.bf16.msra.mxu0 0
      %1026 = vmatprep.subr.bf16.mxu0 0
      %1027 = vmatpush1.bf16.msra.mxu0 0
      %1028 = vmatprep.subr.bf16.mxu0 0
      %1029 = vmatpush1.bf16.msra.mxu0 0
      %1030 = vmatprep.subr.bf16.mxu0 0
      %1031 = vmatpush1.bf16.msra.mxu0 0
      %1032 = vmatprep.subr.bf16.mxu0 0
      %1033 = vmatpush1.bf16.msra.mxu0 0
      %1034 = vmatprep.subr.bf16.mxu0 0
      %1035 = vmatpush1.bf16.msra.mxu0 0
      %1036 = vmatprep.subr.bf16.mxu0 0
      %1037 = vmatpush1.bf16.msra.mxu0 0
      %1038 = vmatprep.subr.bf16.mxu0 0
      %1039 = vmatpush1.bf16.msra.mxu0 0
      %1040 = vmatprep.subr.bf16.mxu0 0
      %1041 = vmatpush1.bf16.msra.mxu0 0
      %1042 = vmatprep.subr.bf16.mxu0 0
      %1043 = vmatpush1.bf16.msra.mxu0 0
      %1044 = vmatprep.subr.bf16.mxu0 0
      %1045 = vmatpush1.bf16.msra.mxu0 0
      %1046 = vmatprep.subr.bf16.mxu0 0
      %1047 = vmatpush1.bf16.msra.mxu0 0
      %1048 = vmatprep.subr.bf16.mxu0 0
      %1049 = vmatpush1.bf16.msra.mxu0 0
      %1050 = vmatprep.mubr.bf16.mxu0 0
      %1051 = vmatmul.mubr.bf16.gmra.mrb[0].mxu0 %v995
      %v1052 = vpop.f32.mrb[0].mxu0
      %v1053 = vadd.f32 %v973, %v1052
      %v1054 = vpop.f32.mrb[0].mxu0
      %v1055 = vpop.f32.mrb[0].mxu0
      %v1056 = vadd.f32 %v973, %v1055
      %v1057 = vpop.f32.mrb[0].mxu0
      %1058 = vmatprep.mubr.bf16.mxu0 0
      %1059 = vmatmul.mubr.bf16.gmra.mrb[0].mxu0 %v998
      %v1060 = vpop.f32.mrb[0].mxu0
      %v1061 = vadd.f32 %v973, %v1060
      %v1062 = vpop.f32.mrb[0].mxu0
      %v1063 = vpop.f32.mrb[0].mxu0
      %v1064 = vadd.f32 %v973, %v1063
      %v1065 = vpop.f32.mrb[0].mxu0
      %1066 = vmatprep.mubr.bf16.mxu0 0
      %1067 = vmatmul.mubr.bf16.gmra.mrb[0].mxu0 %v1001
      %v1068 = vpop.f32.mrb[0].mxu0
      %v1069 = vadd.f32 %v973, %v1068
      %v1070 = vpop.f32.mrb[0].mxu0
      %v1071 = vpop.f32.mrb[0].mxu0
      %v1072 = vadd.f32 %v973, %v1071
      %v1073 = vpop.f32.mrb[0].mxu0
      %1074 = vmatprep.mubr.bf16.mxu0 0
      %1075 = vmatmul.mubr.bf16.gmra.mrb[0].mxu0 %v1004
      %v1076 = vpop.f32.mrb[0].mxu0
      %v1077 = vadd.f32 %v973, %v1076
      %v1078 = vpop.f32.mrb[0].mxu0
      %v1079 = vpop.f32.mrb[0].mxu0
      %v1080 = vadd.f32 %v973, %v1079
      %v1081 = vpop.f32.mrb[0].mxu0
      %1082 = vmatprep.mubr.bf16.mxu0 0
      %1083 = vmatmul.mubr.bf16.gmra.mrb[0].mxu0 %v1007
      %v1084 = vpop.f32.mrb[0].mxu0
      %v1085 = vadd.f32 %v973, %v1084
      %v1086 = vpop.f32.mrb[0].mxu0
      %v1087 = vpop.f32.mrb[0].mxu0
      %v1088 = vadd.f32 %v973, %v1087
      %v1089 = vpop.f32.mrb[0].mxu0
      %1090 = vmatprep.mubr.bf16.mxu0 0
      %1091 = vmatmul.mubr.bf16.gmra.mrb[0].mxu0 %v1010
      %v1092 = vpop.f32.mrb[0].mxu0
      %v1093 = vadd.f32 %v973, %v1092
      %v1094 = vpop.f32.mrb[0].mxu0
      %v1095 = vpop.f32.mrb[0].mxu0
      %v1096 = vadd.f32 %v973, %v1095
      %v1097 = vpop.f32.mrb[0].mxu0
      %1098 = vmatprep.mubr.bf16.mxu0 0
      %1099 = vmatmul.mubr.bf16.gmra.mrb[0].mxu0 %v1013
      %v1100 = vpop.f32.mrb[0].mxu0
      %v1101 = vadd.f32 %v973, %v1100
      %v1102 = vpop.f32.mrb[0].mxu0
      %v1103 = vpop.f32.mrb[0].mxu0
      %v1104 = vadd.f32 %v973, %v1103
      %v1105 = vpop.f32.mrb[0].mxu0
      %1106 = vmatprep.mubr.bf16.mxu0 0
      %1107 = vmatmul.mubr.bf16.gmra.mrb[0].mxu0 %v1016
      %v1108 = vpop.f32.mrb[0].mxu0
      %v1109 = vadd.f32 %v973, %v1108
      %v1110 = vpop.f32.mrb[0].mxu0
      %v1111 = vpop.f32.mrb[0].mxu0
      %v1112 = vadd.f32 %v973, %v1111
      %v1113 = vpop.f32.mrb[0].mxu0
      %1114 = vdwg.mxu0
      %v1115 = vmax.f32 %v1053, 0.0
      %v1116 = vmax.f32 %v1056, 0.0
      %v1117 = vmax.f32 %v1061, 0.0
      %v1118 = vmax.f32 %v1064, 0.0
      %v1119 = vmax.f32 %v1069, 0.0
      %v1120 = vmax.f32 %v1072, 0.0
      %v1121 = vmax.f32 %v1077, 0.0
      %v1122 = vmax.f32 %v1080, 0.0
      %v1123 = vmax.f32 %v1085, 0.0
      %v1124 = vmax.f32 %v1088, 0.0
      %v1125 = vmax.f32 %v1093, 0.0
      %v1126 = vmax.f32 %v1096, 0.0
      %v1127 = vmax.f32 %v1101, 0.0
      %v1128 = vmax.f32 %v1104, 0.0
      %v1129 = vmax.f32 %v1109, 0.0
      %v1130 = vmax.f32 %v1112, 0.0
      %v1131 = vld [vmem:[%s7] sm:$0x1]
      %v1132 = vrot.slane %v1115, 5
      %v1133 = vrot.slane %v1116, 5
      %v1134 = vrot.slane %v1117, 5
      %v1135 = vrot.slane %v1118, 5
      %v1136 = vrot.slane %v1119, 5
      %v1137 = vrot.slane %v1120, 5
      %v1138 = vrot.slane %v1121, 5
      %v1139 = vrot.slane %v1122, 5
      %v1140 = vrot.slane %v1123, 5
      %v1141 = vrot.slane %v1124, 5
      %v1142 = vrot.slane %v1125, 5
      %v1143 = vrot.slane %v1126, 5
      %v1144 = vrot.slane %v1127, 5
      %v1145 = vrot.slane %v1128, 5
      %v1146 = vrot.slane %v1129, 5
      %v1147 = vrot.slane %v1130, 5
      %v1148 = vsel %vm615, %v1146, %v1147
      %v1149 = vsel %vm615, %v1145, %v1146
      %v1150 = vsel %vm615, %v1144, %v1145
      %v1151 = vsel %vm615, %v1143, %v1144
      %v1152 = vsel %vm615, %v1142, %v1143
      %v1153 = vsel %vm615, %v1141, %v1142
      %v1154 = vsel %vm615, %v1140, %v1141
      %v1155 = vsel %vm615, %v1139, %v1140
      %v1156 = vsel %vm615, %v1138, %v1139
      %v1157 = vsel %vm615, %v1137, %v1138
      %v1158 = vsel %vm615, %v1136, %v1137
      %v1159 = vsel %vm615, %v1135, %v1136
      %v1160 = vsel %vm615, %v1134, %v1135
      %v1161 = vsel %vm615, %v1133, %v1134
      %v1162 = vsel %vm615, %v1132, %v1133
      %v1163 = vsel %vm615, %v1147, %v1132
      %v1164 = vsel %vm664, %v1163, 0.0
      %v1165 = vsel %vm665, %v1162, 0.0
      %v1166 = vsel %vm666, %v1161, 0.0
      %v1167 = vsel %vm667, %v1160, 0.0
      %v1168 = vsel %vm668, %v1159, 0.0
      %v1169 = vsel %vm669, %v1158, 0.0
      %v1170 = vsel %vm670, %v1157, 0.0
      %v1171 = vsel %vm671, %v1156, 0.0
      %v1172 = vsel %vm672, %v1155, 0.0
      %v1173 = vsel %vm673, %v1154, 0.0
      %v1174 = vsel %vm674, %v1153, 0.0
      %v1175 = vsel %vm675, %v1152, 0.0
      %v1176 = vsel %vm676, %v1151, 0.0
      %v1177 = vsel %vm677, %v1150, 0.0
      %v1178 = vsel %vm678, %v1149, 0.0
      %v1179 = vsel %vm679, %v1148, 0.0
      %v1180 = vrot.slane %v1115, 3
      %v1181 = vrot.slane %v1116, 3
      %v1182 = vrot.slane %v1117, 3
      %v1183 = vrot.slane %v1118, 3
      %v1184 = vrot.slane %v1119, 3
      %v1185 = vrot.slane %v1120, 3
      %v1186 = vrot.slane %v1121, 3
      %v1187 = vrot.slane %v1122, 3
      %v1188 = vrot.slane %v1123, 3
      %v1189 = vrot.slane %v1124, 3
      %v1190 = vrot.slane %v1125, 3
      %v1191 = vrot.slane %v1126, 3
      %v1192 = vrot.slane %v1127, 3
      %v1193 = vrot.slane %v1128, 3
      %v1194 = vrot.slane %v1129, 3
      %v1195 = vrot.slane %v1130, 3
      %v1196 = vsel %vm712, %v1194, %v1195
      %v1197 = vsel %vm712, %v1193, %v1194
      %v1198 = vsel %vm712, %v1192, %v1193
      %v1199 = vsel %vm712, %v1191, %v1192
      %v1200 = vsel %vm712, %v1190, %v1191
      %v1201 = vsel %vm712, %v1189, %v1190
      %v1202 = vsel %vm712, %v1188, %v1189
      %v1203 = vsel %vm712, %v1187, %v1188
      %v1204 = vsel %vm712, %v1186, %v1187
      %v1205 = vsel %vm712, %v1185, %v1186
      %v1206 = vsel %vm712, %v1184, %v1185
      %v1207 = vsel %vm712, %v1183, %v1184
      %v1208 = vsel %vm712, %v1182, %v1183
      %v1209 = vsel %vm712, %v1181, %v1182
      %v1210 = vsel %vm712, %v1180, %v1181
      %v1211 = vsel %vm712, %v1195, %v1180
      %v1212 = vsel %vm761, %v1210, 0.0
      %v1213 = vsel %vm762, %v1209, 0.0
      %v1214 = vsel %vm763, %v1208, 0.0
      %v1215 = vsel %vm764, %v1207, 0.0
      %v1216 = vsel %vm765, %v1206, 0.0
      %v1217 = vsel %vm766, %v1205, 0.0
      %v1218 = vsel %vm767, %v1204, 0.0
      %v1219 = vsel %vm768, %v1203, 0.0
      %v1220 = vsel %vm769, %v1202, 0.0
      %v1221 = vsel %vm770, %v1201, 0.0
      %v1222 = vsel %vm771, %v1200, 0.0
      %v1223 = vsel %vm772, %v1199, 0.0
      %v1224 = vsel %vm773, %v1198, 0.0
      %v1225 = vsel %vm774, %v1197, 0.0
      %v1226 = vsel %vm775, %v1196, 0.0
      %v1227 = vsel %vm776, %v1211, 0.0
      %1244 = vrot.lane.b32.xlu0 %v1115, 16
      %v1245 = vpop.permute.xlu0 %1244
      %1246 = vrot.lane.b32.xlu0 %v1116, 16
      %v1247 = vpop.permute.xlu0 %1246
      %1248 = vrot.lane.b32.xlu0 %v1117, 16
      %v1249 = vpop.permute.xlu0 %1248
      %1250 = vrot.lane.b32.xlu0 %v1118, 16
      %v1251 = vpop.permute.xlu0 %1250
      %1252 = vrot.lane.b32.xlu0 %v1119, 16
      %v1253 = vpop.permute.xlu0 %1252
      %1254 = vrot.lane.b32.xlu0 %v1120, 16
      %v1255 = vpop.permute.xlu0 %1254
      %1256 = vrot.lane.b32.xlu0 %v1121, 16
      %v1257 = vpop.permute.xlu0 %1256
      %1258 = vrot.lane.b32.xlu0 %v1122, 16
      %v1259 = vpop.permute.xlu0 %1258
      %1260 = vrot.lane.b32.xlu0 %v1123, 16
      %v1261 = vpop.permute.xlu0 %1260
      %1262 = vrot.lane.b32.xlu0 %v1124, 16
      %v1263 = vpop.permute.xlu0 %1262
      %1264 = vrot.lane.b32.xlu0 %v1125, 16
      %v1265 = vpop.permute.xlu0 %1264
      %1266 = vrot.lane.b32.xlu0 %v1126, 16
      %v1267 = vpop.permute.xlu0 %1266
      %1268 = vrot.lane.b32.xlu0 %v1127, 16
      %v1269 = vpop.permute.xlu0 %1268
      %1270 = vrot.lane.b32.xlu0 %v1128, 16
      %v1271 = vpop.permute.xlu0 %1270
      %1272 = vrot.lane.b32.xlu0 %v1129, 16
      %v1273 = vpop.permute.xlu0 %1272
      %1274 = vrot.lane.b32.xlu0 %v1130, 16
      %v1275 = vpop.permute.xlu0 %1274
      %1308 = vrot.lane.b32.xlu0 %v1212, 32
      %v1309 = vpop.permute.xlu0 %1308
      %1310 = vrot.lane.b32.xlu0 %v1213, 32
      %v1311 = vpop.permute.xlu0 %1310
      %1312 = vrot.lane.b32.xlu0 %v1214, 32
      %v1313 = vpop.permute.xlu0 %1312
      %1314 = vrot.lane.b32.xlu0 %v1215, 32
      %v1315 = vpop.permute.xlu0 %1314
      %1316 = vrot.lane.b32.xlu0 %v1216, 32
      %v1317 = vpop.permute.xlu0 %1316
      %1318 = vrot.lane.b32.xlu0 %v1217, 32
      %v1319 = vpop.permute.xlu0 %1318
      %1320 = vrot.lane.b32.xlu0 %v1218, 32
      %v1321 = vpop.permute.xlu0 %1320
      %1322 = vrot.lane.b32.xlu0 %v1219, 32
      %v1323 = vpop.permute.xlu0 %1322
      %1324 = vrot.lane.b32.xlu0 %v1220, 32
      %v1325 = vpop.permute.xlu0 %1324
      %1326 = vrot.lane.b32.xlu0 %v1221, 32
      %v1327 = vpop.permute.xlu0 %1326
      %1328 = vrot.lane.b32.xlu0 %v1222, 32
      %v1329 = vpop.permute.xlu0 %1328
      %1330 = vrot.lane.b32.xlu0 %v1223, 32
      %v1331 = vpop.permute.xlu0 %1330
      %1332 = vrot.lane.b32.xlu0 %v1224, 32
      %v1333 = vpop.permute.xlu0 %1332
      %1334 = vrot.lane.b32.xlu0 %v1225, 32
      %v1335 = vpop.permute.xlu0 %1334
      %1336 = vrot.lane.b32.xlu0 %v1226, 32
      %v1337 = vpop.permute.xlu0 %1336
      %1338 = vrot.lane.b32.xlu0 %v1227, 32
      %v1339 = vpop.permute.xlu0 %1338
      %v1356 = vsel %vm921, %v1164, %v1245
      %v1357 = vsel %vm921, %v1165, %v1247
      %v1358 = vsel %vm921, %v1166, %v1249
      %v1359 = vsel %vm921, %v1167, %v1251
      %v1360 = vsel %vm921, %v1168, %v1253
      %v1361 = vsel %vm921, %v1169, %v1255
      %v1362 = vsel %vm921, %v1170, %v1257
      %v1363 = vsel %vm921, %v1171, %v1259
      %v1364 = vsel %vm921, %v1172, %v1261
      %v1365 = vsel %vm921, %v1173, %v1263
      %v1366 = vsel %vm921, %v1174, %v1265
      %v1367 = vsel %vm921, %v1175, %v1267
      %v1368 = vsel %vm921, %v1176, %v1269
      %v1369 = vsel %vm921, %v1177, %v1271
      %v1370 = vsel %vm921, %v1178, %v1273
      %v1371 = vsel %vm921, %v1179, %v1275
      %v1372 = vsel %vm938, %v1356, %v1309
      %v1373 = vsel %vm938, %v1357, %v1311
      %v1374 = vsel %vm938, %v1358, %v1313
      %v1375 = vsel %vm938, %v1359, %v1315
      %v1376 = vsel %vm938, %v1360, %v1317
      %v1377 = vsel %vm938, %v1361, %v1319
      %v1378 = vsel %vm938, %v1362, %v1321
      %v1379 = vsel %vm938, %v1363, %v1323
      %v1380 = vsel %vm938, %v1364, %v1325
      %v1381 = vsel %vm938, %v1365, %v1327
      %v1382 = vsel %vm938, %v1366, %v1329
      %v1383 = vsel %vm938, %v1367, %v1331
      %v1384 = vsel %vm938, %v1368, %v1333
      %v1385 = vsel %vm938, %v1369, %v1335
      %v1386 = vsel %vm938, %v1370, %v1337
      %v1387 = vsel %vm938, %v1371, %v1339
      %v1388 = vpack.c.bf16 %v1373, %v1372
      %v1389 = vpack.c.bf16 %v1375, %v1374
      %v1390 = vpack.c.bf16 %v1377, %v1376
      %v1391 = vpack.c.bf16 %v1379, %v1378
      %v1392 = vpack.c.bf16 %v1381, %v1380
      %v1393 = vpack.c.bf16 %v1383, %v1382
      %v1394 = vpack.c.bf16 %v1385, %v1384
      %v1395 = vpack.c.bf16 %v1387, %v1386
      %v1396 = vld [vmem:[%s6] sm:$0xf]
      %v1397 = vld [vmem:[%s6 + $0x4] sm:$0xf]
      %v1398 = vld [vmem:[%s6 + $0x8] sm:$0xf]
      %v1399 = vld [vmem:[%s6 + $0xc] sm:$0xf]
      %v1400 = vld [vmem:[%s6 + $0x10] sm:$0xf]
      %v1401 = vld [vmem:[%s6 + $0x14] sm:$0xf]
      %v1403 = vlaneseq
      %v1404 = vshrl.u32 %v1403, 7
      %v1405 = vsub.s32 0, %v1404
      %v1406 = vrot.slane %v1131, %v1405
      %v1414 = vunpack.c.l.b16 %v1396
      %v1415 = vunpack.c.l.b16 %v1397
      %v1416 = vunpack.c.l.b16 %v1398
      %v1417 = vunpack.c.l.b16 %v1399
      %v1418 = vunpack.c.l.b16 %v1400
      %v1419 = vunpack.c.l.b16 %v1401
      %v1420 = vpack.c.b16 %v1415, %v1414
      %v1421 = vpack.c.b16 %v1417, %v1416
      %v1422 = vpack.c.b16 %v1419, %v1418
      %v1427 = vsel %vm993, %v1388, 0
      %v1430 = vsel %vm993, %v1389, 0
      %v1433 = vsel %vm993, %v1390, 0
      %v1436 = vsel %vm993, %v1391, 0
      %v1439 = vsel %vm993, %v1392, 0
      %v1442 = vsel %vm993, %v1393, 0
      %v1445 = vsel %vm993, %v1394, 0
      %v1448 = vsel %vm993, %v1395, 0
      %1450 = vmatprep.subr.bf16.mxu0 0
      %1451 = vmatpush1.bf16.msra.mxu0 %v1420
      %1452 = vmatprep.subr.bf16.mxu0 0
      %1453 = vmatpush1.bf16.msra.mxu0 %v1421
      %1454 = vmatprep.subr.bf16.mxu0 0
      %1455 = vmatpush1.bf16.msra.mxu0 %v1422
      %1456 = vmatprep.subr.bf16.mxu0 0
      %1457 = vmatpush1.bf16.msra.mxu0 0
      %1458 = vmatprep.subr.bf16.mxu0 0
      %1459 = vmatpush1.bf16.msra.mxu0 0
      %1460 = vmatprep.subr.bf16.mxu0 0
      %1461 = vmatpush1.bf16.msra.mxu0 0
      %1462 = vmatprep.subr.bf16.mxu0 0
      %1463 = vmatpush1.bf16.msra.mxu0 0
      %1464 = vmatprep.subr.bf16.mxu0 0
      %1465 = vmatpush1.bf16.msra.mxu0 0
      %1466 = vmatprep.subr.bf16.mxu0 0
      %1467 = vmatpush1.bf16.msra.mxu0 0
      %1468 = vmatprep.subr.bf16.mxu0 0
      %1469 = vmatpush1.bf16.msra.mxu0 0
      %1470 = vmatprep.subr.bf16.mxu0 0
      %1471 = vmatpush1.bf16.msra.mxu0 0
      %1472 = vmatprep.subr.bf16.mxu0 0
      %1473 = vmatpush1.bf16.msra.mxu0 0
      %1474 = vmatprep.subr.bf16.mxu0 0
      %1475 = vmatpush1.bf16.msra.mxu0 0
      %1476 = vmatprep.subr.bf16.mxu0 0
      %1477 = vmatpush1.bf16.msra.mxu0 0
      %1478 = vmatprep.subr.bf16.mxu0 0
      %1479 = vmatpush1.bf16.msra.mxu0 0
      %1480 = vmatprep.subr.bf16.mxu0 0
      %1481 = vmatpush1.bf16.msra.mxu0 0
      %1482 = vmatprep.mubr.bf16.mxu0 0
      %1483 = vmatmul.mubr.bf16.gmra.mrb[0].mxu0 %v1427
      %v1484 = vpop.f32.mrb[0].mxu0
      %v1485 = vadd.f32 %v1406, %v1484
      %v1486 = vpop.f32.mrb[0].mxu0
      %v1487 = vpop.f32.mrb[0].mxu0
      %v1488 = vadd.f32 %v1406, %v1487
      %v1489 = vpop.f32.mrb[0].mxu0
      %1490 = vmatprep.mubr.bf16.mxu0 0
      %1491 = vmatmul.mubr.bf16.gmra.mrb[0].mxu0 %v1430
      %v1492 = vpop.f32.mrb[0].mxu0
      %v1493 = vadd.f32 %v1406, %v1492
      %v1494 = vpop.f32.mrb[0].mxu0
      %v1495 = vpop.f32.mrb[0].mxu0
      %v1496 = vadd.f32 %v1406, %v1495
      %v1497 = vpop.f32.mrb[0].mxu0
      %1498 = vmatprep.mubr.bf16.mxu0 0
      %1499 = vmatmul.mubr.bf16.gmra.mrb[0].mxu0 %v1433
      %v1500 = vpop.f32.mrb[0].mxu0
      %v1501 = vadd.f32 %v1406, %v1500
      %v1502 = vpop.f32.mrb[0].mxu0
      %v1503 = vpop.f32.mrb[0].mxu0
      %v1504 = vadd.f32 %v1406, %v1503
      %v1505 = vpop.f32.mrb[0].mxu0
      %1506 = vmatprep.mubr.bf16.mxu0 0
      %1507 = vmatmul.mubr.bf16.gmra.mrb[0].mxu0 %v1436
      %v1508 = vpop.f32.mrb[0].mxu0
      %v1509 = vadd.f32 %v1406, %v1508
      %v1510 = vpop.f32.mrb[0].mxu0
      %v1511 = vpop.f32.mrb[0].mxu0
      %v1512 = vadd.f32 %v1406, %v1511
      %v1513 = vpop.f32.mrb[0].mxu0
      %1514 = vmatprep.mubr.bf16.mxu0 0
      %1515 = vmatmul.mubr.bf16.gmra.mrb[0].mxu0 %v1439
      %v1516 = vpop.f32.mrb[0].mxu0
      %v1517 = vadd.f32 %v1406, %v1516
      %v1518 = vpop.f32.mrb[0].mxu0
      %v1519 = vpop.f32.mrb[0].mxu0
      %v1520 = vadd.f32 %v1406, %v1519
      %v1521 = vpop.f32.mrb[0].mxu0
      %1522 = vmatprep.mubr.bf16.mxu0 0
      %1523 = vmatmul.mubr.bf16.gmra.mrb[0].mxu0 %v1442
      %v1524 = vpop.f32.mrb[0].mxu0
      %v1525 = vadd.f32 %v1406, %v1524
      %v1526 = vpop.f32.mrb[0].mxu0
      %v1527 = vpop.f32.mrb[0].mxu0
      %v1528 = vadd.f32 %v1406, %v1527
      %v1529 = vpop.f32.mrb[0].mxu0
      %1530 = vmatprep.mubr.bf16.mxu0 0
      %1531 = vmatmul.mubr.bf16.gmra.mrb[0].mxu0 %v1445
      %v1532 = vpop.f32.mrb[0].mxu0
      %v1533 = vadd.f32 %v1406, %v1532
      %v1534 = vpop.f32.mrb[0].mxu0
      %v1535 = vpop.f32.mrb[0].mxu0
      %v1536 = vadd.f32 %v1406, %v1535
      %v1537 = vpop.f32.mrb[0].mxu0
      %1538 = vmatprep.mubr.bf16.mxu0 0
      %1539 = vmatmul.mubr.bf16.gmra.mrb[0].mxu0 %v1448
      %v1540 = vpop.f32.mrb[0].mxu0
      %v1541 = vadd.f32 %v1406, %v1540
      %v1542 = vpop.f32.mrb[0].mxu0
      %v1543 = vpop.f32.mrb[0].mxu0
      %v1544 = vadd.f32 %v1406, %v1543
      %v1545 = vpop.f32.mrb[0].mxu0
      %1546 = vdwg.mxu0
      %v1547 = vadd.f32 %v1485, %v582
      %v1548 = vadd.f32 %v1488, %v583
      %v1549 = vadd.f32 %v1493, %v584
      %v1550 = vadd.f32 %v1496, %v585
      %v1551 = vadd.f32 %v1501, %v586
      %v1552 = vadd.f32 %v1504, %v587
      %v1553 = vadd.f32 %v1509, %v588
      %v1554 = vadd.f32 %v1512, %v589
      %v1555 = vadd.f32 %v1517, %v590
      %v1556 = vadd.f32 %v1520, %v591
      %v1557 = vadd.f32 %v1525, %v592
      %v1558 = vadd.f32 %v1528, %v593
      %v1559 = vadd.f32 %v1533, %v594
      %v1560 = vadd.f32 %v1536, %v595
      %v1561 = vadd.f32 %v1541, %v596
      %v1562 = vadd.f32 %v1544, %v597
      %v1563 = vmax.f32 %v1547, 0.0
      %v1564 = vmax.f32 %v1548, 0.0
      %v1565 = vmax.f32 %v1549, 0.0
      %v1566 = vmax.f32 %v1550, 0.0
      %v1567 = vmax.f32 %v1551, 0.0
      %v1568 = vmax.f32 %v1552, 0.0
      %v1569 = vmax.f32 %v1553, 0.0
      %v1570 = vmax.f32 %v1554, 0.0
      %v1571 = vmax.f32 %v1555, 0.0
      %v1572 = vmax.f32 %v1556, 0.0
      %v1573 = vmax.f32 %v1557, 0.0
      %v1574 = vmax.f32 %v1558, 0.0
      %v1575 = vmax.f32 %v1559, 0.0
      %v1576 = vmax.f32 %v1560, 0.0
      %v1577 = vmax.f32 %v1561, 0.0
      %v1578 = vmax.f32 %v1562, 0.0
      %1579 = vst.msk [vmem:[%s312] sm:$0xff] %vm921, %v1563
      %1580 = vst.msk [vmem:[%s312 + $0x8] sm:$0xff] %vm921, %v1564
      %1581 = vst.msk [vmem:[%s312 + $0x10] sm:$0xff] %vm921, %v1565
      %1582 = vst.msk [vmem:[%s312 + $0x18] sm:$0xff] %vm921, %v1566
      %1583 = vst.msk [vmem:[%s312 + $0x20] sm:$0xff] %vm921, %v1567
      %1584 = vst.msk [vmem:[%s312 + $0x28] sm:$0xff] %vm921, %v1568
      %1585 = vst.msk [vmem:[%s312 + $0x30] sm:$0xff] %vm921, %v1569
      %1586 = vst.msk [vmem:[%s312 + $0x38] sm:$0xff] %vm921, %v1570
      %1587 = vst.msk [vmem:[%s312 + $0x40] sm:$0xff] %vm921, %v1571
      %1588 = vst.msk [vmem:[%s312 + $0x48] sm:$0xff] %vm921, %v1572
      %1589 = vst.msk [vmem:[%s312 + $0x50] sm:$0xff] %vm921, %v1573
      %1590 = vst.msk [vmem:[%s312 + $0x58] sm:$0xff] %vm921, %v1574
      %1591 = vst.msk [vmem:[%s312 + $0x60] sm:$0xff] %vm921, %v1575
      %1592 = vst.msk [vmem:[%s312 + $0x68] sm:$0xff] %vm921, %v1576
      %1593 = vst.msk [vmem:[%s312 + $0x70] sm:$0xff] %vm921, %v1577
      %1594 = vst.msk [vmem:[%s312 + $0x78] sm:$0xff] %vm921, %v1578
      %s1595 = smul.u32 8, %s19
      %p1596 = scmp.lt.s32.totalorder %s1595, 15
      %s1597 = scalar_select %p1596, %s1595, 15
      %s1598 = smul.addr %s1597, 2
      %s1599 = smul.addr %s1598, 8
      %s1600 = scalar_lea.vmem %s8, %s1599
      // Predicated region
      $region53: #{encoder_forward.8} parent=51 // pred_check
        %p1601 = pneg %p210
      $region54: #{encoder_forward.8} parent=51 // pred_check_branch
        %1603 = sbr.rel (%p1601) target = $region56
      $region55: #{encoder_forward.8} parent=51 // pred_region
        %s1604 = smul.u32 8, %s19
      $region56: #{encoder_forward.8} parent=51 // pred_fallthru
        _
    $region52: #{encoder_forward.8} parent=5 // pred_fallthru
      _
    %p1605 = scmp.le.s32.totalorder 2, %s14
    // Predicated region
    $region57: #{encoder_forward.8} parent=5 // pred_check
      %p1606 = pneg %p1605
    $region58: #{encoder_forward.8} parent=5 // pred_check_branch
      %1608 = sbr.rel (%p1606) target = $region60
    $region59: #{encoder_forward.8} parent=5 // pred_region
      %s1609 = ssub.s32 %s14, 2
      // Predicated region
      $region61: #{encoder_forward.8} parent=59 // pred_check
        %p1610 = pneg %p216
      $region62: #{encoder_forward.8} parent=59 // pred_check_branch
        %1612 = sbr.rel (%p1610) target = $region64
      $region63: #{encoder_forward.8} parent=59 // pred_region
        %s1613 = smul.u32 8, %s20
        %p1614 = scmp.lt.s32.totalorder %s1613, 15
        %s1615 = scalar_select %p1614, %s1613, 15
        %s1616 = smul.addr %s1615, 2
        %s1617 = smul.addr %s1616, 8
        %s1618 = scalar_lea.vmem %s8, %s1617
      $region64: #{encoder_forward.8} parent=59 // pred_fallthru
        _
    $region60: #{encoder_forward.8} parent=5 // pred_fallthru
      _
  $region6: #{encoder_forward.8} parent=0 // loop_footer
    %s18 = sadd.s32 1, %s14
  $region7: #{encoder_forward.8} parent=0 // loop_footer_branch
    %13 = sbr.rel target = $region3
  $region8: #{encoder_forward.8} parent=0 // loop_exit
    _

</llo_original>
